<compile_context>
chip_gen: v5e
topology: v5e:2x2
jax: 0.10.0
libtpu: 0.0.40
codegen_flags: <defaults>
</compile_context>

<pallas_src>
import functools

import jax
import jax.numpy as jnp
from jax.experimental import pallas as pl
from jax.experimental.pallas import tpu as pltpu


def ffn_kernel(x_ref, gamma_ref, beta_ref, w1_ref, b1_ref, w2_ref, b2_ref,
               o_ref, xn_scratch, acc_scratch, *, eps):
    f = pl.program_id(1)

    # ---- LayerNorm over dim_model, once per row tile (f == 0); also init accumulator ----
    @pl.when(f == 0)
    def _():
        x = x_ref[...].astype(jnp.float32)                       # (tm, D)
        mean = jnp.mean(x, axis=-1, keepdims=True)
        centered = x - mean
        var = jnp.mean(centered * centered, axis=-1, keepdims=True)
        xn = centered * jax.lax.rsqrt(var + eps)
        xn = xn * gamma_ref[...].astype(jnp.float32) + beta_ref[...].astype(jnp.float32)
        xn_scratch[...] = xn.astype(xn_scratch.dtype)            # stored in weight dtype
        acc_scratch[...] = jnp.zeros_like(acc_scratch)

    # ---- Linear(dim_model -> tf chunk of dim_ffn): MXU in native weight dtype ----
    h = jnp.dot(xn_scratch[...], w1_ref[...],
                preferred_element_type=jnp.float32)              # (tm, tf) f32 acc
    h = h + b1_ref[...].astype(jnp.float32)

    # ---- Swish (SiLU) inner activation ----
    h = h * jax.nn.sigmoid(h)

    # ---- Linear(tf chunk of dim_ffn -> dim_model), accumulate into f32 scratch ----
    acc_scratch[...] += jnp.dot(h.astype(w2_ref.dtype), w2_ref[...],
                                preferred_element_type=jnp.float32)

    # ---- Finalize: add output bias, cast, store ----
    @pl.when(f == pl.num_programs(1) - 1)
    def _():
        o_ref[...] = (acc_scratch[...]
                      + b2_ref[...].astype(jnp.float32)).astype(o_ref.dtype)


def feed_forward_module(x, params, *, eps=1e-6, tm=256, tf=256):
    """x: (B, L, D) -> (B, L, D).  params: dict of gamma, beta, w1, b1, w2, b2."""
    B, L, D = x.shape
    F = params["w1"].shape[1]
    M = B * L

    # ---- Row tiling: pad M up to a multiple of tm (padded rows are sliced off later) ----
    tm = max(8, (tm // 8) * 8)
    M_pad = pl.cdiv(M, tm) * tm
    x2 = x.reshape(M, D)
    if M_pad != M:
        x2 = jnp.pad(x2, ((0, M_pad - M), (0, 0)))

    # ---- Hidden-dim tiling: tf lane-aligned (multiple of 128) or the whole F; pad F ----
    w1, b1, w2 = params["w1"], params["b1"], params["w2"]
    if F <= tf:
        tf = F
        F_pad = F
    else:
        tf = max(128, (tf // 128) * 128)
        F_pad = pl.cdiv(F, tf) * tf
        if F_pad != F:
            # Zero-padded columns/rows contribute exactly 0 to the accumulator.
            w1 = jnp.pad(w1, ((0, 0), (0, F_pad - F)))
            b1 = jnp.pad(b1, ((0, 0), (0, F_pad - F)))
            w2 = jnp.pad(w2, ((0, F_pad - F), (0, 0)))

    grid = (M_pad // tm, F_pad // tf)
    kernel = functools.partial(ffn_kernel, eps=eps)
    w_dtype = w1.dtype

    out2 = pl.pallas_call(
        kernel,
        out_shape=jax.ShapeDtypeStruct((M_pad, D), x.dtype),
        grid_spec=pltpu.PrefetchScalarGridSpec(
            num_scalar_prefetch=0,
            grid=grid,
            in_specs=[
                pl.BlockSpec((tm, D), lambda i, f: (i, 0)),    # x rows
                pl.BlockSpec((1, D), lambda i, f: (0, 0)),     # gamma
                pl.BlockSpec((1, D), lambda i, f: (0, 0)),     # beta
                pl.BlockSpec((D, tf), lambda i, f: (0, f)),    # w1 column slab
                pl.BlockSpec((1, tf), lambda i, f: (0, f)),    # b1 slab
                pl.BlockSpec((tf, D), lambda i, f: (f, 0)),    # w2 row slab
                pl.BlockSpec((1, D), lambda i, f: (0, 0)),     # b2
            ],
            out_specs=pl.BlockSpec((tm, D), lambda i, f: (i, 0)),
            scratch_shapes=[
                pltpu.VMEM((tm, D), w_dtype),      # cached normalized rows (weight dtype)
                pltpu.VMEM((tm, D), jnp.float32),  # f32 output accumulator
            ],
        ),
        compiler_params=pltpu.CompilerParams(
            dimension_semantics=("parallel", "arbitrary"),
            vmem_limit_bytes=64 * 1024 * 1024,
        ),
    )(x2, params["gamma"], params["beta"], w1, b1, w2, params["b2"])

    return out2[:M].reshape(B, L, D)


def make_params(key, dim_model, dim_ffn, dtype=jnp.float32):
    k1, k2, k3, k4 = jax.random.split(key, 4)
    # Deterministic synthetic init (uniform, roughly matching torch Linear scale).
    lim1 = 1.0 / (dim_model ** 0.5)
    lim2 = 1.0 / (dim_ffn ** 0.5)
    return {
        "gamma": jnp.ones((1, dim_model), dtype),
        "beta": jnp.zeros((1, dim_model), dtype),
        "w1": jax.random.uniform(k1, (dim_model, dim_ffn), dtype, -lim1, lim1),
        "b1": jax.random.uniform(k2, (1, dim_ffn), dtype, -lim1, lim1),
        "w2": jax.random.uniform(k3, (dim_ffn, dim_model), dtype, -lim2, lim2),
        "b2": jax.random.uniform(k4, (1, dim_model), dtype, -lim2, lim2),
    }


def reference_ffn(x, params, eps=1e-6):
    mean = jnp.mean(x, axis=-1, keepdims=True)
    var = jnp.mean((x - mean) ** 2, axis=-1, keepdims=True)
    xn = (x - mean) / jnp.sqrt(var + eps)
    xn = xn * params["gamma"][0] + params["beta"][0]
    h = xn @ params["w1"] + params["b1"][0]
    h = h * jax.nn.sigmoid(h)
    return h @ params["w2"] + params["b2"][0]


if __name__ == "__main__":
    key = jax.random.PRNGKey(0)
    kx, kp = jax.random.split(key)

    # Small shapes, but chosen to exercise: ragged M (48 rows padded to the row tile),
    # lane-dense D (128), and multiple F tiles (512 / 256 = 2 accumulation steps).
    batch, length, dim_model, dim_ffn = 2, 24, 128, 512
    x = jax.random.normal(kx, (batch, length, dim_model), jnp.float32)
    params = make_params(kp, dim_model, dim_ffn)

    out = feed_forward_module(x, params, tm=256, tf=256)
    out = jax.block_until_ready(out)

    ref = reference_ffn(x, params)
    assert out.shape == (batch, length, dim_model)
    assert jnp.allclose(out, ref, atol=1e-3, rtol=1e-3), "mismatch vs reference"

    print("KERNEL_OK")
</pallas_src>

<mosaic_0001>
module attributes {stable_mosaic.version = 11 : i64} {
  func.func @ffn_kernel(%arg0: i32, %arg1: i32, %arg2: memref<256x128xf32, #tpu.memory_space<vmem>>, %arg3: memref<1x128xf32, #tpu.memory_space<vmem>>, %arg4: memref<1x128xf32, #tpu.memory_space<vmem>>, %arg5: memref<128x256xf32, #tpu.memory_space<vmem>>, %arg6: memref<1x256xf32, #tpu.memory_space<vmem>>, %arg7: memref<256x128xf32, #tpu.memory_space<vmem>>, %arg8: memref<1x128xf32, #tpu.memory_space<vmem>>, %arg9: memref<256x128xf32, #tpu.memory_space<vmem>>, %arg10: memref<256x128xf32, #tpu.memory_space<vmem>>, %arg11: memref<256x128xf32, #tpu.memory_space<vmem>>) attributes {dimension_semantics = [#tpu.dimension_semantics<parallel>, #tpu.dimension_semantics<arbitrary>], iteration_bounds = array<i64: 1, 2>, scalar_prefetch = 0 : i64, scratch_operands = 2 : i64, tpu.core_type = #tpu.core_type<tc>, window_params = [{transform_indices = @transform_0, window_bounds = array<i64: 256, 128>}, {pipeline_mode = #tpu.pipeline_mode<synchronous>, transform_indices = @transform_1, window_bounds = array<i64: 1, 128>}, {pipeline_mode = #tpu.pipeline_mode<synchronous>, transform_indices = @transform_2, window_bounds = array<i64: 1, 128>}, {transform_indices = @transform_3, window_bounds = array<i64: 128, 256>}, {transform_indices = @transform_4, window_bounds = array<i64: 1, 256>}, {transform_indices = @transform_5, window_bounds = array<i64: 256, 128>}, {pipeline_mode = #tpu.pipeline_mode<synchronous>, transform_indices = @transform_6, window_bounds = array<i64: 1, 128>}, {transform_indices = @transform_7, window_bounds = array<i64: 256, 128>}]} {
    %c0_i32 = arith.constant 0 : i32
    %0 = arith.cmpi eq, %arg1, %c0_i32 : i32
    %1 = arith.extui %0 : i1 to i32
    %c0_i32_0 = arith.constant 0 : i32
    %2 = arith.cmpi ne, %1, %c0_i32_0 : i32
    scf.if %2 {
      %c0_15 = arith.constant 0 : index
      %c0_16 = arith.constant 0 : index
      %23 = vector.load %arg2[%c0_15, %c0_16] : memref<256x128xf32, #tpu.memory_space<vmem>>, vector<256x128xf32>
      %cst_17 = arith.constant dense<0.000000e+00> : vector<256xf32>
      %24 = vector.multi_reduction <add>, %23, %cst_17 [1] : vector<256x128xf32> to vector<256xf32>
      %25 = vector.shape_cast %24 : vector<256xf32> to vector<256x1xf32>
      %cst_18 = arith.constant 1.280000e+02 : f32
      %26 = vector.broadcast %cst_18 : f32 to vector<256x1xf32>
      %27 = arith.divf %25, %26 : vector<256x1xf32>
      %28 = vector.broadcast %27 : vector<256x1xf32> to vector<256x128xf32>
      %29 = arith.subf %23, %28 : vector<256x128xf32>
      %30 = arith.mulf %29, %29 : vector<256x128xf32>
      %cst_19 = arith.constant dense<0.000000e+00> : vector<256xf32>
      %31 = vector.multi_reduction <add>, %30, %cst_19 [1] : vector<256x128xf32> to vector<256xf32>
      %32 = vector.shape_cast %31 : vector<256xf32> to vector<256x1xf32>
      %cst_20 = arith.constant 1.280000e+02 : f32
      %33 = vector.broadcast %cst_20 : f32 to vector<256x1xf32>
      %34 = arith.divf %32, %33 : vector<256x1xf32>
      %cst_21 = arith.constant 9.99999997E-7 : f32
      %35 = vector.broadcast %cst_21 : f32 to vector<256x1xf32>
      %36 = arith.addf %34, %35 : vector<256x1xf32>
      %37 = math.rsqrt %36 : vector<256x1xf32>
      %38 = vector.broadcast %37 : vector<256x1xf32> to vector<256x128xf32>
      %39 = arith.mulf %29, %38 : vector<256x128xf32>
      %c0_22 = arith.constant 0 : index
      %c0_23 = arith.constant 0 : index
      %40 = vector.load %arg3[%c0_22, %c0_23] : memref<1x128xf32, #tpu.memory_space<vmem>>, vector<1x128xf32>
      %41 = vector.broadcast %40 : vector<1x128xf32> to vector<256x128xf32>
      %42 = arith.mulf %39, %41 : vector<256x128xf32>
      %c0_24 = arith.constant 0 : index
      %c0_25 = arith.constant 0 : index
      %43 = vector.load %arg4[%c0_24, %c0_25] : memref<1x128xf32, #tpu.memory_space<vmem>>, vector<1x128xf32>
      %44 = vector.broadcast %43 : vector<1x128xf32> to vector<256x128xf32>
      %45 = arith.addf %42, %44 : vector<256x128xf32>
      %c0_26 = arith.constant 0 : index
      %c0_27 = arith.constant 0 : index
      %46 = vector.load %arg10[%c0_26, %c0_27] : memref<256x128xf32, #tpu.memory_space<vmem>>, vector<256x128xf32>
      tpu.vector_store %arg10[%c0_26, %c0_27], %45 {strides = array<i32>} : memref<256x128xf32, #tpu.memory_space<vmem>>, vector<256x128xf32>,
      %cst_28 = arith.constant 0.000000e+00 : f32
      %47 = vector.broadcast %cst_28 : f32 to vector<256x128xf32>
      %c0_29 = arith.constant 0 : index
      %c0_30 = arith.constant 0 : index
      %48 = vector.load %arg11[%c0_29, %c0_30] : memref<256x128xf32, #tpu.memory_space<vmem>>, vector<256x128xf32>
      tpu.vector_store %arg11[%c0_29, %c0_30], %47 {strides = array<i32>} : memref<256x128xf32, #tpu.memory_space<vmem>>, vector<256x128xf32>,
    } else {
    }
    %c0 = arith.constant 0 : index
    %c0_1 = arith.constant 0 : index
    %3 = vector.load %arg10[%c0, %c0_1] : memref<256x128xf32, #tpu.memory_space<vmem>>, vector<256x128xf32>
    %c0_2 = arith.constant 0 : index
    %c0_3 = arith.constant 0 : index
    %4 = vector.load %arg5[%c0_2, %c0_3] : memref<128x256xf32, #tpu.memory_space<vmem>>, vector<128x256xf32>
    %cst = arith.constant dense<0.000000e+00> : vector<256x256xf32>
    %5 = tpu.matmul %3, %4, %cst {dimension_numbers = #tpu.dot_dimension_numbers<[1], [0], [0], [1], [0, 0, 1, 1], [], []>} : vector<256x128xf32>, vector<128x256xf32>, vector<256x256xf32> -> vector<256x256xf32>
    %c0_4 = arith.constant 0 : index
    %c0_5 = arith.constant 0 : index
    %6 = vector.load %arg6[%c0_4, %c0_5] : memref<1x256xf32, #tpu.memory_space<vmem>>, vector<1x256xf32>
    %7 = vector.broadcast %6 : vector<1x256xf32> to vector<256x256xf32>
    %8 = arith.addf %5, %7 : vector<256x256xf32>
    %9 = arith.negf %8 : vector<256x256xf32>
    %10 = math.exp %9 : vector<256x256xf32>
    %cst_6 = arith.constant 1.000000e+00 : f32
    %11 = vector.broadcast %cst_6 : f32 to vector<256x256xf32>
    %12 = arith.addf %11, %10 : vector<256x256xf32>
    %13 = arith.divf %11, %12 : vector<256x256xf32>
    %14 = arith.mulf %8, %13 : vector<256x256xf32>
    %c0_7 = arith.constant 0 : index
    %c0_8 = arith.constant 0 : index
    %15 = vector.load %arg11[%c0_7, %c0_8] : memref<256x128xf32, #tpu.memory_space<vmem>>, vector<256x128xf32>
    %c0_9 = arith.constant 0 : index
    %c0_10 = arith.constant 0 : index
    %16 = vector.load %arg7[%c0_9, %c0_10] : memref<256x128xf32, #tpu.memory_space<vmem>>, vector<256x128xf32>
    %cst_11 = arith.constant dense<0.000000e+00> : vector<256x128xf32>
    %17 = tpu.matmul %14, %16, %cst_11 {dimension_numbers = #tpu.dot_dimension_numbers<[1], [0], [0], [1], [0, 0, 1, 1], [], []>} : vector<256x256xf32>, vector<256x128xf32>, vector<256x128xf32> -> vector<256x128xf32>
    %18 = arith.addf %15, %17 : vector<256x128xf32>
    %c0_12 = arith.constant 0 : index
    %c0_13 = arith.constant 0 : index
    %19 = vector.load %arg11[%c0_12, %c0_13] : memref<256x128xf32, #tpu.memory_space<vmem>>, vector<256x128xf32>
    tpu.vector_store %arg11[%c0_12, %c0_13], %18 {strides = array<i32>} : memref<256x128xf32, #tpu.memory_space<vmem>>, vector<256x128xf32>,
    %c1_i32 = arith.constant 1 : i32
    %20 = arith.cmpi eq, %arg1, %c1_i32 : i32
    %21 = arith.extui %20 : i1 to i32
    %c0_i32_14 = arith.constant 0 : i32
    %22 = arith.cmpi ne, %21, %c0_i32_14 : i32
    scf.if %22 {
      %c0_15 = arith.constant 0 : index
      %c0_16 = arith.constant 0 : index
      %23 = vector.load %arg11[%c0_15, %c0_16] : memref<256x128xf32, #tpu.memory_space<vmem>>, vector<256x128xf32>
      %c0_17 = arith.constant 0 : index
      %c0_18 = arith.constant 0 : index
      %24 = vector.load %arg8[%c0_17, %c0_18] : memref<1x128xf32, #tpu.memory_space<vmem>>, vector<1x128xf32>
      %25 = vector.broadcast %24 : vector<1x128xf32> to vector<256x128xf32>
      %26 = arith.addf %23, %25 : vector<256x128xf32>
      %c0_19 = arith.constant 0 : index
      %c0_20 = arith.constant 0 : index
      %27 = vector.load %arg9[%c0_19, %c0_20] : memref<256x128xf32, #tpu.memory_space<vmem>>, vector<256x128xf32>
      tpu.vector_store %arg9[%c0_19, %c0_20], %26 {strides = array<i32>} : memref<256x128xf32, #tpu.memory_space<vmem>>, vector<256x128xf32>,
    } else {
    }
    return
  }
  func.func @transform_0(%arg0: i32, %arg1: i32) -> (i32, i32) {
    %c0_i32 = arith.constant 0 : i32
    %c0_i32_0 = arith.constant 0 : i32
    return %arg0, %c0_i32 : i32, i32
  }
  func.func @transform_1(%arg0: i32, %arg1: i32) -> (i32, i32) {
    %c0_i32 = arith.constant 0 : i32
    %c0_i32_0 = arith.constant 0 : i32
    %c0_i32_1 = arith.constant 0 : i32
    return %c0_i32, %c0_i32_0 : i32, i32
  }
  func.func @transform_2(%arg0: i32, %arg1: i32) -> (i32, i32) {
    %c0_i32 = arith.constant 0 : i32
    %c0_i32_0 = arith.constant 0 : i32
    %c0_i32_1 = arith.constant 0 : i32
    return %c0_i32, %c0_i32_0 : i32, i32
  }
  func.func @transform_3(%arg0: i32, %arg1: i32) -> (i32, i32) {
    %c0_i32 = arith.constant 0 : i32
    %c0_i32_0 = arith.constant 0 : i32
    return %c0_i32, %arg1 : i32, i32
  }
  func.func @transform_4(%arg0: i32, %arg1: i32) -> (i32, i32) {
    %c0_i32 = arith.constant 0 : i32
    %c0_i32_0 = arith.constant 0 : i32
    return %c0_i32, %arg1 : i32, i32
  }
  func.func @transform_5(%arg0: i32, %arg1: i32) -> (i32, i32) {
    %c0_i32 = arith.constant 0 : i32
    %c0_i32_0 = arith.constant 0 : i32
    return %arg1, %c0_i32 : i32, i32
  }
  func.func @transform_6(%arg0: i32, %arg1: i32) -> (i32, i32) {
    %c0_i32 = arith.constant 0 : i32
    %c0_i32_0 = arith.constant 0 : i32
    %c0_i32_1 = arith.constant 0 : i32
    return %c0_i32, %c0_i32_0 : i32, i32
  }
  func.func @transform_7(%arg0: i32, %arg1: i32) -> (i32, i32) {
    %c0_i32 = arith.constant 0 : i32
    %c0_i32_0 = arith.constant 0 : i32
    return %arg0, %c0_i32 : i32, i32
  }
}

</mosaic_0001>

<llo_original>
// kernel: tpu_custom_call.1
$region0: #{tpu_custom_call.1}
  #allocation0 [shape = 'u32[]', space=smem, size = 0x4, offset = 0x4, fixed_abs, tag = 'smem constant byte address 0x4 - core index']
  #allocation1 [shape = 'u32[72,128]{1,0:T(1,128)}', space=vmem, size = 0x9000, scoped, tag = 'internal scratch']
  #allocation2 [shape = 'f32[256,128]{1,0:T(8,128)}', space=vmem, size = 0x20000, scoped, tag = 'scratch operand']
  #allocation3 [shape = 'f32[256,128]{1,0:T(8,128)}', space=vmem, size = 0x20000, scoped, tag = 'scratch operand']
  %s0 = inlined_call_operand.hbm [shape: f32[256,128], index: 0, kind: input, shape index: {}]
  %s1 = inlined_call_operand.hbm [shape: f32[1,128], index: 1, kind: input, shape index: {}]
  %s2 = inlined_call_operand.vmem [shape: f32[1,128], index: 2, kind: input, shape index: {}]
  %s3 = inlined_call_operand.hbm [shape: f32[128,512], index: 3, kind: input, shape index: {}]
  %s4 = inlined_call_operand.hbm [shape: f32[1,512], index: 4, kind: input, shape index: {}]
  %s5 = inlined_call_operand.hbm [shape: f32[512,128], index: 5, kind: input, shape index: {}]
  %s6 = inlined_call_operand.vmem [shape: f32[1,128], index: 6, kind: input, shape index: {}]
  %s7 = inlined_call_operand.hbm [shape: f32[256,128], index: 7, kind: output, shape index: {}]
  %s8 = sld [smem:[#allocation0]]
  $region89: #{tpu_custom_call.1} parent=0
    _
  %s10 = ssub.s32 1, %s8
  %s11 = scalar_select 0, %s10, %s8
  $region1: #{tpu_custom_call.1} parent=0
    #allocation4 [shape = 'u8[131072]{0}', space=vmem, size = 0x20000, scoped, tag = 'input window, operand 0, single buffered']
    #allocation5 [shape = 's32[2]{0}', space=sflag, size = 0x8, scoped, tag = 'scoped memory for tpu_custom_call.1']
    #allocation6 [shape = 's32[2]{0}', space=sflag, size = 0x8, scoped, tag = 'scoped memory for tpu_custom_call.1']
    #allocation7 [shape = 'u8[512]{0}', space=vmem, size = 0x400, scoped, tag = 'input window, operand 1, single buffered']
    #allocation8 [shape = 's32[1]{0}', space=sflag, size = 0x4, scoped, tag = 'scoped memory for tpu_custom_call.1']
    #allocation9 [shape = 'u8[262144]{0}', space=vmem, size = 0x40000, scoped, tag = 'input window, operand 3']
    #allocation10 [shape = 'u8[2048]{0}', space=vmem, size = 0x800, scoped, tag = 'input window, operand 4']
    #allocation11 [shape = 'u8[262144]{0}', space=vmem, size = 0x40000, scoped, tag = 'input window, operand 5']
    #allocation12 [shape = 'u8[131072]{0}', space=vmem, size = 0x20000, scoped, tag = 'output window, operand 0, single buffered']
    %12 = vsyncpa [#allocation5], 0
    %13 = vsyncpa [#allocation8], 0
    %14 = vsyncpa [#allocation6], 0
    loop: start=0, step=1, limit=4
    $region2: #{tpu_custom_call.1} parent=1 // loop_pre_header
      _
    $region3: #{tpu_custom_call.1} parent=1 // loop_header
      %s16 = sphi 0, %s20
      %p17 = scmp.ge.s32.totalorder %s16, 4
      %s23 = sphi 0, %s35
      %s24 = sphi 0, %s31
      %s25 = sphi 0, %s23
      %s26 = sphi 0, %s24
      %s27 = sphi 0, %s25
      %s28 = sphi 0, %s26
      %s38 = sphi 0, %s40
      %s41 = sphi 0, %s38
      %s42 = sphi 0, %s41
      %s58 = sphi 0, %s42
      %s62 = sphi 0, %s62
      %s64 = sphi 0, %s62
      %s65 = sphi 0, %s64
      %s79 = sphi 0, %s65
      %s83 = sphi 0, %s83
      %s85 = sphi 0, %s83
      %s86 = sphi 0, %s85
      %s100 = sphi 0, %s86
      %s106 = sphi 0, %s108
      %s109 = sphi 0, %s106
      %s110 = sphi 0, %s109
      %s126 = sphi 0, %s110
      %s132 = sphi 0, %s134
      %s135 = sphi 0, %s132
      %s136 = sphi 0, %s135
      %s152 = sphi 0, %s136
      %s158 = sphi 0, %s160
      %s161 = sphi 0, %s158
      %s162 = sphi 0, %s161
      %s178 = sphi 0, %s162
      %s182 = sphi 0, %s182
      %s184 = sphi 0, %s182
      %s185 = sphi 0, %s184
      %s199 = sphi 0, %s185
      %s205 = sphi 0, %s207
      %s208 = sphi 0, %s205
      %s209 = sphi 0, %s208
      %s225 = sphi 0, %s209
    $region4: #{tpu_custom_call.1} parent=1 // loop_header_branch
      %19 = sbr.rel (%p17) target = $region8
    $region5: #{tpu_custom_call.1} parent=1 // loop_body
      %s21 = ssub.s32 %s16, 1
      %s22 = ssub.s32 %s16, 2
      %s29 = sadd.s32 1, %s24
      %p30 = scmp.ge.s32.totalorder %s29, 2
      %s31 = scalar_select %p30, 0, %s29
      %s32 = sadd.s32 1, %s23
      %s33 = scalar_select %p30, %s32, %s23
      %p34 = scmp.ge.s32.totalorder %s33, 1
      %s35 = scalar_select %p34, 0, %s33
      %s36 = ssub.s32 %s23, %s35
      %p37 = scmp.eq.s32.totalorder %s36, 0
      %s39 = sadd.s32 %s38, 1
      %s40 = scalar_select %p37, %s38, %s39
      %p43 = pneg %p37
      %p44 = scmp.eq.s32.totalorder %s16, 1
      %p45 = por %p43, %p44
      %p46 = scmp.ne.s32.totalorder %s38, %s41
      %p47 = scmp.eq.s32.totalorder %s16, 0
      %p48 = por %p46, %p47
      %p49 = scmp.ne.s32.totalorder %s38, %s41
      %p50 = scmp.eq.s32.totalorder %s21, 1
      %p51 = por %p49, %p50
      %p52 = scmp.ne.s32.totalorder %s41, %s42
      %p53 = scmp.eq.s32.totalorder %s21, 0
      %p54 = por %p52, %p53
      %p55 = scmp.ne.s32.totalorder %s41, %s42
      %p56 = scmp.eq.s32.totalorder %s22, 1
      %p57 = por %p55, %p56
      %p59 = scmp.ne.s32.totalorder %s42, %s58
      %p60 = scmp.eq.s32.totalorder %s22, 0
      %p61 = por %p59, %p60
      %s63 = sadd.s32 %s62, 1
      %p66 = scmp.eq.s32.totalorder %s16, 1
      %p67 = scmp.ne.s32.totalorder %s62, %s64
      %p68 = scmp.eq.s32.totalorder %s16, 0
      %p69 = por %p67, %p68
      %p70 = scmp.ne.s32.totalorder %s62, %s64
      %p71 = scmp.eq.s32.totalorder %s21, 1
      %p72 = por %p70, %p71
      %p73 = scmp.ne.s32.totalorder %s64, %s65
      %p74 = scmp.eq.s32.totalorder %s21, 0
      %p75 = por %p73, %p74
      %p76 = scmp.ne.s32.totalorder %s64, %s65
      %p77 = scmp.eq.s32.totalorder %s22, 1
      %p78 = por %p76, %p77
      %p80 = scmp.ne.s32.totalorder %s65, %s79
      %p81 = scmp.eq.s32.totalorder %s22, 0
      %p82 = por %p80, %p81
      %s84 = sadd.s32 %s83, 1
      %p87 = scmp.eq.s32.totalorder %s16, 1
      %p88 = scmp.ne.s32.totalorder %s83, %s85
      %p89 = scmp.eq.s32.totalorder %s16, 0
      %p90 = por %p88, %p89
      %p91 = scmp.ne.s32.totalorder %s83, %s85
      %p92 = scmp.eq.s32.totalorder %s21, 1
      %p93 = por %p91, %p92
      %p94 = scmp.ne.s32.totalorder %s85, %s86
      %p95 = scmp.eq.s32.totalorder %s21, 0
      %p96 = por %p94, %p95
      %p97 = scmp.ne.s32.totalorder %s85, %s86
      %p98 = scmp.eq.s32.totalorder %s22, 1
      %p99 = por %p97, %p98
      %p101 = scmp.ne.s32.totalorder %s86, %s100
      %p102 = scmp.eq.s32.totalorder %s22, 0
      %p103 = por %p101, %p102
      %s104 = ssub.s32 %s24, %s31
      %p105 = scmp.eq.s32.totalorder %s104, 0
      %s107 = sadd.s32 %s106, 1
      %s108 = scalar_select %p105, %s106, %s107
      %p111 = pneg %p105
      %p112 = scmp.eq.s32.totalorder %s16, 1
      %p113 = por %p111, %p112
      %p114 = scmp.ne.s32.totalorder %s106, %s109
      %p115 = scmp.eq.s32.totalorder %s16, 0
      %p116 = por %p114, %p115
      %p117 = scmp.ne.s32.totalorder %s106, %s109
      %p118 = scmp.eq.s32.totalorder %s21, 1
      %p119 = por %p117, %p118
      %p120 = scmp.ne.s32.totalorder %s109, %s110
      %p121 = scmp.eq.s32.totalorder %s21, 0
      %p122 = por %p120, %p121
      %p123 = scmp.ne.s32.totalorder %s109, %s110
      %p124 = scmp.eq.s32.totalorder %s22, 1
      %p125 = por %p123, %p124
      %p127 = scmp.ne.s32.totalorder %s110, %s126
      %p128 = scmp.eq.s32.totalorder %s22, 0
      %p129 = por %p127, %p128
      %s130 = ssub.s32 %s24, %s31
      %p131 = scmp.eq.s32.totalorder %s130, 0
      %s133 = sadd.s32 %s132, 1
      %s134 = scalar_select %p131, %s132, %s133
      %p137 = pneg %p131
      %p138 = scmp.eq.s32.totalorder %s16, 1
      %p139 = por %p137, %p138
      %p140 = scmp.ne.s32.totalorder %s132, %s135
      %p141 = scmp.eq.s32.totalorder %s16, 0
      %p142 = por %p140, %p141
      %p143 = scmp.ne.s32.totalorder %s132, %s135
      %p144 = scmp.eq.s32.totalorder %s21, 1
      %p145 = por %p143, %p144
      %p146 = scmp.ne.s32.totalorder %s135, %s136
      %p147 = scmp.eq.s32.totalorder %s21, 0
      %p148 = por %p146, %p147
      %p149 = scmp.ne.s32.totalorder %s135, %s136
      %p150 = scmp.eq.s32.totalorder %s22, 1
      %p151 = por %p149, %p150
      %p153 = scmp.ne.s32.totalorder %s136, %s152
      %p154 = scmp.eq.s32.totalorder %s22, 0
      %p155 = por %p153, %p154
      %s156 = ssub.s32 %s24, %s31
      %p157 = scmp.eq.s32.totalorder %s156, 0
      %s159 = sadd.s32 %s158, 1
      %s160 = scalar_select %p157, %s158, %s159
      %p163 = pneg %p157
      %p164 = scmp.eq.s32.totalorder %s16, 1
      %p165 = por %p163, %p164
      %p166 = scmp.ne.s32.totalorder %s158, %s161
      %p167 = scmp.eq.s32.totalorder %s16, 0
      %p168 = por %p166, %p167
      %p169 = scmp.ne.s32.totalorder %s158, %s161
      %p170 = scmp.eq.s32.totalorder %s21, 1
      %p171 = por %p169, %p170
      %p172 = scmp.ne.s32.totalorder %s161, %s162
      %p173 = scmp.eq.s32.totalorder %s21, 0
      %p174 = por %p172, %p173
      %p175 = scmp.ne.s32.totalorder %s161, %s162
      %p176 = scmp.eq.s32.totalorder %s22, 1
      %p177 = por %p175, %p176
      %p179 = scmp.ne.s32.totalorder %s162, %s178
      %p180 = scmp.eq.s32.totalorder %s22, 0
      %p181 = por %p179, %p180
      %s183 = sadd.s32 %s182, 1
      %p186 = scmp.eq.s32.totalorder %s16, 1
      %p187 = scmp.ne.s32.totalorder %s182, %s184
      %p188 = scmp.eq.s32.totalorder %s16, 0
      %p189 = por %p187, %p188
      %p190 = scmp.ne.s32.totalorder %s182, %s184
      %p191 = scmp.eq.s32.totalorder %s21, 1
      %p192 = por %p190, %p191
      %p193 = scmp.ne.s32.totalorder %s184, %s185
      %p194 = scmp.eq.s32.totalorder %s21, 0
      %p195 = por %p193, %p194
      %p196 = scmp.ne.s32.totalorder %s184, %s185
      %p197 = scmp.eq.s32.totalorder %s22, 1
      %p198 = por %p196, %p197
      %p200 = scmp.ne.s32.totalorder %s185, %s199
      %p201 = scmp.eq.s32.totalorder %s22, 0
      %p202 = por %p200, %p201
      %s203 = ssub.s32 %s23, %s35
      %p204 = scmp.eq.s32.totalorder %s203, 0
      %s206 = sadd.s32 %s205, 1
      %s207 = scalar_select %p204, %s205, %s206
      %p210 = pneg %p204
      %p211 = scmp.eq.s32.totalorder %s16, 1
      %p212 = por %p210, %p211
      %p213 = scmp.ne.s32.totalorder %s205, %s208
      %p214 = scmp.eq.s32.totalorder %s16, 0
      %p215 = por %p213, %p214
      %p216 = scmp.ne.s32.totalorder %s205, %s208
      %p217 = scmp.eq.s32.totalorder %s21, 1
      %p218 = por %p216, %p217
      %p219 = scmp.ne.s32.totalorder %s208, %s209
      %p220 = scmp.eq.s32.totalorder %s21, 0
      %p221 = por %p219, %p220
      %p222 = scmp.ne.s32.totalorder %s208, %s209
      %p223 = scmp.eq.s32.totalorder %s22, 1
      %p224 = por %p222, %p223
      %p226 = scmp.ne.s32.totalorder %s209, %s225
      %p227 = scmp.eq.s32.totalorder %s22, 0
      %p228 = por %p226, %p227
      %p229 = scmp.le.s32.totalorder 1, %s16
      %p230 = scmp.lt.s32.totalorder %s16, 3
      %p231 = pnand %p229, %p230
      %p232 = pneg %p231
      // Predicated region
      $region9: #{tpu_custom_call.1} parent=5 // pred_check
        _
      $region10: #{tpu_custom_call.1} parent=5 // pred_check_branch
        %234 = sbr.rel (%p231) target = $region12
      $region11: #{tpu_custom_call.1} parent=5 // pred_region
        %s235 = ssub.s32 %s16, 1
        // Predicated region
        $region13: #{tpu_custom_call.1} parent=11 // pred_check
          %p236 = pneg %p54
        $region14: #{tpu_custom_call.1} parent=11 // pred_check_branch
          %238 = sbr.rel (%p236) target = $region16
        $region15: #{tpu_custom_call.1} parent=11 // pred_region
          %s239 = smul.u32 32, %s25
          %241 = vsyncadd [#allocation5], 0
          %s242 = smul.addr %s239, 8
          %s243 = scalar_lea.hbm %s0, %s242
          %s244 = sshll.u32 %s243, 4
          %s245 = int_to_ptr.hbm [resolvable:$true] %s244
          %s246 = sshll.u32 [#allocation4], 4
          %s247 = int_to_ptr.vmem [resolvable:$true] %s246
          %252 = dma.hbm_to_vmem [thread:$0]  %s245, 4096, %s247, [#allocation5], 128, 128, 8
        $region16: #{tpu_custom_call.1} parent=11 // pred_fallthru
          _
        // Predicated region
        $region17: #{tpu_custom_call.1} parent=11 // pred_check
          %p253 = pneg %p75
        $region18: #{tpu_custom_call.1} parent=11 // pred_check_branch
          %255 = sbr.rel (%p253) target = $region20
        $region19: #{tpu_custom_call.1} parent=11 // pred_region
          %257 = vsyncadd [#allocation8], 0
          %s259 = sshll.u32 %s1, 4
          %s260 = int_to_ptr.hbm [resolvable:$true] %s259
          %s261 = sshll.u32 [#allocation7], 4
          %s262 = int_to_ptr.vmem [resolvable:$true] %s261
          %264 = dma.hbm_to_vmem [thread:$0]  %s260, 16, %s262, [#allocation8]
        $region20: #{tpu_custom_call.1} parent=11 // pred_fallthru
          _
        // Predicated region
        $region21: #{tpu_custom_call.1} parent=11 // pred_check
          %p265 = pneg %p96
        $region22: #{tpu_custom_call.1} parent=11 // pred_check_branch
          %267 = sbr.rel (%p265) target = $region24
        $region23: #{tpu_custom_call.1} parent=11 // pred_region
          _
        $region24: #{tpu_custom_call.1} parent=11 // pred_fallthru
          _
        // Predicated region
        $region25: #{tpu_custom_call.1} parent=11 // pred_check
          %p268 = pneg %p195
        $region26: #{tpu_custom_call.1} parent=11 // pred_check_branch
          %270 = sbr.rel (%p268) target = $region28
        $region27: #{tpu_custom_call.1} parent=11 // pred_region
          _
        $region28: #{tpu_custom_call.1} parent=11 // pred_fallthru
          _
      $region12: #{tpu_custom_call.1} parent=5 // pred_fallthru
        _
      %p271 = scmp.lt.s32.totalorder %s16, 2
      // Predicated region
      $region29: #{tpu_custom_call.1} parent=5 // pred_check
        %p272 = pneg %p271
      $region30: #{tpu_custom_call.1} parent=5 // pred_check_branch
        %274 = sbr.rel (%p272) target = $region32
      $region31: #{tpu_custom_call.1} parent=5 // pred_region
        // Predicated region
        $region33: #{tpu_custom_call.1} parent=31 // pred_check
          %p275 = pneg %p116
        $region34: #{tpu_custom_call.1} parent=31 // pred_check_branch
          %277 = sbr.rel (%p275) target = $region36
        $region35: #{tpu_custom_call.1} parent=31 // pred_region
          %s278 = sand.u32 %s16, 1
          %s279 = scalar_lea.sflag [#allocation5], %s278
          %s280 = sand.u32 %s106, 1
          %s281 = smul.addr %s280, 256
          %s282 = scalar_lea.vmem [#allocation9], %s281
          %s283 = smul.u32 2, %s24
          %285 = vsyncadd %s279, 0
          %s286 = smul.addr %s283, 8
          %s287 = scalar_lea.hbm %s3, %s286
          %s288 = sshll.u32 %s287, 4
          %s289 = int_to_ptr.hbm [resolvable:$true] %s288
          %s290 = sshll.u32 %s282, 4
          %s291 = int_to_ptr.vmem [resolvable:$true] %s290
          %296 = dma.hbm_to_vmem [thread:$0]  %s289, 4096, %s291, %s279, 512, 256, 16
        $region36: #{tpu_custom_call.1} parent=31 // pred_fallthru
          _
        // Predicated region
        $region37: #{tpu_custom_call.1} parent=31 // pred_check
          %p297 = pneg %p142
        $region38: #{tpu_custom_call.1} parent=31 // pred_check_branch
          %299 = sbr.rel (%p297) target = $region40
        $region39: #{tpu_custom_call.1} parent=31 // pred_region
          %s300 = sand.u32 %s16, 1
          %s301 = scalar_lea.sflag [#allocation5], %s300
          %s302 = sand.u32 %s132, 1
          %s303 = smul.addr %s302, 2
          %s304 = scalar_lea.vmem [#allocation10], %s303
          %s305 = smul.u32 2, %s24
          %307 = vsyncadd %s301, 0
          %s308 = scalar_lea.hbm %s4, %s305
          %s310 = sshll.u32 %s308, 4
          %s311 = int_to_ptr.hbm [resolvable:$true] %s310
          %s312 = sshll.u32 %s304, 4
          %s313 = int_to_ptr.vmem [resolvable:$true] %s312
          %315 = dma.hbm_to_vmem [thread:$0]  %s311, 32, %s313, %s301
        $region40: #{tpu_custom_call.1} parent=31 // pred_fallthru
          _
        // Predicated region
        $region41: #{tpu_custom_call.1} parent=31 // pred_check
          %p316 = pneg %p168
        $region42: #{tpu_custom_call.1} parent=31 // pred_check_branch
          %318 = sbr.rel (%p316) target = $region44
        $region43: #{tpu_custom_call.1} parent=31 // pred_region
          %s319 = sand.u32 %s16, 1
          %s320 = scalar_lea.sflag [#allocation5], %s319
          %s321 = sand.u32 %s158, 1
          %s322 = smul.addr %s321, 256
          %s323 = scalar_lea.vmem [#allocation11], %s322
          %s324 = smul.u32 32, %s24
          %326 = vsyncadd %s320, 0
          %s327 = smul.addr %s324, 8
          %s328 = scalar_lea.hbm %s5, %s327
          %s329 = sshll.u32 %s328, 4
          %s330 = int_to_ptr.hbm [resolvable:$true] %s329
          %s331 = sshll.u32 %s323, 4
          %s332 = int_to_ptr.vmem [resolvable:$true] %s331
          %337 = dma.hbm_to_vmem [thread:$0]  %s330, 4096, %s332, %s320, 128, 128, 8
        $region44: #{tpu_custom_call.1} parent=31 // pred_fallthru
          _
      $region32: #{tpu_custom_call.1} parent=5 // pred_fallthru
        _
      %p338 = scmp.le.s32.totalorder 1, %s16
      %p339 = scmp.lt.s32.totalorder %s16, 3
      %p340 = pnand %p338, %p339
      %p341 = pneg %p340
      // Predicated region
      $region45: #{tpu_custom_call.1} parent=5 // pred_check
        _
      $region46: #{tpu_custom_call.1} parent=5 // pred_check_branch
        %343 = sbr.rel (%p340) target = $region48
      $region47: #{tpu_custom_call.1} parent=5 // pred_region
        %s344 = ssub.s32 %s16, 1
        // Predicated region
        $region49: #{tpu_custom_call.1} parent=47 // pred_check
          %p345 = pneg %p54
        $region50: #{tpu_custom_call.1} parent=47 // pred_check_branch
          %347 = sbr.rel (%p345) target = $region52
        $region51: #{tpu_custom_call.1} parent=47 // pred_region
          %349 = dma.done [#allocation5], 4096
        $region52: #{tpu_custom_call.1} parent=47 // pred_fallthru
          _
        // Predicated region
        $region53: #{tpu_custom_call.1} parent=47 // pred_check
          %p350 = pneg %p75
        $region54: #{tpu_custom_call.1} parent=47 // pred_check_branch
          %352 = sbr.rel (%p350) target = $region56
        $region55: #{tpu_custom_call.1} parent=47 // pred_region
          %354 = dma.done [#allocation8], 16
        $region56: #{tpu_custom_call.1} parent=47 // pred_fallthru
          _
        %s355 = sand.u32 %s21, 1
        %s356 = scalar_lea.sflag [#allocation5], %s355
        %s357 = sand.u32 %s109, 1
        %s358 = smul.addr %s357, 256
        %s359 = scalar_lea.vmem [#allocation9], %s358
        // Predicated region
        $region57: #{tpu_custom_call.1} parent=47 // pred_check
          %p360 = pneg %p122
        $region58: #{tpu_custom_call.1} parent=47 // pred_check_branch
          %362 = sbr.rel (%p360) target = $region60
        $region59: #{tpu_custom_call.1} parent=47 // pred_region
          %364 = dma.done %s356, 4096
        $region60: #{tpu_custom_call.1} parent=47 // pred_fallthru
          _
        %s365 = sand.u32 %s21, 1
        %s366 = scalar_lea.sflag [#allocation5], %s365
        %s367 = sand.u32 %s135, 1
        %s368 = smul.addr %s367, 2
        %s369 = scalar_lea.vmem [#allocation10], %s368
        // Predicated region
        $region61: #{tpu_custom_call.1} parent=47 // pred_check
          %p370 = pneg %p148
        $region62: #{tpu_custom_call.1} parent=47 // pred_check_branch
          %372 = sbr.rel (%p370) target = $region64
        $region63: #{tpu_custom_call.1} parent=47 // pred_region
          %374 = dma.done %s366, 32
        $region64: #{tpu_custom_call.1} parent=47 // pred_fallthru
          _
        %s375 = sand.u32 %s21, 1
        %s376 = scalar_lea.sflag [#allocation5], %s375
        %s377 = sand.u32 %s161, 1
        %s378 = smul.addr %s377, 256
        %s379 = scalar_lea.vmem [#allocation11], %s378
        // Predicated region
        $region65: #{tpu_custom_call.1} parent=47 // pred_check
          %p380 = pneg %p174
        $region66: #{tpu_custom_call.1} parent=47 // pred_check_branch
          %382 = sbr.rel (%p380) target = $region68
        $region67: #{tpu_custom_call.1} parent=47 // pred_region
          %384 = dma.done %s376, 4096
        $region68: #{tpu_custom_call.1} parent=47 // pred_fallthru
          _
        %p385 = pneg %p54
        %p386 = pneg %p51
        %p387 = pneg %p75
        %p388 = pneg %p72
        %p389 = pneg %p96
        %p390 = pneg %p93
        %s391 = sand.u32 %s21, 1
        %s392 = scalar_lea.sflag [#allocation5], %s391
        %s393 = sand.u32 %s109, 1
        %s394 = smul.addr %s393, 256
        %s395 = scalar_lea.vmem [#allocation9], %s394
        %p396 = pneg %p122
        %p397 = pneg %p119
        %s398 = sand.u32 %s21, 1
        %s399 = scalar_lea.sflag [#allocation5], %s398
        %s400 = sand.u32 %s135, 1
        %s401 = smul.addr %s400, 2
        %s402 = scalar_lea.vmem [#allocation10], %s401
        %p403 = pneg %p148
        %p404 = pneg %p145
        %s405 = sand.u32 %s21, 1
        %s406 = scalar_lea.sflag [#allocation5], %s405
        %s407 = sand.u32 %s161, 1
        %s408 = smul.addr %s407, 256
        %s409 = scalar_lea.vmem [#allocation11], %s408
        %p410 = pneg %p174
        %p411 = pneg %p171
        %p412 = pneg %p195
        %p413 = pneg %p192
        %p414 = pneg %p221
        %p415 = pneg %p218
        %s416 = smul.u32 32, %s25
        %s417 = smul.u32 2, %s26
        %s418 = smul.u32 2, %s26
        %s419 = smul.u32 32, %s26
        %s420 = smul.u32 32, %s25
        %p421 = scmp.eq.s32.totalorder %s26, 0
        // Predicated region
        $region69: #{tpu_custom_call.1} parent=47 // pred_check
          %p422 = pneg %p421
        $region70: #{tpu_custom_call.1} parent=47 // pred_check_branch
          %424 = sbr.rel (%p422) target = $region72
        $region71: #{tpu_custom_call.1} parent=47 // pred_region
          %v425 = vld [vmem:[#allocation4] sm:$0xff]
          %v426 = vld [vmem:[#allocation4 + $0x8] sm:$0xff]
          %v427 = vld [vmem:[#allocation4 + $0x10] sm:$0xff]
          %v428 = vld [vmem:[#allocation4 + $0x18] sm:$0xff]
          %v429 = vld [vmem:[#allocation4 + $0x20] sm:$0xff]
          %v430 = vld [vmem:[#allocation4 + $0x28] sm:$0xff]
          %v431 = vld [vmem:[#allocation4 + $0x30] sm:$0xff]
          %v432 = vld [vmem:[#allocation4 + $0x38] sm:$0xff]
          %v433 = vld [vmem:[#allocation4 + $0x40] sm:$0xff]
          %v434 = vld [vmem:[#allocation4 + $0x48] sm:$0xff]
          %v435 = vld [vmem:[#allocation4 + $0x50] sm:$0xff]
          %v436 = vld [vmem:[#allocation4 + $0x58] sm:$0xff]
          %v437 = vld [vmem:[#allocation4 + $0x60] sm:$0xff]
          %v438 = vld [vmem:[#allocation4 + $0x68] sm:$0xff]
          %v439 = vld [vmem:[#allocation4 + $0x70] sm:$0xff]
          %v440 = vld [vmem:[#allocation4 + $0x78] sm:$0xff]
          %v441 = vld [vmem:[#allocation4 + $0x80] sm:$0xff]
          %v442 = vld [vmem:[#allocation4 + $0x88] sm:$0xff]
          %v443 = vld [vmem:[#allocation4 + $0x90] sm:$0xff]
          %v444 = vld [vmem:[#allocation4 + $0x98] sm:$0xff]
          %v445 = vld [vmem:[#allocation4 + $0xa0] sm:$0xff]
          %v446 = vld [vmem:[#allocation4 + $0xa8] sm:$0xff]
          %v447 = vld [vmem:[#allocation4 + $0xb0] sm:$0xff]
          %v448 = vld [vmem:[#allocation4 + $0xb8] sm:$0xff]
          %v449 = vld [vmem:[#allocation4 + $0xc0] sm:$0xff]
          %v450 = vld [vmem:[#allocation4 + $0xc8] sm:$0xff]
          %v451 = vld [vmem:[#allocation4 + $0xd0] sm:$0xff]
          %v452 = vld [vmem:[#allocation4 + $0xd8] sm:$0xff]
          %v453 = vld [vmem:[#allocation4 + $0xe0] sm:$0xff]
          %v454 = vld [vmem:[#allocation4 + $0xe8] sm:$0xff]
          %v455 = vld [vmem:[#allocation4 + $0xf0] sm:$0xff]
          %v456 = vld [vmem:[#allocation4 + $0xf8] sm:$0xff]
          %457 = vadd.xlane.f32.xlu0 %v425
          %v458 = vpop.xlane.xlu0 %457
          %459 = vadd.xlane.f32.xlu0 %v426
          %v460 = vpop.xlane.xlu0 %459
          %461 = vadd.xlane.f32.xlu0 %v427
          %v462 = vpop.xlane.xlu0 %461
          %463 = vadd.xlane.f32.xlu0 %v428
          %v464 = vpop.xlane.xlu0 %463
          %465 = vadd.xlane.f32.xlu0 %v429
          %v466 = vpop.xlane.xlu0 %465
          %467 = vadd.xlane.f32.xlu0 %v430
          %v468 = vpop.xlane.xlu0 %467
          %469 = vadd.xlane.f32.xlu0 %v431
          %v470 = vpop.xlane.xlu0 %469
          %471 = vadd.xlane.f32.xlu0 %v432
          %v472 = vpop.xlane.xlu0 %471
          %473 = vadd.xlane.f32.xlu0 %v433
          %v474 = vpop.xlane.xlu0 %473
          %475 = vadd.xlane.f32.xlu0 %v434
          %v476 = vpop.xlane.xlu0 %475
          %477 = vadd.xlane.f32.xlu0 %v435
          %v478 = vpop.xlane.xlu0 %477
          %479 = vadd.xlane.f32.xlu0 %v436
          %v480 = vpop.xlane.xlu0 %479
          %481 = vadd.xlane.f32.xlu0 %v437
          %v482 = vpop.xlane.xlu0 %481
          %483 = vadd.xlane.f32.xlu0 %v438
          %v484 = vpop.xlane.xlu0 %483
          %485 = vadd.xlane.f32.xlu0 %v439
          %v486 = vpop.xlane.xlu0 %485
          %487 = vadd.xlane.f32.xlu0 %v440
          %v488 = vpop.xlane.xlu0 %487
          %489 = vadd.xlane.f32.xlu0 %v441
          %v490 = vpop.xlane.xlu0 %489
          %491 = vadd.xlane.f32.xlu0 %v442
          %v492 = vpop.xlane.xlu0 %491
          %493 = vadd.xlane.f32.xlu0 %v443
          %v494 = vpop.xlane.xlu0 %493
          %495 = vadd.xlane.f32.xlu0 %v444
          %v496 = vpop.xlane.xlu0 %495
          %497 = vadd.xlane.f32.xlu0 %v445
          %v498 = vpop.xlane.xlu0 %497
          %499 = vadd.xlane.f32.xlu0 %v446
          %v500 = vpop.xlane.xlu0 %499
          %501 = vadd.xlane.f32.xlu0 %v447
          %v502 = vpop.xlane.xlu0 %501
          %503 = vadd.xlane.f32.xlu0 %v448
          %v504 = vpop.xlane.xlu0 %503
          %505 = vadd.xlane.f32.xlu0 %v449
          %v506 = vpop.xlane.xlu0 %505
          %507 = vadd.xlane.f32.xlu0 %v450
          %v508 = vpop.xlane.xlu0 %507
          %509 = vadd.xlane.f32.xlu0 %v451
          %v510 = vpop.xlane.xlu0 %509
          %511 = vadd.xlane.f32.xlu0 %v452
          %v512 = vpop.xlane.xlu0 %511
          %513 = vadd.xlane.f32.xlu0 %v453
          %v514 = vpop.xlane.xlu0 %513
          %515 = vadd.xlane.f32.xlu0 %v454
          %v516 = vpop.xlane.xlu0 %515
          %517 = vadd.xlane.f32.xlu0 %v455
          %v518 = vpop.xlane.xlu0 %517
          %519 = vadd.xlane.f32.xlu0 %v456
          %v520 = vpop.xlane.xlu0 %519
          %v521 = vrcp.pop 128.0
          %v522 = vmul.f32 128.0, %v521
          %v523 = vsub.f32 1.0, %v522
          %v524 = vmul.f32 %v521, %v523
          %v525 = vadd.f32 %v521, %v524
          %vm526 = vweird.f32 %v521
          %v527 = vsel %vm526, %v521, %v525
          %v528 = vmul.f32 %v458, %v527
          %v529 = vmul.f32 %v460, %v527
          %v530 = vmul.f32 %v462, %v527
          %v531 = vmul.f32 %v464, %v527
          %v532 = vmul.f32 %v466, %v527
          %v533 = vmul.f32 %v468, %v527
          %v534 = vmul.f32 %v470, %v527
          %v535 = vmul.f32 %v472, %v527
          %v536 = vmul.f32 %v474, %v527
          %v537 = vmul.f32 %v476, %v527
          %v538 = vmul.f32 %v478, %v527
          %v539 = vmul.f32 %v480, %v527
          %v540 = vmul.f32 %v482, %v527
          %v541 = vmul.f32 %v484, %v527
          %v542 = vmul.f32 %v486, %v527
          %v543 = vmul.f32 %v488, %v527
          %v544 = vmul.f32 %v490, %v527
          %v545 = vmul.f32 %v492, %v527
          %v546 = vmul.f32 %v494, %v527
          %v547 = vmul.f32 %v496, %v527
          %v548 = vmul.f32 %v498, %v527
          %v549 = vmul.f32 %v500, %v527
          %v550 = vmul.f32 %v502, %v527
          %v551 = vmul.f32 %v504, %v527
          %v552 = vmul.f32 %v506, %v527
          %v553 = vmul.f32 %v508, %v527
          %v554 = vmul.f32 %v510, %v527
          %v555 = vmul.f32 %v512, %v527
          %v556 = vmul.f32 %v514, %v527
          %v557 = vmul.f32 %v516, %v527
          %v558 = vmul.f32 %v518, %v527
          %v559 = vmul.f32 %v520, %v527
          %v560 = vsub.f32 %v425, %v528
          %v561 = vsub.f32 %v426, %v529
          %v562 = vsub.f32 %v427, %v530
          %v563 = vsub.f32 %v428, %v531
          %v564 = vsub.f32 %v429, %v532
          %v565 = vsub.f32 %v430, %v533
          %v566 = vsub.f32 %v431, %v534
          %v567 = vsub.f32 %v432, %v535
          %v568 = vsub.f32 %v433, %v536
          %v569 = vsub.f32 %v434, %v537
          %v570 = vsub.f32 %v435, %v538
          %v571 = vsub.f32 %v436, %v539
          %v572 = vsub.f32 %v437, %v540
          %v573 = vsub.f32 %v438, %v541
          %v574 = vsub.f32 %v439, %v542
          %v575 = vsub.f32 %v440, %v543
          %v576 = vsub.f32 %v441, %v544
          %v577 = vsub.f32 %v442, %v545
          %v578 = vsub.f32 %v443, %v546
          %v579 = vsub.f32 %v444, %v547
          %v580 = vsub.f32 %v445, %v548
          %v581 = vsub.f32 %v446, %v549
          %v582 = vsub.f32 %v447, %v550
          %v583 = vsub.f32 %v448, %v551
          %v584 = vsub.f32 %v449, %v552
          %v585 = vsub.f32 %v450, %v553
          %v586 = vsub.f32 %v451, %v554
          %v587 = vsub.f32 %v452, %v555
          %v588 = vsub.f32 %v453, %v556
          %v589 = vsub.f32 %v454, %v557
          %v590 = vsub.f32 %v455, %v558
          %v591 = vsub.f32 %v456, %v559
          %v592 = vmul.f32 %v560, %v560
          %v593 = vmul.f32 %v561, %v561
          %v594 = vmul.f32 %v562, %v562
          %v595 = vmul.f32 %v563, %v563
          %v596 = vmul.f32 %v564, %v564
          %v597 = vmul.f32 %v565, %v565
          %v598 = vmul.f32 %v566, %v566
          %v599 = vmul.f32 %v567, %v567
          %v600 = vmul.f32 %v568, %v568
          %v601 = vmul.f32 %v569, %v569
          %v602 = vmul.f32 %v570, %v570
          %v603 = vmul.f32 %v571, %v571
          %v604 = vmul.f32 %v572, %v572
          %v605 = vmul.f32 %v573, %v573
          %v606 = vmul.f32 %v574, %v574
          %v607 = vmul.f32 %v575, %v575
          %v608 = vmul.f32 %v576, %v576
          %v609 = vmul.f32 %v577, %v577
          %v610 = vmul.f32 %v578, %v578
          %v611 = vmul.f32 %v579, %v579
          %v612 = vmul.f32 %v580, %v580
          %v613 = vmul.f32 %v581, %v581
          %v614 = vmul.f32 %v582, %v582
          %v615 = vmul.f32 %v583, %v583
          %v616 = vmul.f32 %v584, %v584
          %v617 = vmul.f32 %v585, %v585
          %v618 = vmul.f32 %v586, %v586
          %v619 = vmul.f32 %v587, %v587
          %v620 = vmul.f32 %v588, %v588
          %v621 = vmul.f32 %v589, %v589
          %v622 = vmul.f32 %v590, %v590
          %v623 = vmul.f32 %v591, %v591
          %624 = vadd.xlane.f32.xlu0 %v592
          %v625 = vpop.xlane.xlu0 %624
          %626 = vadd.xlane.f32.xlu0 %v593
          %v627 = vpop.xlane.xlu0 %626
          %628 = vadd.xlane.f32.xlu0 %v594
          %v629 = vpop.xlane.xlu0 %628
          %630 = vadd.xlane.f32.xlu0 %v595
          %v631 = vpop.xlane.xlu0 %630
          %632 = vadd.xlane.f32.xlu0 %v596
          %v633 = vpop.xlane.xlu0 %632
          %634 = vadd.xlane.f32.xlu0 %v597
          %v635 = vpop.xlane.xlu0 %634
          %636 = vadd.xlane.f32.xlu0 %v598
          %v637 = vpop.xlane.xlu0 %636
          %638 = vadd.xlane.f32.xlu0 %v599
          %v639 = vpop.xlane.xlu0 %638
          %640 = vadd.xlane.f32.xlu0 %v600
          %v641 = vpop.xlane.xlu0 %640
          %642 = vadd.xlane.f32.xlu0 %v601
          %v643 = vpop.xlane.xlu0 %642
          %644 = vadd.xlane.f32.xlu0 %v602
          %v645 = vpop.xlane.xlu0 %644
          %646 = vadd.xlane.f32.xlu0 %v603
          %v647 = vpop.xlane.xlu0 %646
          %648 = vadd.xlane.f32.xlu0 %v604
          %v649 = vpop.xlane.xlu0 %648
          %650 = vadd.xlane.f32.xlu0 %v605
          %v651 = vpop.xlane.xlu0 %650
          %652 = vadd.xlane.f32.xlu0 %v606
          %v653 = vpop.xlane.xlu0 %652
          %654 = vadd.xlane.f32.xlu0 %v607
          %v655 = vpop.xlane.xlu0 %654
          %656 = vadd.xlane.f32.xlu0 %v608
          %v657 = vpop.xlane.xlu0 %656
          %658 = vadd.xlane.f32.xlu0 %v609
          %v659 = vpop.xlane.xlu0 %658
          %660 = vadd.xlane.f32.xlu0 %v610
          %v661 = vpop.xlane.xlu0 %660
          %662 = vadd.xlane.f32.xlu0 %v611
          %v663 = vpop.xlane.xlu0 %662
          %664 = vadd.xlane.f32.xlu0 %v612
          %v665 = vpop.xlane.xlu0 %664
          %666 = vadd.xlane.f32.xlu0 %v613
          %v667 = vpop.xlane.xlu0 %666
          %668 = vadd.xlane.f32.xlu0 %v614
          %v669 = vpop.xlane.xlu0 %668
          %670 = vadd.xlane.f32.xlu0 %v615
          %v671 = vpop.xlane.xlu0 %670
          %672 = vadd.xlane.f32.xlu0 %v616
          %v673 = vpop.xlane.xlu0 %672
          %674 = vadd.xlane.f32.xlu0 %v617
          %v675 = vpop.xlane.xlu0 %674
          %676 = vadd.xlane.f32.xlu0 %v618
          %v677 = vpop.xlane.xlu0 %676
          %678 = vadd.xlane.f32.xlu0 %v619
          %v679 = vpop.xlane.xlu0 %678
          %680 = vadd.xlane.f32.xlu0 %v620
          %v681 = vpop.xlane.xlu0 %680
          %682 = vadd.xlane.f32.xlu0 %v621
          %v683 = vpop.xlane.xlu0 %682
          %684 = vadd.xlane.f32.xlu0 %v622
          %v685 = vpop.xlane.xlu0 %684
          %686 = vadd.xlane.f32.xlu0 %v623
          %v687 = vpop.xlane.xlu0 %686
          %v688 = vmul.f32 %v625, %v527
          %v689 = vmul.f32 %v627, %v527
          %v690 = vmul.f32 %v629, %v527
          %v691 = vmul.f32 %v631, %v527
          %v692 = vmul.f32 %v633, %v527
          %v693 = vmul.f32 %v635, %v527
          %v694 = vmul.f32 %v637, %v527
          %v695 = vmul.f32 %v639, %v527
          %v696 = vmul.f32 %v641, %v527
          %v697 = vmul.f32 %v643, %v527
          %v698 = vmul.f32 %v645, %v527
          %v699 = vmul.f32 %v647, %v527
          %v700 = vmul.f32 %v649, %v527
          %v701 = vmul.f32 %v651, %v527
          %v702 = vmul.f32 %v653, %v527
          %v703 = vmul.f32 %v655, %v527
          %v704 = vmul.f32 %v657, %v527
          %v705 = vmul.f32 %v659, %v527
          %v706 = vmul.f32 %v661, %v527
          %v707 = vmul.f32 %v663, %v527
          %v708 = vmul.f32 %v665, %v527
          %v709 = vmul.f32 %v667, %v527
          %v710 = vmul.f32 %v669, %v527
          %v711 = vmul.f32 %v671, %v527
          %v712 = vmul.f32 %v673, %v527
          %v713 = vmul.f32 %v675, %v527
          %v714 = vmul.f32 %v677, %v527
          %v715 = vmul.f32 %v679, %v527
          %v716 = vmul.f32 %v681, %v527
          %v717 = vmul.f32 %v683, %v527
          %v718 = vmul.f32 %v685, %v527
          %v719 = vmul.f32 %v687, %v527
          %v720 = vadd.f32 %v688, 1e-06
          %v721 = vadd.f32 %v689, 1e-06
          %v722 = vadd.f32 %v690, 1e-06
          %v723 = vadd.f32 %v691, 1e-06
          %v724 = vadd.f32 %v692, 1e-06
          %v725 = vadd.f32 %v693, 1e-06
          %v726 = vadd.f32 %v694, 1e-06
          %v727 = vadd.f32 %v695, 1e-06
          %v728 = vadd.f32 %v696, 1e-06
          %v729 = vadd.f32 %v697, 1e-06
          %v730 = vadd.f32 %v698, 1e-06
          %v731 = vadd.f32 %v699, 1e-06
          %v732 = vadd.f32 %v700, 1e-06
          %v733 = vadd.f32 %v701, 1e-06
          %v734 = vadd.f32 %v702, 1e-06
          %v735 = vadd.f32 %v703, 1e-06
          %v736 = vadd.f32 %v704, 1e-06
          %v737 = vadd.f32 %v705, 1e-06
          %v738 = vadd.f32 %v706, 1e-06
          %v739 = vadd.f32 %v707, 1e-06
          %v740 = vadd.f32 %v708, 1e-06
          %v741 = vadd.f32 %v709, 1e-06
          %v742 = vadd.f32 %v710, 1e-06
          %v743 = vadd.f32 %v711, 1e-06
          %v744 = vadd.f32 %v712, 1e-06
          %v745 = vadd.f32 %v713, 1e-06
          %v746 = vadd.f32 %v714, 1e-06
          %v747 = vadd.f32 %v715, 1e-06
          %v748 = vadd.f32 %v716, 1e-06
          %v749 = vadd.f32 %v717, 1e-06
          %v750 = vadd.f32 %v718, 1e-06
          %v751 = vadd.f32 %v719, 1e-06
          %v752 = vrsqrt.pop %v720
          %v753 = vmul.f32 %v752, %v720
          %v754 = vmul.f32 %v753, %v752
          %v755 = vmul.f32 0.5, %v754
          %v756 = vsub.f32 1.5, %v755
          %v757 = vmul.f32 %v752, %v756
          %vm758 = vweird.f32 %v720
          %vm759 = vweird.f32 %v752
          %vm760 = vmor %vm758, %vm759
          %v761 = vsel %vm760, %v752, %v757
          %v762 = vrsqrt.pop %v721
          %v763 = vmul.f32 %v762, %v721
          %v764 = vmul.f32 %v763, %v762
          %v765 = vmul.f32 0.5, %v764
          %v766 = vsub.f32 1.5, %v765
          %v767 = vmul.f32 %v762, %v766
          %vm768 = vweird.f32 %v721
          %vm769 = vweird.f32 %v762
          %vm770 = vmor %vm768, %vm769
          %v771 = vsel %vm770, %v762, %v767
          %v772 = vrsqrt.pop %v722
          %v773 = vmul.f32 %v772, %v722
          %v774 = vmul.f32 %v773, %v772
          %v775 = vmul.f32 0.5, %v774
          %v776 = vsub.f32 1.5, %v775
          %v777 = vmul.f32 %v772, %v776
          %vm778 = vweird.f32 %v722
          %vm779 = vweird.f32 %v772
          %vm780 = vmor %vm778, %vm779
          %v781 = vsel %vm780, %v772, %v777
          %v782 = vrsqrt.pop %v723
          %v783 = vmul.f32 %v782, %v723
          %v784 = vmul.f32 %v783, %v782
          %v785 = vmul.f32 0.5, %v784
          %v786 = vsub.f32 1.5, %v785
          %v787 = vmul.f32 %v782, %v786
          %vm788 = vweird.f32 %v723
          %vm789 = vweird.f32 %v782
          %vm790 = vmor %vm788, %vm789
          %v791 = vsel %vm790, %v782, %v787
          %v792 = vrsqrt.pop %v724
          %v793 = vmul.f32 %v792, %v724
          %v794 = vmul.f32 %v793, %v792
          %v795 = vmul.f32 0.5, %v794
          %v796 = vsub.f32 1.5, %v795
          %v797 = vmul.f32 %v792, %v796
          %vm798 = vweird.f32 %v724
          %vm799 = vweird.f32 %v792
          %vm800 = vmor %vm798, %vm799
          %v801 = vsel %vm800, %v792, %v797
          %v802 = vrsqrt.pop %v725
          %v803 = vmul.f32 %v802, %v725
          %v804 = vmul.f32 %v803, %v802
          %v805 = vmul.f32 0.5, %v804
          %v806 = vsub.f32 1.5, %v805
          %v807 = vmul.f32 %v802, %v806
          %vm808 = vweird.f32 %v725
          %vm809 = vweird.f32 %v802
          %vm810 = vmor %vm808, %vm809
          %v811 = vsel %vm810, %v802, %v807
          %v812 = vrsqrt.pop %v726
          %v813 = vmul.f32 %v812, %v726
          %v814 = vmul.f32 %v813, %v812
          %v815 = vmul.f32 0.5, %v814
          %v816 = vsub.f32 1.5, %v815
          %v817 = vmul.f32 %v812, %v816
          %vm818 = vweird.f32 %v726
          %vm819 = vweird.f32 %v812
          %vm820 = vmor %vm818, %vm819
          %v821 = vsel %vm820, %v812, %v817
          %v822 = vrsqrt.pop %v727
          %v823 = vmul.f32 %v822, %v727
          %v824 = vmul.f32 %v823, %v822
          %v825 = vmul.f32 0.5, %v824
          %v826 = vsub.f32 1.5, %v825
          %v827 = vmul.f32 %v822, %v826
          %vm828 = vweird.f32 %v727
          %vm829 = vweird.f32 %v822
          %vm830 = vmor %vm828, %vm829
          %v831 = vsel %vm830, %v822, %v827
          %v832 = vrsqrt.pop %v728
          %v833 = vmul.f32 %v832, %v728
          %v834 = vmul.f32 %v833, %v832
          %v835 = vmul.f32 0.5, %v834
          %v836 = vsub.f32 1.5, %v835
          %v837 = vmul.f32 %v832, %v836
          %vm838 = vweird.f32 %v728
          %vm839 = vweird.f32 %v832
          %vm840 = vmor %vm838, %vm839
          %v841 = vsel %vm840, %v832, %v837
          %v842 = vrsqrt.pop %v729
          %v843 = vmul.f32 %v842, %v729
          %v844 = vmul.f32 %v843, %v842
          %v845 = vmul.f32 0.5, %v844
          %v846 = vsub.f32 1.5, %v845
          %v847 = vmul.f32 %v842, %v846
          %vm848 = vweird.f32 %v729
          %vm849 = vweird.f32 %v842
          %vm850 = vmor %vm848, %vm849
          %v851 = vsel %vm850, %v842, %v847
          %v852 = vrsqrt.pop %v730
          %v853 = vmul.f32 %v852, %v730
          %v854 = vmul.f32 %v853, %v852
          %v855 = vmul.f32 0.5, %v854
          %v856 = vsub.f32 1.5, %v855
          %v857 = vmul.f32 %v852, %v856
          %vm858 = vweird.f32 %v730
          %vm859 = vweird.f32 %v852
          %vm860 = vmor %vm858, %vm859
          %v861 = vsel %vm860, %v852, %v857
          %v862 = vrsqrt.pop %v731
          %v863 = vmul.f32 %v862, %v731
          %v864 = vmul.f32 %v863, %v862
          %v865 = vmul.f32 0.5, %v864
          %v866 = vsub.f32 1.5, %v865
          %v867 = vmul.f32 %v862, %v866
          %vm868 = vweird.f32 %v731
          %vm869 = vweird.f32 %v862
          %vm870 = vmor %vm868, %vm869
          %v871 = vsel %vm870, %v862, %v867
          %v872 = vrsqrt.pop %v732
          %v873 = vmul.f32 %v872, %v732
          %v874 = vmul.f32 %v873, %v872
          %v875 = vmul.f32 0.5, %v874
          %v876 = vsub.f32 1.5, %v875
          %v877 = vmul.f32 %v872, %v876
          %vm878 = vweird.f32 %v732
          %vm879 = vweird.f32 %v872
          %vm880 = vmor %vm878, %vm879
          %v881 = vsel %vm880, %v872, %v877
          %v882 = vrsqrt.pop %v733
          %v883 = vmul.f32 %v882, %v733
          %v884 = vmul.f32 %v883, %v882
          %v885 = vmul.f32 0.5, %v884
          %v886 = vsub.f32 1.5, %v885
          %v887 = vmul.f32 %v882, %v886
          %vm888 = vweird.f32 %v733
          %vm889 = vweird.f32 %v882
          %vm890 = vmor %vm888, %vm889
          %v891 = vsel %vm890, %v882, %v887
          %v892 = vrsqrt.pop %v734
          %v893 = vmul.f32 %v892, %v734
          %v894 = vmul.f32 %v893, %v892
          %v895 = vmul.f32 0.5, %v894
          %v896 = vsub.f32 1.5, %v895
          %v897 = vmul.f32 %v892, %v896
          %vm898 = vweird.f32 %v734
          %vm899 = vweird.f32 %v892
          %vm900 = vmor %vm898, %vm899
          %v901 = vsel %vm900, %v892, %v897
          %v902 = vrsqrt.pop %v735
          %v903 = vmul.f32 %v902, %v735
          %v904 = vmul.f32 %v903, %v902
          %v905 = vmul.f32 0.5, %v904
          %v906 = vsub.f32 1.5, %v905
          %v907 = vmul.f32 %v902, %v906
          %vm908 = vweird.f32 %v735
          %vm909 = vweird.f32 %v902
          %vm910 = vmor %vm908, %vm909
          %v911 = vsel %vm910, %v902, %v907
          %v912 = vrsqrt.pop %v736
          %v913 = vmul.f32 %v912, %v736
          %v914 = vmul.f32 %v913, %v912
          %v915 = vmul.f32 0.5, %v914
          %v916 = vsub.f32 1.5, %v915
          %v917 = vmul.f32 %v912, %v916
          %vm918 = vweird.f32 %v736
          %vm919 = vweird.f32 %v912
          %vm920 = vmor %vm918, %vm919
          %v921 = vsel %vm920, %v912, %v917
          %v922 = vrsqrt.pop %v737
          %v923 = vmul.f32 %v922, %v737
          %v924 = vmul.f32 %v923, %v922
          %v925 = vmul.f32 0.5, %v924
          %v926 = vsub.f32 1.5, %v925
          %v927 = vmul.f32 %v922, %v926
          %vm928 = vweird.f32 %v737
          %vm929 = vweird.f32 %v922
          %vm930 = vmor %vm928, %vm929
          %v931 = vsel %vm930, %v922, %v927
          %v932 = vrsqrt.pop %v738
          %v933 = vmul.f32 %v932, %v738
          %v934 = vmul.f32 %v933, %v932
          %v935 = vmul.f32 0.5, %v934
          %v936 = vsub.f32 1.5, %v935
          %v937 = vmul.f32 %v932, %v936
          %vm938 = vweird.f32 %v738
          %vm939 = vweird.f32 %v932
          %vm940 = vmor %vm938, %vm939
          %v941 = vsel %vm940, %v932, %v937
          %v942 = vrsqrt.pop %v739
          %v943 = vmul.f32 %v942, %v739
          %v944 = vmul.f32 %v943, %v942
          %v945 = vmul.f32 0.5, %v944
          %v946 = vsub.f32 1.5, %v945
          %v947 = vmul.f32 %v942, %v946
          %vm948 = vweird.f32 %v739
          %vm949 = vweird.f32 %v942
          %vm950 = vmor %vm948, %vm949
          %v951 = vsel %vm950, %v942, %v947
          %v952 = vrsqrt.pop %v740
          %v953 = vmul.f32 %v952, %v740
          %v954 = vmul.f32 %v953, %v952
          %v955 = vmul.f32 0.5, %v954
          %v956 = vsub.f32 1.5, %v955
          %v957 = vmul.f32 %v952, %v956
          %vm958 = vweird.f32 %v740
          %vm959 = vweird.f32 %v952
          %vm960 = vmor %vm958, %vm959
          %v961 = vsel %vm960, %v952, %v957
          %v962 = vrsqrt.pop %v741
          %v963 = vmul.f32 %v962, %v741
          %v964 = vmul.f32 %v963, %v962
          %v965 = vmul.f32 0.5, %v964
          %v966 = vsub.f32 1.5, %v965
          %v967 = vmul.f32 %v962, %v966
          %vm968 = vweird.f32 %v741
          %vm969 = vweird.f32 %v962
          %vm970 = vmor %vm968, %vm969
          %v971 = vsel %vm970, %v962, %v967
          %v972 = vrsqrt.pop %v742
          %v973 = vmul.f32 %v972, %v742
          %v974 = vmul.f32 %v973, %v972
          %v975 = vmul.f32 0.5, %v974
          %v976 = vsub.f32 1.5, %v975
          %v977 = vmul.f32 %v972, %v976
          %vm978 = vweird.f32 %v742
          %vm979 = vweird.f32 %v972
          %vm980 = vmor %vm978, %vm979
          %v981 = vsel %vm980, %v972, %v977
          %v982 = vrsqrt.pop %v743
          %v983 = vmul.f32 %v982, %v743
          %v984 = vmul.f32 %v983, %v982
          %v985 = vmul.f32 0.5, %v984
          %v986 = vsub.f32 1.5, %v985
          %v987 = vmul.f32 %v982, %v986
          %vm988 = vweird.f32 %v743
          %vm989 = vweird.f32 %v982
          %vm990 = vmor %vm988, %vm989
          %v991 = vsel %vm990, %v982, %v987
          %v992 = vrsqrt.pop %v744
          %v993 = vmul.f32 %v992, %v744
          %v994 = vmul.f32 %v993, %v992
          %v995 = vmul.f32 0.5, %v994
          %v996 = vsub.f32 1.5, %v995
          %v997 = vmul.f32 %v992, %v996
          %vm998 = vweird.f32 %v744
          %vm999 = vweird.f32 %v992
          %vm1000 = vmor %vm998, %vm999
          %v1001 = vsel %vm1000, %v992, %v997
          %v1002 = vrsqrt.pop %v745
          %v1003 = vmul.f32 %v1002, %v745
          %v1004 = vmul.f32 %v1003, %v1002
          %v1005 = vmul.f32 0.5, %v1004
          %v1006 = vsub.f32 1.5, %v1005
          %v1007 = vmul.f32 %v1002, %v1006
          %vm1008 = vweird.f32 %v745
          %vm1009 = vweird.f32 %v1002
          %vm1010 = vmor %vm1008, %vm1009
          %v1011 = vsel %vm1010, %v1002, %v1007
          %v1012 = vrsqrt.pop %v746
          %v1013 = vmul.f32 %v1012, %v746
          %v1014 = vmul.f32 %v1013, %v1012
          %v1015 = vmul.f32 0.5, %v1014
          %v1016 = vsub.f32 1.5, %v1015
          %v1017 = vmul.f32 %v1012, %v1016
          %vm1018 = vweird.f32 %v746
          %vm1019 = vweird.f32 %v1012
          %vm1020 = vmor %vm1018, %vm1019
          %v1021 = vsel %vm1020, %v1012, %v1017
          %v1022 = vrsqrt.pop %v747
          %v1023 = vmul.f32 %v1022, %v747
          %v1024 = vmul.f32 %v1023, %v1022
          %v1025 = vmul.f32 0.5, %v1024
          %v1026 = vsub.f32 1.5, %v1025
          %v1027 = vmul.f32 %v1022, %v1026
          %vm1028 = vweird.f32 %v747
          %vm1029 = vweird.f32 %v1022
          %vm1030 = vmor %vm1028, %vm1029
          %v1031 = vsel %vm1030, %v1022, %v1027
          %v1032 = vrsqrt.pop %v748
          %v1033 = vmul.f32 %v1032, %v748
          %v1034 = vmul.f32 %v1033, %v1032
          %v1035 = vmul.f32 0.5, %v1034
          %v1036 = vsub.f32 1.5, %v1035
          %v1037 = vmul.f32 %v1032, %v1036
          %vm1038 = vweird.f32 %v748
          %vm1039 = vweird.f32 %v1032
          %vm1040 = vmor %vm1038, %vm1039
          %v1041 = vsel %vm1040, %v1032, %v1037
          %v1042 = vrsqrt.pop %v749
          %v1043 = vmul.f32 %v1042, %v749
          %v1044 = vmul.f32 %v1043, %v1042
          %v1045 = vmul.f32 0.5, %v1044
          %v1046 = vsub.f32 1.5, %v1045
          %v1047 = vmul.f32 %v1042, %v1046
          %vm1048 = vweird.f32 %v749
          %vm1049 = vweird.f32 %v1042
          %vm1050 = vmor %vm1048, %vm1049
          %v1051 = vsel %vm1050, %v1042, %v1047
          %v1052 = vrsqrt.pop %v750
          %v1053 = vmul.f32 %v1052, %v750
          %v1054 = vmul.f32 %v1053, %v1052
          %v1055 = vmul.f32 0.5, %v1054
          %v1056 = vsub.f32 1.5, %v1055
          %v1057 = vmul.f32 %v1052, %v1056
          %vm1058 = vweird.f32 %v750
          %vm1059 = vweird.f32 %v1052
          %vm1060 = vmor %vm1058, %vm1059
          %v1061 = vsel %vm1060, %v1052, %v1057
          %v1062 = vrsqrt.pop %v751
          %v1063 = vmul.f32 %v1062, %v751
          %v1064 = vmul.f32 %v1063, %v1062
          %v1065 = vmul.f32 0.5, %v1064
          %v1066 = vsub.f32 1.5, %v1065
          %v1067 = vmul.f32 %v1062, %v1066
          %vm1068 = vweird.f32 %v751
          %vm1069 = vweird.f32 %v1062
          %vm1070 = vmor %vm1068, %vm1069
          %v1071 = vsel %vm1070, %v1062, %v1067
          %v1072 = vmul.f32 %v560, %v761
          %v1073 = vmul.f32 %v561, %v771
          %v1074 = vmul.f32 %v562, %v781
          %v1075 = vmul.f32 %v563, %v791
          %v1076 = vmul.f32 %v564, %v801
          %v1077 = vmul.f32 %v565, %v811
          %v1078 = vmul.f32 %v566, %v821
          %v1079 = vmul.f32 %v567, %v831
          %v1080 = vmul.f32 %v568, %v841
          %v1081 = vmul.f32 %v569, %v851
          %v1082 = vmul.f32 %v570, %v861
          %v1083 = vmul.f32 %v571, %v871
          %v1084 = vmul.f32 %v572, %v881
          %v1085 = vmul.f32 %v573, %v891
          %v1086 = vmul.f32 %v574, %v901
          %v1087 = vmul.f32 %v575, %v911
          %v1088 = vmul.f32 %v576, %v921
          %v1089 = vmul.f32 %v577, %v931
          %v1090 = vmul.f32 %v578, %v941
          %v1091 = vmul.f32 %v579, %v951
          %v1092 = vmul.f32 %v580, %v961
          %v1093 = vmul.f32 %v581, %v971
          %v1094 = vmul.f32 %v582, %v981
          %v1095 = vmul.f32 %v583, %v991
          %v1096 = vmul.f32 %v584, %v1001
          %v1097 = vmul.f32 %v585, %v1011
          %v1098 = vmul.f32 %v586, %v1021
          %v1099 = vmul.f32 %v587, %v1031
          %v1100 = vmul.f32 %v588, %v1041
          %v1101 = vmul.f32 %v589, %v1051
          %v1102 = vmul.f32 %v590, %v1061
          %v1103 = vmul.f32 %v591, %v1071
          %v1104 = vld [vmem:[#allocation7] sm:$0x1]
          %v1106 = vperm.slane %v1104, 0
          %v1108 = vmul.f32 %v1072, %v1106
          %v1109 = vmul.f32 %v1073, %v1106
          %v1110 = vmul.f32 %v1074, %v1106
          %v1111 = vmul.f32 %v1075, %v1106
          %v1112 = vmul.f32 %v1076, %v1106
          %v1113 = vmul.f32 %v1077, %v1106
          %v1114 = vmul.f32 %v1078, %v1106
          %v1115 = vmul.f32 %v1079, %v1106
          %v1116 = vmul.f32 %v1080, %v1106
          %v1117 = vmul.f32 %v1081, %v1106
          %v1118 = vmul.f32 %v1082, %v1106
          %v1119 = vmul.f32 %v1083, %v1106
          %v1120 = vmul.f32 %v1084, %v1106
          %v1121 = vmul.f32 %v1085, %v1106
          %v1122 = vmul.f32 %v1086, %v1106
          %v1123 = vmul.f32 %v1087, %v1106
          %v1124 = vmul.f32 %v1088, %v1106
          %v1125 = vmul.f32 %v1089, %v1106
          %v1126 = vmul.f32 %v1090, %v1106
          %v1127 = vmul.f32 %v1091, %v1106
          %v1128 = vmul.f32 %v1092, %v1106
          %v1129 = vmul.f32 %v1093, %v1106
          %v1130 = vmul.f32 %v1094, %v1106
          %v1131 = vmul.f32 %v1095, %v1106
          %v1132 = vmul.f32 %v1096, %v1106
          %v1133 = vmul.f32 %v1097, %v1106
          %v1134 = vmul.f32 %v1098, %v1106
          %v1135 = vmul.f32 %v1099, %v1106
          %v1136 = vmul.f32 %v1100, %v1106
          %v1137 = vmul.f32 %v1101, %v1106
          %v1138 = vmul.f32 %v1102, %v1106
          %v1139 = vmul.f32 %v1103, %v1106
          %v1140 = vld [vmem:[%s2] sm:$0x1]
          %v1142 = vperm.slane %v1140, 0
          %v1144 = vadd.f32 %v1108, %v1142
          %v1145 = vadd.f32 %v1109, %v1142
          %v1146 = vadd.f32 %v1110, %v1142
          %v1147 = vadd.f32 %v1111, %v1142
          %v1148 = vadd.f32 %v1112, %v1142
          %v1149 = vadd.f32 %v1113, %v1142
          %v1150 = vadd.f32 %v1114, %v1142
          %v1151 = vadd.f32 %v1115, %v1142
          %v1152 = vadd.f32 %v1116, %v1142
          %v1153 = vadd.f32 %v1117, %v1142
          %v1154 = vadd.f32 %v1118, %v1142
          %v1155 = vadd.f32 %v1119, %v1142
          %v1156 = vadd.f32 %v1120, %v1142
          %v1157 = vadd.f32 %v1121, %v1142
          %v1158 = vadd.f32 %v1122, %v1142
          %v1159 = vadd.f32 %v1123, %v1142
          %v1160 = vadd.f32 %v1124, %v1142
          %v1161 = vadd.f32 %v1125, %v1142
          %v1162 = vadd.f32 %v1126, %v1142
          %v1163 = vadd.f32 %v1127, %v1142
          %v1164 = vadd.f32 %v1128, %v1142
          %v1165 = vadd.f32 %v1129, %v1142
          %v1166 = vadd.f32 %v1130, %v1142
          %v1167 = vadd.f32 %v1131, %v1142
          %v1168 = vadd.f32 %v1132, %v1142
          %v1169 = vadd.f32 %v1133, %v1142
          %v1170 = vadd.f32 %v1134, %v1142
          %v1171 = vadd.f32 %v1135, %v1142
          %v1172 = vadd.f32 %v1136, %v1142
          %v1173 = vadd.f32 %v1137, %v1142
          %v1174 = vadd.f32 %v1138, %v1142
          %v1175 = vadd.f32 %v1139, %v1142
          %1176 = vst [vmem:[#allocation2] sm:$0xff] %v1144
          %1177 = vst [vmem:[#allocation2 + $0x8] sm:$0xff] %v1145
          %1178 = vst [vmem:[#allocation2 + $0x10] sm:$0xff] %v1146
          %1179 = vst [vmem:[#allocation2 + $0x18] sm:$0xff] %v1147
          %1180 = vst [vmem:[#allocation2 + $0x20] sm:$0xff] %v1148
          %1181 = vst [vmem:[#allocation2 + $0x28] sm:$0xff] %v1149
          %1182 = vst [vmem:[#allocation2 + $0x30] sm:$0xff] %v1150
          %1183 = vst [vmem:[#allocation2 + $0x38] sm:$0xff] %v1151
          %1184 = vst [vmem:[#allocation2 + $0x40] sm:$0xff] %v1152
          %1185 = vst [vmem:[#allocation2 + $0x48] sm:$0xff] %v1153
          %1186 = vst [vmem:[#allocation2 + $0x50] sm:$0xff] %v1154
          %1187 = vst [vmem:[#allocation2 + $0x58] sm:$0xff] %v1155
          %1188 = vst [vmem:[#allocation2 + $0x60] sm:$0xff] %v1156
          %1189 = vst [vmem:[#allocation2 + $0x68] sm:$0xff] %v1157
          %1190 = vst [vmem:[#allocation2 + $0x70] sm:$0xff] %v1158
          %1191 = vst [vmem:[#allocation2 + $0x78] sm:$0xff] %v1159
          %1192 = vst [vmem:[#allocation2 + $0x80] sm:$0xff] %v1160
          %1193 = vst [vmem:[#allocation2 + $0x88] sm:$0xff] %v1161
          %1194 = vst [vmem:[#allocation2 + $0x90] sm:$0xff] %v1162
          %1195 = vst [vmem:[#allocation2 + $0x98] sm:$0xff] %v1163
          %1196 = vst [vmem:[#allocation2 + $0xa0] sm:$0xff] %v1164
          %1197 = vst [vmem:[#allocation2 + $0xa8] sm:$0xff] %v1165
          %1198 = vst [vmem:[#allocation2 + $0xb0] sm:$0xff] %v1166
          %1199 = vst [vmem:[#allocation2 + $0xb8] sm:$0xff] %v1167
          %1200 = vst [vmem:[#allocation2 + $0xc0] sm:$0xff] %v1168
          %1201 = vst [vmem:[#allocation2 + $0xc8] sm:$0xff] %v1169
          %1202 = vst [vmem:[#allocation2 + $0xd0] sm:$0xff] %v1170
          %1203 = vst [vmem:[#allocation2 + $0xd8] sm:$0xff] %v1171
          %1204 = vst [vmem:[#allocation2 + $0xe0] sm:$0xff] %v1172
          %1205 = vst [vmem:[#allocation2 + $0xe8] sm:$0xff] %v1173
          %1206 = vst [vmem:[#allocation2 + $0xf0] sm:$0xff] %v1174
          %1207 = vst [vmem:[#allocation2 + $0xf8] sm:$0xff] %v1175
          %1208 = vst [vmem:[#allocation3] sm:$0xff] 0.0
          %1209 = vst [vmem:[#allocation3 + $0x8] sm:$0xff] 0.0
          %1210 = vst [vmem:[#allocation3 + $0x10] sm:$0xff] 0.0
          %1211 = vst [vmem:[#allocation3 + $0x18] sm:$0xff] 0.0
          %1212 = vst [vmem:[#allocation3 + $0x20] sm:$0xff] 0.0
          %1213 = vst [vmem:[#allocation3 + $0x28] sm:$0xff] 0.0
          %1214 = vst [vmem:[#allocation3 + $0x30] sm:$0xff] 0.0
          %1215 = vst [vmem:[#allocation3 + $0x38] sm:$0xff] 0.0
          %1216 = vst [vmem:[#allocation3 + $0x40] sm:$0xff] 0.0
          %1217 = vst [vmem:[#allocation3 + $0x48] sm:$0xff] 0.0
          %1218 = vst [vmem:[#allocation3 + $0x50] sm:$0xff] 0.0
          %1219 = vst [vmem:[#allocation3 + $0x58] sm:$0xff] 0.0
          %1220 = vst [vmem:[#allocation3 + $0x60] sm:$0xff] 0.0
          %1221 = vst [vmem:[#allocation3 + $0x68] sm:$0xff] 0.0
          %1222 = vst [vmem:[#allocation3 + $0x70] sm:$0xff] 0.0
          %1223 = vst [vmem:[#allocation3 + $0x78] sm:$0xff] 0.0
          %1224 = vst [vmem:[#allocation3 + $0x80] sm:$0xff] 0.0
          %1225 = vst [vmem:[#allocation3 + $0x88] sm:$0xff] 0.0
          %1226 = vst [vmem:[#allocation3 + $0x90] sm:$0xff] 0.0
          %1227 = vst [vmem:[#allocation3 + $0x98] sm:$0xff] 0.0
          %1228 = vst [vmem:[#allocation3 + $0xa0] sm:$0xff] 0.0
          %1229 = vst [vmem:[#allocation3 + $0xa8] sm:$0xff] 0.0
          %1230 = vst [vmem:[#allocation3 + $0xb0] sm:$0xff] 0.0
          %1231 = vst [vmem:[#allocation3 + $0xb8] sm:$0xff] 0.0
          %1232 = vst [vmem:[#allocation3 + $0xc0] sm:$0xff] 0.0
          %1233 = vst [vmem:[#allocation3 + $0xc8] sm:$0xff] 0.0
          %1234 = vst [vmem:[#allocation3 + $0xd0] sm:$0xff] 0.0
          %1235 = vst [vmem:[#allocation3 + $0xd8] sm:$0xff] 0.0
          %1236 = vst [vmem:[#allocation3 + $0xe0] sm:$0xff] 0.0
          %1237 = vst [vmem:[#allocation3 + $0xe8] sm:$0xff] 0.0
          %1238 = vst [vmem:[#allocation3 + $0xf0] sm:$0xff] 0.0
          %1239 = vst [vmem:[#allocation3 + $0xf8] sm:$0xff] 0.0
        $region72: #{tpu_custom_call.1} parent=47 // pred_fallthru
          _
        %v1240 = vld [vmem:[#allocation2] sm:$0xff]
        %v1241 = vld [vmem:[#allocation2 + $0x8] sm:$0xff]
        %v1242 = vld [vmem:[#allocation2 + $0x10] sm:$0xff]
        %v1243 = vld [vmem:[#allocation2 + $0x18] sm:$0xff]
        %v1244 = vld [vmem:[#allocation2 + $0x20] sm:$0xff]
        %v1245 = vld [vmem:[#allocation2 + $0x28] sm:$0xff]
        %v1246 = vld [vmem:[#allocation2 + $0x30] sm:$0xff]
        %v1247 = vld [vmem:[#allocation2 + $0x38] sm:$0xff]
        %v1248 = vld [vmem:[#allocation2 + $0x40] sm:$0xff]
        %v1249 = vld [vmem:[#allocation2 + $0x48] sm:$0xff]
        %v1250 = vld [vmem:[#allocation2 + $0x50] sm:$0xff]
        %v1251 = vld [vmem:[#allocation2 + $0x58] sm:$0xff]
        %v1252 = vld [vmem:[#allocation2 + $0x60] sm:$0xff]
        %v1253 = vld [vmem:[#allocation2 + $0x68] sm:$0xff]
        %v1254 = vld [vmem:[#allocation2 + $0x70] sm:$0xff]
        %v1255 = vld [vmem:[#allocation2 + $0x78] sm:$0xff]
        %v1256 = vld [vmem:[#allocation2 + $0x80] sm:$0xff]
        %v1257 = vld [vmem:[#allocation2 + $0x88] sm:$0xff]
        %v1258 = vld [vmem:[#allocation2 + $0x90] sm:$0xff]
        %v1259 = vld [vmem:[#allocation2 + $0x98] sm:$0xff]
        %v1260 = vld [vmem:[#allocation2 + $0xa0] sm:$0xff]
        %v1261 = vld [vmem:[#allocation2 + $0xa8] sm:$0xff]
        %v1262 = vld [vmem:[#allocation2 + $0xb0] sm:$0xff]
        %v1263 = vld [vmem:[#allocation2 + $0xb8] sm:$0xff]
        %v1264 = vld [vmem:[#allocation2 + $0xc0] sm:$0xff]
        %v1265 = vld [vmem:[#allocation2 + $0xc8] sm:$0xff]
        %v1266 = vld [vmem:[#allocation2 + $0xd0] sm:$0xff]
        %v1267 = vld [vmem:[#allocation2 + $0xd8] sm:$0xff]
        %v1268 = vld [vmem:[#allocation2 + $0xe0] sm:$0xff]
        %v1269 = vld [vmem:[#allocation2 + $0xe8] sm:$0xff]
        %v1270 = vld [vmem:[#allocation2 + $0xf0] sm:$0xff]
        %v1271 = vld [vmem:[#allocation2 + $0xf8] sm:$0xff]
        %v1272 = vld [vmem:[%s359] sm:$0xff]
        %v1273 = vld [vmem:[%s359 + $0x8] sm:$0xff]
        %v1274 = vld [vmem:[%s359 + $0x10] sm:$0xff]
        %v1275 = vld [vmem:[%s359 + $0x18] sm:$0xff]
        %v1276 = vld [vmem:[%s359 + $0x20] sm:$0xff]
        %v1277 = vld [vmem:[%s359 + $0x28] sm:$0xff]
        %v1278 = vld [vmem:[%s359 + $0x30] sm:$0xff]
        %v1279 = vld [vmem:[%s359 + $0x38] sm:$0xff]
        %v1280 = vld [vmem:[%s359 + $0x40] sm:$0xff]
        %v1281 = vld [vmem:[%s359 + $0x48] sm:$0xff]
        %v1282 = vld [vmem:[%s359 + $0x50] sm:$0xff]
        %v1283 = vld [vmem:[%s359 + $0x58] sm:$0xff]
        %v1284 = vld [vmem:[%s359 + $0x60] sm:$0xff]
        %v1285 = vld [vmem:[%s359 + $0x68] sm:$0xff]
        %v1286 = vld [vmem:[%s359 + $0x70] sm:$0xff]
        %v1287 = vld [vmem:[%s359 + $0x78] sm:$0xff]
        %v1288 = vld [vmem:[%s359 + $0x80] sm:$0xff]
        %v1289 = vld [vmem:[%s359 + $0x88] sm:$0xff]
        %v1290 = vld [vmem:[%s359 + $0x90] sm:$0xff]
        %v1291 = vld [vmem:[%s359 + $0x98] sm:$0xff]
        %v1292 = vld [vmem:[%s359 + $0xa0] sm:$0xff]
        %v1293 = vld [vmem:[%s359 + $0xa8] sm:$0xff]
        %v1294 = vld [vmem:[%s359 + $0xb0] sm:$0xff]
        %v1295 = vld [vmem:[%s359 + $0xb8] sm:$0xff]
        %v1296 = vld [vmem:[%s359 + $0xc0] sm:$0xff]
        %v1297 = vld [vmem:[%s359 + $0xc8] sm:$0xff]
        %v1298 = vld [vmem:[%s359 + $0xd0] sm:$0xff]
        %v1299 = vld [vmem:[%s359 + $0xd8] sm:$0xff]
        %v1300 = vld [vmem:[%s359 + $0xe0] sm:$0xff]
        %v1301 = vld [vmem:[%s359 + $0xe8] sm:$0xff]
        %v1302 = vld [vmem:[%s359 + $0xf0] sm:$0xff]
        %v1303 = vld [vmem:[%s359 + $0xf8] sm:$0xff]
        %v1304 = vld [vmem:[%s369] sm:$0x3]
        %v1306 = vperm.slane %v1304, 0
        %v1307 = vperm.slane %v1304, 1
        %1310 = vmatpush.msra.mxu0 %v1302
        %1311 = vmatpush.msra.mxu0 %v1300
        %1312 = vmatpush.msra.mxu0 %v1298
        %1313 = vmatpush.msra.mxu0 %v1296
        %1314 = vmatpush.msra.mxu0 %v1294
        %1315 = vmatpush.msra.mxu0 %v1292
        %1316 = vmatpush.msra.mxu0 %v1290
        %1317 = vmatpush.msra.mxu0 %v1288
        %1318 = vmatpush.msra.mxu0 %v1286
        %1319 = vmatpush.msra.mxu0 %v1284
        %1320 = vmatpush.msra.mxu0 %v1282
        %1321 = vmatpush.msra.mxu0 %v1280
        %1322 = vmatpush.msra.mxu0 %v1278
        %1323 = vmatpush.msra.mxu0 %v1276
        %1324 = vmatpush.msra.mxu0 %v1274
        %1325 = vmatpush.msra.mxu0 %v1272
        %1326 = vmatmul.f32.gmra.mxu0 %v1240
        %v1327 = vpop.f32.mrf.mxu0
        %v1328 = vadd.f32 %v1306, %v1327
        %1329 = vmatmul.f32.gmra.mxu0 %v1241
        %v1330 = vpop.f32.mrf.mxu0
        %v1331 = vadd.f32 %v1306, %v1330
        %1332 = vmatmul.f32.gmra.mxu0 %v1242
        %v1333 = vpop.f32.mrf.mxu0
        %v1334 = vadd.f32 %v1306, %v1333
        %1335 = vmatmul.f32.gmra.mxu0 %v1243
        %v1336 = vpop.f32.mrf.mxu0
        %v1337 = vadd.f32 %v1306, %v1336
        %1338 = vmatmul.f32.gmra.mxu0 %v1244
        %v1339 = vpop.f32.mrf.mxu0
        %v1340 = vadd.f32 %v1306, %v1339
        %1341 = vmatmul.f32.gmra.mxu0 %v1245
        %v1342 = vpop.f32.mrf.mxu0
        %v1343 = vadd.f32 %v1306, %v1342
        %1344 = vmatmul.f32.gmra.mxu0 %v1246
        %v1345 = vpop.f32.mrf.mxu0
        %v1346 = vadd.f32 %v1306, %v1345
        %1347 = vmatmul.f32.gmra.mxu0 %v1247
        %v1348 = vpop.f32.mrf.mxu0
        %v1349 = vadd.f32 %v1306, %v1348
        %1350 = vmatmul.f32.gmra.mxu0 %v1248
        %v1351 = vpop.f32.mrf.mxu0
        %v1352 = vadd.f32 %v1306, %v1351
        %1353 = vmatmul.f32.gmra.mxu0 %v1249
        %v1354 = vpop.f32.mrf.mxu0
        %v1355 = vadd.f32 %v1306, %v1354
        %1356 = vmatmul.f32.gmra.mxu0 %v1250
        %v1357 = vpop.f32.mrf.mxu0
        %v1358 = vadd.f32 %v1306, %v1357
        %1359 = vmatmul.f32.gmra.mxu0 %v1251
        %v1360 = vpop.f32.mrf.mxu0
        %v1361 = vadd.f32 %v1306, %v1360
        %1362 = vmatmul.f32.gmra.mxu0 %v1252
        %v1363 = vpop.f32.mrf.mxu0
        %v1364 = vadd.f32 %v1306, %v1363
        %1365 = vmatmul.f32.gmra.mxu0 %v1253
        %v1366 = vpop.f32.mrf.mxu0
        %v1367 = vadd.f32 %v1306, %v1366
        %1368 = vmatmul.f32.gmra.mxu0 %v1254
        %v1369 = vpop.f32.mrf.mxu0
        %v1370 = vadd.f32 %v1306, %v1369
        %1371 = vmatmul.f32.gmra.mxu0 %v1255
        %v1372 = vpop.f32.mrf.mxu0
        %v1373 = vadd.f32 %v1306, %v1372
        %1374 = vmatmul.f32.gmra.mxu0 %v1256
        %v1375 = vpop.f32.mrf.mxu0
        %v1376 = vadd.f32 %v1306, %v1375
        %1377 = vmatmul.f32.gmra.mxu0 %v1257
        %v1378 = vpop.f32.mrf.mxu0
        %v1379 = vadd.f32 %v1306, %v1378
        %1380 = vmatmul.f32.gmra.mxu0 %v1258
        %v1381 = vpop.f32.mrf.mxu0
        %v1382 = vadd.f32 %v1306, %v1381
        %1383 = vmatmul.f32.gmra.mxu0 %v1259
        %v1384 = vpop.f32.mrf.mxu0
        %v1385 = vadd.f32 %v1306, %v1384
        %1386 = vmatmul.f32.gmra.mxu0 %v1260
        %v1387 = vpop.f32.mrf.mxu0
        %v1388 = vadd.f32 %v1306, %v1387
        %1389 = vmatmul.f32.gmra.mxu0 %v1261
        %v1390 = vpop.f32.mrf.mxu0
        %v1391 = vadd.f32 %v1306, %v1390
        %1392 = vmatmul.f32.gmra.mxu0 %v1262
        %v1393 = vpop.f32.mrf.mxu0
        %v1394 = vadd.f32 %v1306, %v1393
        %1395 = vmatmul.f32.gmra.mxu0 %v1263
        %v1396 = vpop.f32.mrf.mxu0
        %v1397 = vadd.f32 %v1306, %v1396
        %1398 = vmatmul.f32.gmra.mxu0 %v1264
        %v1399 = vpop.f32.mrf.mxu0
        %v1400 = vadd.f32 %v1306, %v1399
        %1401 = vmatmul.f32.gmra.mxu0 %v1265
        %v1402 = vpop.f32.mrf.mxu0
        %v1403 = vadd.f32 %v1306, %v1402
        %1404 = vmatmul.f32.gmra.mxu0 %v1266
        %v1405 = vpop.f32.mrf.mxu0
        %v1406 = vadd.f32 %v1306, %v1405
        %1407 = vmatmul.f32.gmra.mxu0 %v1267
        %v1408 = vpop.f32.mrf.mxu0
        %v1409 = vadd.f32 %v1306, %v1408
        %1410 = vmatmul.f32.gmra.mxu0 %v1268
        %v1411 = vpop.f32.mrf.mxu0
        %v1412 = vadd.f32 %v1306, %v1411
        %1413 = vmatmul.f32.gmra.mxu0 %v1269
        %v1414 = vpop.f32.mrf.mxu0
        %v1415 = vadd.f32 %v1306, %v1414
        %1416 = vmatmul.f32.gmra.mxu0 %v1270
        %v1417 = vpop.f32.mrf.mxu0
        %v1418 = vadd.f32 %v1306, %v1417
        %1419 = vmatmul.f32.gmra.mxu0 %v1271
        %v1420 = vpop.f32.mrf.mxu0
        %v1421 = vadd.f32 %v1306, %v1420
        %1422 = vdwg.mxu0
        %1423 = vmatpush.msra.mxu0 %v1303
        %1424 = vmatpush.msra.mxu0 %v1301
        %1425 = vmatpush.msra.mxu0 %v1299
        %1426 = vmatpush.msra.mxu0 %v1297
        %1427 = vmatpush.msra.mxu0 %v1295
        %1428 = vmatpush.msra.mxu0 %v1293
        %1429 = vmatpush.msra.mxu0 %v1291
        %1430 = vmatpush.msra.mxu0 %v1289
        %1431 = vmatpush.msra.mxu0 %v1287
        %1432 = vmatpush.msra.mxu0 %v1285
        %1433 = vmatpush.msra.mxu0 %v1283
        %1434 = vmatpush.msra.mxu0 %v1281
        %1435 = vmatpush.msra.mxu0 %v1279
        %1436 = vmatpush.msra.mxu0 %v1277
        %1437 = vmatpush.msra.mxu0 %v1275
        %1438 = vmatpush.msra.mxu0 %v1273
        %1439 = vmatmul.f32.gmra.mxu0 %v1240
        %v1440 = vpop.f32.mrf.mxu0
        %v1441 = vadd.f32 %v1307, %v1440
        %1442 = vmatmul.f32.gmra.mxu0 %v1241
        %v1443 = vpop.f32.mrf.mxu0
        %v1444 = vadd.f32 %v1307, %v1443
        %1445 = vmatmul.f32.gmra.mxu0 %v1242
        %v1446 = vpop.f32.mrf.mxu0
        %v1447 = vadd.f32 %v1307, %v1446
        %1448 = vmatmul.f32.gmra.mxu0 %v1243
        %v1449 = vpop.f32.mrf.mxu0
        %v1450 = vadd.f32 %v1307, %v1449
        %1451 = vmatmul.f32.gmra.mxu0 %v1244
        %v1452 = vpop.f32.mrf.mxu0
        %v1453 = vadd.f32 %v1307, %v1452
        %1454 = vmatmul.f32.gmra.mxu0 %v1245
        %v1455 = vpop.f32.mrf.mxu0
        %v1456 = vadd.f32 %v1307, %v1455
        %1457 = vmatmul.f32.gmra.mxu0 %v1246
        %v1458 = vpop.f32.mrf.mxu0
        %v1459 = vadd.f32 %v1307, %v1458
        %1460 = vmatmul.f32.gmra.mxu0 %v1247
        %v1461 = vpop.f32.mrf.mxu0
        %v1462 = vadd.f32 %v1307, %v1461
        %1463 = vmatmul.f32.gmra.mxu0 %v1248
        %v1464 = vpop.f32.mrf.mxu0
        %v1465 = vadd.f32 %v1307, %v1464
        %1466 = vmatmul.f32.gmra.mxu0 %v1249
        %v1467 = vpop.f32.mrf.mxu0
        %v1468 = vadd.f32 %v1307, %v1467
        %1469 = vmatmul.f32.gmra.mxu0 %v1250
        %v1470 = vpop.f32.mrf.mxu0
        %v1471 = vadd.f32 %v1307, %v1470
        %1472 = vmatmul.f32.gmra.mxu0 %v1251
        %v1473 = vpop.f32.mrf.mxu0
        %v1474 = vadd.f32 %v1307, %v1473
        %1475 = vmatmul.f32.gmra.mxu0 %v1252
        %v1476 = vpop.f32.mrf.mxu0
        %v1477 = vadd.f32 %v1307, %v1476
        %1478 = vmatmul.f32.gmra.mxu0 %v1253
        %v1479 = vpop.f32.mrf.mxu0
        %v1480 = vadd.f32 %v1307, %v1479
        %1481 = vmatmul.f32.gmra.mxu0 %v1254
        %v1482 = vpop.f32.mrf.mxu0
        %v1483 = vadd.f32 %v1307, %v1482
        %1484 = vmatmul.f32.gmra.mxu0 %v1255
        %v1485 = vpop.f32.mrf.mxu0
        %v1486 = vadd.f32 %v1307, %v1485
        %1487 = vmatmul.f32.gmra.mxu0 %v1256
        %v1488 = vpop.f32.mrf.mxu0
        %v1489 = vadd.f32 %v1307, %v1488
        %1490 = vmatmul.f32.gmra.mxu0 %v1257
        %v1491 = vpop.f32.mrf.mxu0
        %v1492 = vadd.f32 %v1307, %v1491
        %1493 = vmatmul.f32.gmra.mxu0 %v1258
        %v1494 = vpop.f32.mrf.mxu0
        %v1495 = vadd.f32 %v1307, %v1494
        %1496 = vmatmul.f32.gmra.mxu0 %v1259
        %v1497 = vpop.f32.mrf.mxu0
        %v1498 = vadd.f32 %v1307, %v1497
        %1499 = vmatmul.f32.gmra.mxu0 %v1260
        %v1500 = vpop.f32.mrf.mxu0
        %v1501 = vadd.f32 %v1307, %v1500
        %1502 = vmatmul.f32.gmra.mxu0 %v1261
        %v1503 = vpop.f32.mrf.mxu0
        %v1504 = vadd.f32 %v1307, %v1503
        %1505 = vmatmul.f32.gmra.mxu0 %v1262
        %v1506 = vpop.f32.mrf.mxu0
        %v1507 = vadd.f32 %v1307, %v1506
        %1508 = vmatmul.f32.gmra.mxu0 %v1263
        %v1509 = vpop.f32.mrf.mxu0
        %v1510 = vadd.f32 %v1307, %v1509
        %1511 = vmatmul.f32.gmra.mxu0 %v1264
        %v1512 = vpop.f32.mrf.mxu0
        %v1513 = vadd.f32 %v1307, %v1512
        %1514 = vmatmul.f32.gmra.mxu0 %v1265
        %v1515 = vpop.f32.mrf.mxu0
        %v1516 = vadd.f32 %v1307, %v1515
        %1517 = vmatmul.f32.gmra.mxu0 %v1266
        %v1518 = vpop.f32.mrf.mxu0
        %v1519 = vadd.f32 %v1307, %v1518
        %1520 = vmatmul.f32.gmra.mxu0 %v1267
        %v1521 = vpop.f32.mrf.mxu0
        %v1522 = vadd.f32 %v1307, %v1521
        %1523 = vmatmul.f32.gmra.mxu0 %v1268
        %v1524 = vpop.f32.mrf.mxu0
        %v1525 = vadd.f32 %v1307, %v1524
        %1526 = vmatmul.f32.gmra.mxu0 %v1269
        %v1527 = vpop.f32.mrf.mxu0
        %v1528 = vadd.f32 %v1307, %v1527
        %1529 = vmatmul.f32.gmra.mxu0 %v1270
        %v1530 = vpop.f32.mrf.mxu0
        %v1531 = vadd.f32 %v1307, %v1530
        %1532 = vmatmul.f32.gmra.mxu0 %v1271
        %v1533 = vpop.f32.mrf.mxu0
        %v1534 = vadd.f32 %v1307, %v1533
        %1535 = vdwg.mxu0
        %v1536 = vxor.u32 %v1328, 2147483648
        %v1537 = vxor.u32 %v1441, 2147483648
        %v1538 = vxor.u32 %v1331, 2147483648
        %v1539 = vxor.u32 %v1444, 2147483648
        %v1540 = vxor.u32 %v1334, 2147483648
        %v1541 = vxor.u32 %v1447, 2147483648
        %v1542 = vxor.u32 %v1337, 2147483648
        %v1543 = vxor.u32 %v1450, 2147483648
        %v1544 = vxor.u32 %v1340, 2147483648
        %v1545 = vxor.u32 %v1453, 2147483648
        %v1546 = vxor.u32 %v1343, 2147483648
        %v1547 = vxor.u32 %v1456, 2147483648
        %v1548 = vxor.u32 %v1346, 2147483648
        %v1549 = vxor.u32 %v1459, 2147483648
        %v1550 = vxor.u32 %v1349, 2147483648
        %v1551 = vxor.u32 %v1462, 2147483648
        %v1552 = vxor.u32 %v1352, 2147483648
        %v1553 = vxor.u32 %v1465, 2147483648
        %v1554 = vxor.u32 %v1355, 2147483648
        %v1555 = vxor.u32 %v1468, 2147483648
        %v1556 = vxor.u32 %v1358, 2147483648
        %v1557 = vxor.u32 %v1471, 2147483648
        %v1558 = vxor.u32 %v1361, 2147483648
        %v1559 = vxor.u32 %v1474, 2147483648
        %v1560 = vxor.u32 %v1364, 2147483648
        %v1561 = vxor.u32 %v1477, 2147483648
        %v1562 = vxor.u32 %v1367, 2147483648
        %v1563 = vxor.u32 %v1480, 2147483648
        %v1564 = vxor.u32 %v1370, 2147483648
        %v1565 = vxor.u32 %v1483, 2147483648
        %v1566 = vxor.u32 %v1373, 2147483648
        %v1567 = vxor.u32 %v1486, 2147483648
        %v1568 = vxor.u32 %v1376, 2147483648
        %v1569 = vxor.u32 %v1489, 2147483648
        %v1570 = vxor.u32 %v1379, 2147483648
        %v1571 = vxor.u32 %v1492, 2147483648
        %v1572 = vxor.u32 %v1382, 2147483648
        %v1573 = vxor.u32 %v1495, 2147483648
        %v1574 = vxor.u32 %v1385, 2147483648
        %v1575 = vxor.u32 %v1498, 2147483648
        %v1576 = vxor.u32 %v1388, 2147483648
        %v1577 = vxor.u32 %v1501, 2147483648
        %v1578 = vxor.u32 %v1391, 2147483648
        %v1579 = vxor.u32 %v1504, 2147483648
        %v1580 = vxor.u32 %v1394, 2147483648
        %v1581 = vxor.u32 %v1507, 2147483648
        %v1582 = vxor.u32 %v1397, 2147483648
        %v1583 = vxor.u32 %v1510, 2147483648
        %v1584 = vxor.u32 %v1400, 2147483648
        %v1585 = vxor.u32 %v1513, 2147483648
        %v1586 = vxor.u32 %v1403, 2147483648
        %v1587 = vxor.u32 %v1516, 2147483648
        %v1588 = vxor.u32 %v1406, 2147483648
        %v1589 = vxor.u32 %v1519, 2147483648
        %v1590 = vxor.u32 %v1409, 2147483648
        %v1591 = vxor.u32 %v1522, 2147483648
        %v1592 = vxor.u32 %v1412, 2147483648
        %v1593 = vxor.u32 %v1525, 2147483648
        %v1594 = vxor.u32 %v1415, 2147483648
        %v1595 = vxor.u32 %v1528, 2147483648
        %v1596 = vxor.u32 %v1418, 2147483648
        %v1597 = vxor.u32 %v1531, 2147483648
        %v1598 = vxor.u32 %v1421, 2147483648
        %v1599 = vxor.u32 %v1534, 2147483648
        %v1600 = vmul.f32 %v1536, 1.442695
        %v1601 = vpow.pop %v1600
        %v1602 = vmul.f32 %v1537, 1.442695
        %v1603 = vpow.pop %v1602
        %v1604 = vmul.f32 %v1538, 1.442695
        %v1605 = vpow.pop %v1604
        %v1606 = vmul.f32 %v1539, 1.442695
        %v1607 = vpow.pop %v1606
        %v1608 = vmul.f32 %v1540, 1.442695
        %v1609 = vpow.pop %v1608
        %v1610 = vmul.f32 %v1541, 1.442695
        %v1611 = vpow.pop %v1610
        %v1612 = vmul.f32 %v1542, 1.442695
        %v1613 = vpow.pop %v1612
        %v1614 = vmul.f32 %v1543, 1.442695
        %v1615 = vpow.pop %v1614
        %v1616 = vmul.f32 %v1544, 1.442695
        %v1617 = vpow.pop %v1616
        %v1618 = vmul.f32 %v1545, 1.442695
        %v1619 = vpow.pop %v1618
        %v1620 = vmul.f32 %v1546, 1.442695
        %v1621 = vpow.pop %v1620
        %v1622 = vmul.f32 %v1547, 1.442695
        %v1623 = vpow.pop %v1622
        %v1624 = vmul.f32 %v1548, 1.442695
        %v1625 = vpow.pop %v1624
        %v1626 = vmul.f32 %v1549, 1.442695
        %v1627 = vpow.pop %v1626
        %v1628 = vmul.f32 %v1550, 1.442695
        %v1629 = vpow.pop %v1628
        %v1630 = vmul.f32 %v1551, 1.442695
        %v1631 = vpow.pop %v1630
        %v1632 = vmul.f32 %v1552, 1.442695
        %v1633 = vpow.pop %v1632
        %v1634 = vmul.f32 %v1553, 1.442695
        %v1635 = vpow.pop %v1634
        %v1636 = vmul.f32 %v1554, 1.442695
        %v1637 = vpow.pop %v1636
        %v1638 = vmul.f32 %v1555, 1.442695
        %v1639 = vpow.pop %v1638
        %v1640 = vmul.f32 %v1556, 1.442695
        %v1641 = vpow.pop %v1640
        %v1642 = vmul.f32 %v1557, 1.442695
        %v1643 = vpow.pop %v1642
        %v1644 = vmul.f32 %v1558, 1.442695
        %v1645 = vpow.pop %v1644
        %v1646 = vmul.f32 %v1559, 1.442695
        %v1647 = vpow.pop %v1646
        %v1648 = vmul.f32 %v1560, 1.442695
        %v1649 = vpow.pop %v1648
        %v1650 = vmul.f32 %v1561, 1.442695
        %v1651 = vpow.pop %v1650
        %v1652 = vmul.f32 %v1562, 1.442695
        %v1653 = vpow.pop %v1652
        %v1654 = vmul.f32 %v1563, 1.442695
        %v1655 = vpow.pop %v1654
        %v1656 = vmul.f32 %v1564, 1.442695
        %v1657 = vpow.pop %v1656
        %v1658 = vmul.f32 %v1565, 1.442695
        %v1659 = vpow.pop %v1658
        %v1660 = vmul.f32 %v1566, 1.442695
        %v1661 = vpow.pop %v1660
        %v1662 = vmul.f32 %v1567, 1.442695
        %v1663 = vpow.pop %v1662
        %v1664 = vmul.f32 %v1568, 1.442695
        %v1665 = vpow.pop %v1664
        %v1666 = vmul.f32 %v1569, 1.442695
        %v1667 = vpow.pop %v1666
        %v1668 = vmul.f32 %v1570, 1.442695
        %v1669 = vpow.pop %v1668
        %v1670 = vmul.f32 %v1571, 1.442695
        %v1671 = vpow.pop %v1670
        %v1672 = vmul.f32 %v1572, 1.442695
        %v1673 = vpow.pop %v1672
        %v1674 = vmul.f32 %v1573, 1.442695
        %v1675 = vpow.pop %v1674
        %v1676 = vmul.f32 %v1574, 1.442695
        %v1677 = vpow.pop %v1676
        %v1678 = vmul.f32 %v1575, 1.442695
        %v1679 = vpow.pop %v1678
        %v1680 = vmul.f32 %v1576, 1.442695
        %v1681 = vpow.pop %v1680
        %v1682 = vmul.f32 %v1577, 1.442695
        %v1683 = vpow.pop %v1682
        %v1684 = vmul.f32 %v1578, 1.442695
        %v1685 = vpow.pop %v1684
        %v1686 = vmul.f32 %v1579, 1.442695
        %v1687 = vpow.pop %v1686
        %v1688 = vmul.f32 %v1580, 1.442695
        %v1689 = vpow.pop %v1688
        %v1690 = vmul.f32 %v1581, 1.442695
        %v1691 = vpow.pop %v1690
        %v1692 = vmul.f32 %v1582, 1.442695
        %v1693 = vpow.pop %v1692
        %v1694 = vmul.f32 %v1583, 1.442695
        %v1695 = vpow.pop %v1694
        %v1696 = vmul.f32 %v1584, 1.442695
        %v1697 = vpow.pop %v1696
        %v1698 = vmul.f32 %v1585, 1.442695
        %v1699 = vpow.pop %v1698
        %v1700 = vmul.f32 %v1586, 1.442695
        %v1701 = vpow.pop %v1700
        %v1702 = vmul.f32 %v1587, 1.442695
        %v1703 = vpow.pop %v1702
        %v1704 = vmul.f32 %v1588, 1.442695
        %v1705 = vpow.pop %v1704
        %v1706 = vmul.f32 %v1589, 1.442695
        %v1707 = vpow.pop %v1706
        %v1708 = vmul.f32 %v1590, 1.442695
        %v1709 = vpow.pop %v1708
        %v1710 = vmul.f32 %v1591, 1.442695
        %v1711 = vpow.pop %v1710
        %v1712 = vmul.f32 %v1592, 1.442695
        %v1713 = vpow.pop %v1712
        %v1714 = vmul.f32 %v1593, 1.442695
        %v1715 = vpow.pop %v1714
        %v1716 = vmul.f32 %v1594, 1.442695
        %v1717 = vpow.pop %v1716
        %v1718 = vmul.f32 %v1595, 1.442695
        %v1719 = vpow.pop %v1718
        %v1720 = vmul.f32 %v1596, 1.442695
        %v1721 = vpow.pop %v1720
        %v1722 = vmul.f32 %v1597, 1.442695
        %v1723 = vpow.pop %v1722
        %v1724 = vmul.f32 %v1598, 1.442695
        %v1725 = vpow.pop %v1724
        %v1726 = vmul.f32 %v1599, 1.442695
        %v1727 = vpow.pop %v1726
        %v1728 = vadd.f32 %v1601, 1.0
        %v1729 = vadd.f32 %v1603, 1.0
        %v1730 = vadd.f32 %v1605, 1.0
        %v1731 = vadd.f32 %v1607, 1.0
        %v1732 = vadd.f32 %v1609, 1.0
        %v1733 = vadd.f32 %v1611, 1.0
        %v1734 = vadd.f32 %v1613, 1.0
        %v1735 = vadd.f32 %v1615, 1.0
        %v1736 = vadd.f32 %v1617, 1.0
        %v1737 = vadd.f32 %v1619, 1.0
        %v1738 = vadd.f32 %v1621, 1.0
        %v1739 = vadd.f32 %v1623, 1.0
        %v1740 = vadd.f32 %v1625, 1.0
        %v1741 = vadd.f32 %v1627, 1.0
        %v1742 = vadd.f32 %v1629, 1.0
        %v1743 = vadd.f32 %v1631, 1.0
        %v1744 = vadd.f32 %v1633, 1.0
        %v1745 = vadd.f32 %v1635, 1.0
        %v1746 = vadd.f32 %v1637, 1.0
        %v1747 = vadd.f32 %v1639, 1.0
        %v1748 = vadd.f32 %v1641, 1.0
        %v1749 = vadd.f32 %v1643, 1.0
        %v1750 = vadd.f32 %v1645, 1.0
        %v1751 = vadd.f32 %v1647, 1.0
        %v1752 = vadd.f32 %v1649, 1.0
        %v1753 = vadd.f32 %v1651, 1.0
        %v1754 = vadd.f32 %v1653, 1.0
        %v1755 = vadd.f32 %v1655, 1.0
        %v1756 = vadd.f32 %v1657, 1.0
        %v1757 = vadd.f32 %v1659, 1.0
        %v1758 = vadd.f32 %v1661, 1.0
        %v1759 = vadd.f32 %v1663, 1.0
        %v1760 = vadd.f32 %v1665, 1.0
        %v1761 = vadd.f32 %v1667, 1.0
        %v1762 = vadd.f32 %v1669, 1.0
        %v1763 = vadd.f32 %v1671, 1.0
        %v1764 = vadd.f32 %v1673, 1.0
        %v1765 = vadd.f32 %v1675, 1.0
        %v1766 = vadd.f32 %v1677, 1.0
        %v1767 = vadd.f32 %v1679, 1.0
        %v1768 = vadd.f32 %v1681, 1.0
        %v1769 = vadd.f32 %v1683, 1.0
        %v1770 = vadd.f32 %v1685, 1.0
        %v1771 = vadd.f32 %v1687, 1.0
        %v1772 = vadd.f32 %v1689, 1.0
        %v1773 = vadd.f32 %v1691, 1.0
        %v1774 = vadd.f32 %v1693, 1.0
        %v1775 = vadd.f32 %v1695, 1.0
        %v1776 = vadd.f32 %v1697, 1.0
        %v1777 = vadd.f32 %v1699, 1.0
        %v1778 = vadd.f32 %v1701, 1.0
        %v1779 = vadd.f32 %v1703, 1.0
        %v1780 = vadd.f32 %v1705, 1.0
        %v1781 = vadd.f32 %v1707, 1.0
        %v1782 = vadd.f32 %v1709, 1.0
        %v1783 = vadd.f32 %v1711, 1.0
        %v1784 = vadd.f32 %v1713, 1.0
        %v1785 = vadd.f32 %v1715, 1.0
        %v1786 = vadd.f32 %v1717, 1.0
        %v1787 = vadd.f32 %v1719, 1.0
        %v1788 = vadd.f32 %v1721, 1.0
        %v1789 = vadd.f32 %v1723, 1.0
        %v1790 = vadd.f32 %v1725, 1.0
        %v1791 = vadd.f32 %v1727, 1.0
        %v1792 = vrcp.pop %v1728
        %v1793 = vmul.f32 %v1728, %v1792
        %v1794 = vsub.f32 1.0, %v1793
        %v1795 = vmul.f32 %v1792, %v1794
        %v1796 = vadd.f32 %v1792, %v1795
        %vm1797 = vweird.f32 %v1728
        %vm1798 = vweird.f32 %v1792
        %vm1799 = vmor %vm1797, %vm1798
        %v1800 = vsel %vm1799, %v1792, %v1796
        %v1801 = vand.u32 2147483647, %v1728
        %vm1802 = vcmp.eq.f32.partialorder %v1801, 8.507059e+37
        %v1803 = vand.u32 %v1728, 2147483648
        %v1804 = vor.u32 1.1754944e-38, %v1803
        %v1805 = vsel %vm1802, %v1804, %v1800
        %v1806 = vmul.f32 1.0, %v1805
        %v1807 = vrcp.pop %v1729
        %v1808 = vmul.f32 %v1729, %v1807
        %v1809 = vsub.f32 1.0, %v1808
        %v1810 = vmul.f32 %v1807, %v1809
        %v1811 = vadd.f32 %v1807, %v1810
        %vm1812 = vweird.f32 %v1729
        %vm1813 = vweird.f32 %v1807
        %vm1814 = vmor %vm1812, %vm1813
        %v1815 = vsel %vm1814, %v1807, %v1811
        %v1816 = vand.u32 2147483647, %v1729
        %vm1817 = vcmp.eq.f32.partialorder %v1816, 8.507059e+37
        %v1818 = vand.u32 %v1729, 2147483648
        %v1819 = vor.u32 1.1754944e-38, %v1818
        %v1820 = vsel %vm1817, %v1819, %v1815
        %v1821 = vmul.f32 1.0, %v1820
        %v1822 = vrcp.pop %v1730
        %v1823 = vmul.f32 %v1730, %v1822
        %v1824 = vsub.f32 1.0, %v1823
        %v1825 = vmul.f32 %v1822, %v1824
        %v1826 = vadd.f32 %v1822, %v1825
        %vm1827 = vweird.f32 %v1730
        %vm1828 = vweird.f32 %v1822
        %vm1829 = vmor %vm1827, %vm1828
        %v1830 = vsel %vm1829, %v1822, %v1826
        %v1831 = vand.u32 2147483647, %v1730
        %vm1832 = vcmp.eq.f32.partialorder %v1831, 8.507059e+37
        %v1833 = vand.u32 %v1730, 2147483648
        %v1834 = vor.u32 1.1754944e-38, %v1833
        %v1835 = vsel %vm1832, %v1834, %v1830
        %v1836 = vmul.f32 1.0, %v1835
        %v1837 = vrcp.pop %v1731
        %v1838 = vmul.f32 %v1731, %v1837
        %v1839 = vsub.f32 1.0, %v1838
        %v1840 = vmul.f32 %v1837, %v1839
        %v1841 = vadd.f32 %v1837, %v1840
        %vm1842 = vweird.f32 %v1731
        %vm1843 = vweird.f32 %v1837
        %vm1844 = vmor %vm1842, %vm1843
        %v1845 = vsel %vm1844, %v1837, %v1841
        %v1846 = vand.u32 2147483647, %v1731
        %vm1847 = vcmp.eq.f32.partialorder %v1846, 8.507059e+37
        %v1848 = vand.u32 %v1731, 2147483648
        %v1849 = vor.u32 1.1754944e-38, %v1848
        %v1850 = vsel %vm1847, %v1849, %v1845
        %v1851 = vmul.f32 1.0, %v1850
        %v1852 = vrcp.pop %v1732
        %v1853 = vmul.f32 %v1732, %v1852
        %v1854 = vsub.f32 1.0, %v1853
        %v1855 = vmul.f32 %v1852, %v1854
        %v1856 = vadd.f32 %v1852, %v1855
        %vm1857 = vweird.f32 %v1732
        %vm1858 = vweird.f32 %v1852
        %vm1859 = vmor %vm1857, %vm1858
        %v1860 = vsel %vm1859, %v1852, %v1856
        %v1861 = vand.u32 2147483647, %v1732
        %vm1862 = vcmp.eq.f32.partialorder %v1861, 8.507059e+37
        %v1863 = vand.u32 %v1732, 2147483648
        %v1864 = vor.u32 1.1754944e-38, %v1863
        %v1865 = vsel %vm1862, %v1864, %v1860
        %v1866 = vmul.f32 1.0, %v1865
        %v1867 = vrcp.pop %v1733
        %v1868 = vmul.f32 %v1733, %v1867
        %v1869 = vsub.f32 1.0, %v1868
        %v1870 = vmul.f32 %v1867, %v1869
        %v1871 = vadd.f32 %v1867, %v1870
        %vm1872 = vweird.f32 %v1733
        %vm1873 = vweird.f32 %v1867
        %vm1874 = vmor %vm1872, %vm1873
        %v1875 = vsel %vm1874, %v1867, %v1871
        %v1876 = vand.u32 2147483647, %v1733
        %vm1877 = vcmp.eq.f32.partialorder %v1876, 8.507059e+37
        %v1878 = vand.u32 %v1733, 2147483648
        %v1879 = vor.u32 1.1754944e-38, %v1878
        %v1880 = vsel %vm1877, %v1879, %v1875
        %v1881 = vmul.f32 1.0, %v1880
        %v1882 = vrcp.pop %v1734
        %v1883 = vmul.f32 %v1734, %v1882
        %v1884 = vsub.f32 1.0, %v1883
        %v1885 = vmul.f32 %v1882, %v1884
        %v1886 = vadd.f32 %v1882, %v1885
        %vm1887 = vweird.f32 %v1734
        %vm1888 = vweird.f32 %v1882
        %vm1889 = vmor %vm1887, %vm1888
        %v1890 = vsel %vm1889, %v1882, %v1886
        %v1891 = vand.u32 2147483647, %v1734
        %vm1892 = vcmp.eq.f32.partialorder %v1891, 8.507059e+37
        %v1893 = vand.u32 %v1734, 2147483648
        %v1894 = vor.u32 1.1754944e-38, %v1893
        %v1895 = vsel %vm1892, %v1894, %v1890
        %v1896 = vmul.f32 1.0, %v1895
        %v1897 = vrcp.pop %v1735
        %v1898 = vmul.f32 %v1735, %v1897
        %v1899 = vsub.f32 1.0, %v1898
        %v1900 = vmul.f32 %v1897, %v1899
        %v1901 = vadd.f32 %v1897, %v1900
        %vm1902 = vweird.f32 %v1735
        %vm1903 = vweird.f32 %v1897
        %vm1904 = vmor %vm1902, %vm1903
        %v1905 = vsel %vm1904, %v1897, %v1901
        %v1906 = vand.u32 2147483647, %v1735
        %vm1907 = vcmp.eq.f32.partialorder %v1906, 8.507059e+37
        %v1908 = vand.u32 %v1735, 2147483648
        %v1909 = vor.u32 1.1754944e-38, %v1908
        %v1910 = vsel %vm1907, %v1909, %v1905
        %v1911 = vmul.f32 1.0, %v1910
        %v1912 = vrcp.pop %v1736
        %v1913 = vmul.f32 %v1736, %v1912
        %v1914 = vsub.f32 1.0, %v1913
        %v1915 = vmul.f32 %v1912, %v1914
        %v1916 = vadd.f32 %v1912, %v1915
        %vm1917 = vweird.f32 %v1736
        %vm1918 = vweird.f32 %v1912
        %vm1919 = vmor %vm1917, %vm1918
        %v1920 = vsel %vm1919, %v1912, %v1916
        %v1921 = vand.u32 2147483647, %v1736
        %vm1922 = vcmp.eq.f32.partialorder %v1921, 8.507059e+37
        %v1923 = vand.u32 %v1736, 2147483648
        %v1924 = vor.u32 1.1754944e-38, %v1923
        %v1925 = vsel %vm1922, %v1924, %v1920
        %v1926 = vmul.f32 1.0, %v1925
        %v1927 = vrcp.pop %v1737
        %v1928 = vmul.f32 %v1737, %v1927
        %v1929 = vsub.f32 1.0, %v1928
        %v1930 = vmul.f32 %v1927, %v1929
        %v1931 = vadd.f32 %v1927, %v1930
        %vm1932 = vweird.f32 %v1737
        %vm1933 = vweird.f32 %v1927
        %vm1934 = vmor %vm1932, %vm1933
        %v1935 = vsel %vm1934, %v1927, %v1931
        %v1936 = vand.u32 2147483647, %v1737
        %vm1937 = vcmp.eq.f32.partialorder %v1936, 8.507059e+37
        %v1938 = vand.u32 %v1737, 2147483648
        %v1939 = vor.u32 1.1754944e-38, %v1938
        %v1940 = vsel %vm1937, %v1939, %v1935
        %v1941 = vmul.f32 1.0, %v1940
        %v1942 = vrcp.pop %v1738
        %v1943 = vmul.f32 %v1738, %v1942
        %v1944 = vsub.f32 1.0, %v1943
        %v1945 = vmul.f32 %v1942, %v1944
        %v1946 = vadd.f32 %v1942, %v1945
        %vm1947 = vweird.f32 %v1738
        %vm1948 = vweird.f32 %v1942
        %vm1949 = vmor %vm1947, %vm1948
        %v1950 = vsel %vm1949, %v1942, %v1946
        %v1951 = vand.u32 2147483647, %v1738
        %vm1952 = vcmp.eq.f32.partialorder %v1951, 8.507059e+37
        %v1953 = vand.u32 %v1738, 2147483648
        %v1954 = vor.u32 1.1754944e-38, %v1953
        %v1955 = vsel %vm1952, %v1954, %v1950
        %v1956 = vmul.f32 1.0, %v1955
        %v1957 = vrcp.pop %v1739
        %v1958 = vmul.f32 %v1739, %v1957
        %v1959 = vsub.f32 1.0, %v1958
        %v1960 = vmul.f32 %v1957, %v1959
        %v1961 = vadd.f32 %v1957, %v1960
        %vm1962 = vweird.f32 %v1739
        %vm1963 = vweird.f32 %v1957
        %vm1964 = vmor %vm1962, %vm1963
        %v1965 = vsel %vm1964, %v1957, %v1961
        %v1966 = vand.u32 2147483647, %v1739
        %vm1967 = vcmp.eq.f32.partialorder %v1966, 8.507059e+37
        %v1968 = vand.u32 %v1739, 2147483648
        %v1969 = vor.u32 1.1754944e-38, %v1968
        %v1970 = vsel %vm1967, %v1969, %v1965
        %v1971 = vmul.f32 1.0, %v1970
        %v1972 = vrcp.pop %v1740
        %v1973 = vmul.f32 %v1740, %v1972
        %v1974 = vsub.f32 1.0, %v1973
        %v1975 = vmul.f32 %v1972, %v1974
        %v1976 = vadd.f32 %v1972, %v1975
        %vm1977 = vweird.f32 %v1740
        %vm1978 = vweird.f32 %v1972
        %vm1979 = vmor %vm1977, %vm1978
        %v1980 = vsel %vm1979, %v1972, %v1976
        %v1981 = vand.u32 2147483647, %v1740
        %vm1982 = vcmp.eq.f32.partialorder %v1981, 8.507059e+37
        %v1983 = vand.u32 %v1740, 2147483648
        %v1984 = vor.u32 1.1754944e-38, %v1983
        %v1985 = vsel %vm1982, %v1984, %v1980
        %v1986 = vmul.f32 1.0, %v1985
        %v1987 = vrcp.pop %v1741
        %v1988 = vmul.f32 %v1741, %v1987
        %v1989 = vsub.f32 1.0, %v1988
        %v1990 = vmul.f32 %v1987, %v1989
        %v1991 = vadd.f32 %v1987, %v1990
        %vm1992 = vweird.f32 %v1741
        %vm1993 = vweird.f32 %v1987
        %vm1994 = vmor %vm1992, %vm1993
        %v1995 = vsel %vm1994, %v1987, %v1991
        %v1996 = vand.u32 2147483647, %v1741
        %vm1997 = vcmp.eq.f32.partialorder %v1996, 8.507059e+37
        %v1998 = vand.u32 %v1741, 2147483648
        %v1999 = vor.u32 1.1754944e-38, %v1998
        %v2000 = vsel %vm1997, %v1999, %v1995
        %v2001 = vmul.f32 1.0, %v2000
        %v2002 = vrcp.pop %v1742
        %v2003 = vmul.f32 %v1742, %v2002
        %v2004 = vsub.f32 1.0, %v2003
        %v2005 = vmul.f32 %v2002, %v2004
        %v2006 = vadd.f32 %v2002, %v2005
        %vm2007 = vweird.f32 %v1742
        %vm2008 = vweird.f32 %v2002
        %vm2009 = vmor %vm2007, %vm2008
        %v2010 = vsel %vm2009, %v2002, %v2006
        %v2011 = vand.u32 2147483647, %v1742
        %vm2012 = vcmp.eq.f32.partialorder %v2011, 8.507059e+37
        %v2013 = vand.u32 %v1742, 2147483648
        %v2014 = vor.u32 1.1754944e-38, %v2013
        %v2015 = vsel %vm2012, %v2014, %v2010
        %v2016 = vmul.f32 1.0, %v2015
        %v2017 = vrcp.pop %v1743
        %v2018 = vmul.f32 %v1743, %v2017
        %v2019 = vsub.f32 1.0, %v2018
        %v2020 = vmul.f32 %v2017, %v2019
        %v2021 = vadd.f32 %v2017, %v2020
        %vm2022 = vweird.f32 %v1743
        %vm2023 = vweird.f32 %v2017
        %vm2024 = vmor %vm2022, %vm2023
        %v2025 = vsel %vm2024, %v2017, %v2021
        %v2026 = vand.u32 2147483647, %v1743
        %vm2027 = vcmp.eq.f32.partialorder %v2026, 8.507059e+37
        %v2028 = vand.u32 %v1743, 2147483648
        %v2029 = vor.u32 1.1754944e-38, %v2028
        %v2030 = vsel %vm2027, %v2029, %v2025
        %v2031 = vmul.f32 1.0, %v2030
        %v2032 = vrcp.pop %v1744
        %v2033 = vmul.f32 %v1744, %v2032
        %v2034 = vsub.f32 1.0, %v2033
        %v2035 = vmul.f32 %v2032, %v2034
        %v2036 = vadd.f32 %v2032, %v2035
        %vm2037 = vweird.f32 %v1744
        %vm2038 = vweird.f32 %v2032
        %vm2039 = vmor %vm2037, %vm2038
        %v2040 = vsel %vm2039, %v2032, %v2036
        %v2041 = vand.u32 2147483647, %v1744
        %vm2042 = vcmp.eq.f32.partialorder %v2041, 8.507059e+37
        %v2043 = vand.u32 %v1744, 2147483648
        %v2044 = vor.u32 1.1754944e-38, %v2043
        %v2045 = vsel %vm2042, %v2044, %v2040
        %v2046 = vmul.f32 1.0, %v2045
        %v2047 = vrcp.pop %v1745
        %v2048 = vmul.f32 %v1745, %v2047
        %v2049 = vsub.f32 1.0, %v2048
        %v2050 = vmul.f32 %v2047, %v2049
        %v2051 = vadd.f32 %v2047, %v2050
        %vm2052 = vweird.f32 %v1745
        %vm2053 = vweird.f32 %v2047
        %vm2054 = vmor %vm2052, %vm2053
        %v2055 = vsel %vm2054, %v2047, %v2051
        %v2056 = vand.u32 2147483647, %v1745
        %vm2057 = vcmp.eq.f32.partialorder %v2056, 8.507059e+37
        %v2058 = vand.u32 %v1745, 2147483648
        %v2059 = vor.u32 1.1754944e-38, %v2058
        %v2060 = vsel %vm2057, %v2059, %v2055
        %v2061 = vmul.f32 1.0, %v2060
        %v2062 = vrcp.pop %v1746
        %v2063 = vmul.f32 %v1746, %v2062
        %v2064 = vsub.f32 1.0, %v2063
        %v2065 = vmul.f32 %v2062, %v2064
        %v2066 = vadd.f32 %v2062, %v2065
        %vm2067 = vweird.f32 %v1746
        %vm2068 = vweird.f32 %v2062
        %vm2069 = vmor %vm2067, %vm2068
        %v2070 = vsel %vm2069, %v2062, %v2066
        %v2071 = vand.u32 2147483647, %v1746
        %vm2072 = vcmp.eq.f32.partialorder %v2071, 8.507059e+37
        %v2073 = vand.u32 %v1746, 2147483648
        %v2074 = vor.u32 1.1754944e-38, %v2073
        %v2075 = vsel %vm2072, %v2074, %v2070
        %v2076 = vmul.f32 1.0, %v2075
        %v2077 = vrcp.pop %v1747
        %v2078 = vmul.f32 %v1747, %v2077
        %v2079 = vsub.f32 1.0, %v2078
        %v2080 = vmul.f32 %v2077, %v2079
        %v2081 = vadd.f32 %v2077, %v2080
        %vm2082 = vweird.f32 %v1747
        %vm2083 = vweird.f32 %v2077
        %vm2084 = vmor %vm2082, %vm2083
        %v2085 = vsel %vm2084, %v2077, %v2081
        %v2086 = vand.u32 2147483647, %v1747
        %vm2087 = vcmp.eq.f32.partialorder %v2086, 8.507059e+37
        %v2088 = vand.u32 %v1747, 2147483648
        %v2089 = vor.u32 1.1754944e-38, %v2088
        %v2090 = vsel %vm2087, %v2089, %v2085
        %v2091 = vmul.f32 1.0, %v2090
        %v2092 = vrcp.pop %v1748
        %v2093 = vmul.f32 %v1748, %v2092
        %v2094 = vsub.f32 1.0, %v2093
        %v2095 = vmul.f32 %v2092, %v2094
        %v2096 = vadd.f32 %v2092, %v2095
        %vm2097 = vweird.f32 %v1748
        %vm2098 = vweird.f32 %v2092
        %vm2099 = vmor %vm2097, %vm2098
        %v2100 = vsel %vm2099, %v2092, %v2096
        %v2101 = vand.u32 2147483647, %v1748
        %vm2102 = vcmp.eq.f32.partialorder %v2101, 8.507059e+37
        %v2103 = vand.u32 %v1748, 2147483648
        %v2104 = vor.u32 1.1754944e-38, %v2103
        %v2105 = vsel %vm2102, %v2104, %v2100
        %v2106 = vmul.f32 1.0, %v2105
        %v2107 = vrcp.pop %v1749
        %v2108 = vmul.f32 %v1749, %v2107
        %v2109 = vsub.f32 1.0, %v2108
        %v2110 = vmul.f32 %v2107, %v2109
        %v2111 = vadd.f32 %v2107, %v2110
        %vm2112 = vweird.f32 %v1749
        %vm2113 = vweird.f32 %v2107
        %vm2114 = vmor %vm2112, %vm2113
        %v2115 = vsel %vm2114, %v2107, %v2111
        %v2116 = vand.u32 2147483647, %v1749
        %vm2117 = vcmp.eq.f32.partialorder %v2116, 8.507059e+37
        %v2118 = vand.u32 %v1749, 2147483648
        %v2119 = vor.u32 1.1754944e-38, %v2118
        %v2120 = vsel %vm2117, %v2119, %v2115
        %v2121 = vmul.f32 1.0, %v2120
        %v2122 = vrcp.pop %v1750
        %v2123 = vmul.f32 %v1750, %v2122
        %v2124 = vsub.f32 1.0, %v2123
        %v2125 = vmul.f32 %v2122, %v2124
        %v2126 = vadd.f32 %v2122, %v2125
        %vm2127 = vweird.f32 %v1750
        %vm2128 = vweird.f32 %v2122
        %vm2129 = vmor %vm2127, %vm2128
        %v2130 = vsel %vm2129, %v2122, %v2126
        %v2131 = vand.u32 2147483647, %v1750
        %vm2132 = vcmp.eq.f32.partialorder %v2131, 8.507059e+37
        %v2133 = vand.u32 %v1750, 2147483648
        %v2134 = vor.u32 1.1754944e-38, %v2133
        %v2135 = vsel %vm2132, %v2134, %v2130
        %v2136 = vmul.f32 1.0, %v2135
        %v2137 = vrcp.pop %v1751
        %v2138 = vmul.f32 %v1751, %v2137
        %v2139 = vsub.f32 1.0, %v2138
        %v2140 = vmul.f32 %v2137, %v2139
        %v2141 = vadd.f32 %v2137, %v2140
        %vm2142 = vweird.f32 %v1751
        %vm2143 = vweird.f32 %v2137
        %vm2144 = vmor %vm2142, %vm2143
        %v2145 = vsel %vm2144, %v2137, %v2141
        %v2146 = vand.u32 2147483647, %v1751
        %vm2147 = vcmp.eq.f32.partialorder %v2146, 8.507059e+37
        %v2148 = vand.u32 %v1751, 2147483648
        %v2149 = vor.u32 1.1754944e-38, %v2148
        %v2150 = vsel %vm2147, %v2149, %v2145
        %v2151 = vmul.f32 1.0, %v2150
        %v2152 = vrcp.pop %v1752
        %v2153 = vmul.f32 %v1752, %v2152
        %v2154 = vsub.f32 1.0, %v2153
        %v2155 = vmul.f32 %v2152, %v2154
        %v2156 = vadd.f32 %v2152, %v2155
        %vm2157 = vweird.f32 %v1752
        %vm2158 = vweird.f32 %v2152
        %vm2159 = vmor %vm2157, %vm2158
        %v2160 = vsel %vm2159, %v2152, %v2156
        %v2161 = vand.u32 2147483647, %v1752
        %vm2162 = vcmp.eq.f32.partialorder %v2161, 8.507059e+37
        %v2163 = vand.u32 %v1752, 2147483648
        %v2164 = vor.u32 1.1754944e-38, %v2163
        %v2165 = vsel %vm2162, %v2164, %v2160
        %v2166 = vmul.f32 1.0, %v2165
        %v2167 = vrcp.pop %v1753
        %v2168 = vmul.f32 %v1753, %v2167
        %v2169 = vsub.f32 1.0, %v2168
        %v2170 = vmul.f32 %v2167, %v2169
        %v2171 = vadd.f32 %v2167, %v2170
        %vm2172 = vweird.f32 %v1753
        %vm2173 = vweird.f32 %v2167
        %vm2174 = vmor %vm2172, %vm2173
        %v2175 = vsel %vm2174, %v2167, %v2171
        %v2176 = vand.u32 2147483647, %v1753
        %vm2177 = vcmp.eq.f32.partialorder %v2176, 8.507059e+37
        %v2178 = vand.u32 %v1753, 2147483648
        %v2179 = vor.u32 1.1754944e-38, %v2178
        %v2180 = vsel %vm2177, %v2179, %v2175
        %v2181 = vmul.f32 1.0, %v2180
        %v2182 = vrcp.pop %v1754
        %v2183 = vmul.f32 %v1754, %v2182
        %v2184 = vsub.f32 1.0, %v2183
        %v2185 = vmul.f32 %v2182, %v2184
        %v2186 = vadd.f32 %v2182, %v2185
        %vm2187 = vweird.f32 %v1754
        %vm2188 = vweird.f32 %v2182
        %vm2189 = vmor %vm2187, %vm2188
        %v2190 = vsel %vm2189, %v2182, %v2186
        %v2191 = vand.u32 2147483647, %v1754
        %vm2192 = vcmp.eq.f32.partialorder %v2191, 8.507059e+37
        %v2193 = vand.u32 %v1754, 2147483648
        %v2194 = vor.u32 1.1754944e-38, %v2193
        %v2195 = vsel %vm2192, %v2194, %v2190
        %v2196 = vmul.f32 1.0, %v2195
        %v2197 = vrcp.pop %v1755
        %v2198 = vmul.f32 %v1755, %v2197
        %v2199 = vsub.f32 1.0, %v2198
        %v2200 = vmul.f32 %v2197, %v2199
        %v2201 = vadd.f32 %v2197, %v2200
        %vm2202 = vweird.f32 %v1755
        %vm2203 = vweird.f32 %v2197
        %vm2204 = vmor %vm2202, %vm2203
        %v2205 = vsel %vm2204, %v2197, %v2201
        %v2206 = vand.u32 2147483647, %v1755
        %vm2207 = vcmp.eq.f32.partialorder %v2206, 8.507059e+37
        %v2208 = vand.u32 %v1755, 2147483648
        %v2209 = vor.u32 1.1754944e-38, %v2208
        %v2210 = vsel %vm2207, %v2209, %v2205
        %v2211 = vmul.f32 1.0, %v2210
        %v2212 = vrcp.pop %v1756
        %v2213 = vmul.f32 %v1756, %v2212
        %v2214 = vsub.f32 1.0, %v2213
        %v2215 = vmul.f32 %v2212, %v2214
        %v2216 = vadd.f32 %v2212, %v2215
        %vm2217 = vweird.f32 %v1756
        %vm2218 = vweird.f32 %v2212
        %vm2219 = vmor %vm2217, %vm2218
        %v2220 = vsel %vm2219, %v2212, %v2216
        %v2221 = vand.u32 2147483647, %v1756
        %vm2222 = vcmp.eq.f32.partialorder %v2221, 8.507059e+37
        %v2223 = vand.u32 %v1756, 2147483648
        %v2224 = vor.u32 1.1754944e-38, %v2223
        %v2225 = vsel %vm2222, %v2224, %v2220
        %v2226 = vmul.f32 1.0, %v2225
        %v2227 = vrcp.pop %v1757
        %v2228 = vmul.f32 %v1757, %v2227
        %v2229 = vsub.f32 1.0, %v2228
        %v2230 = vmul.f32 %v2227, %v2229
        %v2231 = vadd.f32 %v2227, %v2230
        %vm2232 = vweird.f32 %v1757
        %vm2233 = vweird.f32 %v2227
        %vm2234 = vmor %vm2232, %vm2233
        %v2235 = vsel %vm2234, %v2227, %v2231
        %v2236 = vand.u32 2147483647, %v1757
        %vm2237 = vcmp.eq.f32.partialorder %v2236, 8.507059e+37
        %v2238 = vand.u32 %v1757, 2147483648
        %v2239 = vor.u32 1.1754944e-38, %v2238
        %v2240 = vsel %vm2237, %v2239, %v2235
        %v2241 = vmul.f32 1.0, %v2240
        %v2242 = vrcp.pop %v1758
        %v2243 = vmul.f32 %v1758, %v2242
        %v2244 = vsub.f32 1.0, %v2243
        %v2245 = vmul.f32 %v2242, %v2244
        %v2246 = vadd.f32 %v2242, %v2245
        %vm2247 = vweird.f32 %v1758
        %vm2248 = vweird.f32 %v2242
        %vm2249 = vmor %vm2247, %vm2248
        %v2250 = vsel %vm2249, %v2242, %v2246
        %v2251 = vand.u32 2147483647, %v1758
        %vm2252 = vcmp.eq.f32.partialorder %v2251, 8.507059e+37
        %v2253 = vand.u32 %v1758, 2147483648
        %v2254 = vor.u32 1.1754944e-38, %v2253
        %v2255 = vsel %vm2252, %v2254, %v2250
        %v2256 = vmul.f32 1.0, %v2255
        %v2257 = vrcp.pop %v1759
        %v2258 = vmul.f32 %v1759, %v2257
        %v2259 = vsub.f32 1.0, %v2258
        %v2260 = vmul.f32 %v2257, %v2259
        %v2261 = vadd.f32 %v2257, %v2260
        %vm2262 = vweird.f32 %v1759
        %vm2263 = vweird.f32 %v2257
        %vm2264 = vmor %vm2262, %vm2263
        %v2265 = vsel %vm2264, %v2257, %v2261
        %v2266 = vand.u32 2147483647, %v1759
        %vm2267 = vcmp.eq.f32.partialorder %v2266, 8.507059e+37
        %v2268 = vand.u32 %v1759, 2147483648
        %v2269 = vor.u32 1.1754944e-38, %v2268
        %v2270 = vsel %vm2267, %v2269, %v2265
        %v2271 = vmul.f32 1.0, %v2270
        %v2272 = vrcp.pop %v1760
        %v2273 = vmul.f32 %v1760, %v2272
        %v2274 = vsub.f32 1.0, %v2273
        %v2275 = vmul.f32 %v2272, %v2274
        %v2276 = vadd.f32 %v2272, %v2275
        %vm2277 = vweird.f32 %v1760
        %vm2278 = vweird.f32 %v2272
        %vm2279 = vmor %vm2277, %vm2278
        %v2280 = vsel %vm2279, %v2272, %v2276
        %v2281 = vand.u32 2147483647, %v1760
        %vm2282 = vcmp.eq.f32.partialorder %v2281, 8.507059e+37
        %v2283 = vand.u32 %v1760, 2147483648
        %v2284 = vor.u32 1.1754944e-38, %v2283
        %v2285 = vsel %vm2282, %v2284, %v2280
        %v2286 = vmul.f32 1.0, %v2285
        %v2287 = vrcp.pop %v1761
        %v2288 = vmul.f32 %v1761, %v2287
        %v2289 = vsub.f32 1.0, %v2288
        %v2290 = vmul.f32 %v2287, %v2289
        %v2291 = vadd.f32 %v2287, %v2290
        %vm2292 = vweird.f32 %v1761
        %vm2293 = vweird.f32 %v2287
        %vm2294 = vmor %vm2292, %vm2293
        %v2295 = vsel %vm2294, %v2287, %v2291
        %v2296 = vand.u32 2147483647, %v1761
        %vm2297 = vcmp.eq.f32.partialorder %v2296, 8.507059e+37
        %v2298 = vand.u32 %v1761, 2147483648
        %v2299 = vor.u32 1.1754944e-38, %v2298
        %v2300 = vsel %vm2297, %v2299, %v2295
        %v2301 = vmul.f32 1.0, %v2300
        %v2302 = vrcp.pop %v1762
        %v2303 = vmul.f32 %v1762, %v2302
        %v2304 = vsub.f32 1.0, %v2303
        %v2305 = vmul.f32 %v2302, %v2304
        %v2306 = vadd.f32 %v2302, %v2305
        %vm2307 = vweird.f32 %v1762
        %vm2308 = vweird.f32 %v2302
        %vm2309 = vmor %vm2307, %vm2308
        %v2310 = vsel %vm2309, %v2302, %v2306
        %v2311 = vand.u32 2147483647, %v1762
        %vm2312 = vcmp.eq.f32.partialorder %v2311, 8.507059e+37
        %v2313 = vand.u32 %v1762, 2147483648
        %v2314 = vor.u32 1.1754944e-38, %v2313
        %v2315 = vsel %vm2312, %v2314, %v2310
        %v2316 = vmul.f32 1.0, %v2315
        %v2317 = vrcp.pop %v1763
        %v2318 = vmul.f32 %v1763, %v2317
        %v2319 = vsub.f32 1.0, %v2318
        %v2320 = vmul.f32 %v2317, %v2319
        %v2321 = vadd.f32 %v2317, %v2320
        %vm2322 = vweird.f32 %v1763
        %vm2323 = vweird.f32 %v2317
        %vm2324 = vmor %vm2322, %vm2323
        %v2325 = vsel %vm2324, %v2317, %v2321
        %v2326 = vand.u32 2147483647, %v1763
        %vm2327 = vcmp.eq.f32.partialorder %v2326, 8.507059e+37
        %v2328 = vand.u32 %v1763, 2147483648
        %v2329 = vor.u32 1.1754944e-38, %v2328
        %v2330 = vsel %vm2327, %v2329, %v2325
        %v2331 = vmul.f32 1.0, %v2330
        %v2332 = vrcp.pop %v1764
        %v2333 = vmul.f32 %v1764, %v2332
        %v2334 = vsub.f32 1.0, %v2333
        %v2335 = vmul.f32 %v2332, %v2334
        %v2336 = vadd.f32 %v2332, %v2335
        %vm2337 = vweird.f32 %v1764
        %vm2338 = vweird.f32 %v2332
        %vm2339 = vmor %vm2337, %vm2338
        %v2340 = vsel %vm2339, %v2332, %v2336
        %v2341 = vand.u32 2147483647, %v1764
        %vm2342 = vcmp.eq.f32.partialorder %v2341, 8.507059e+37
        %v2343 = vand.u32 %v1764, 2147483648
        %v2344 = vor.u32 1.1754944e-38, %v2343
        %v2345 = vsel %vm2342, %v2344, %v2340
        %v2346 = vmul.f32 1.0, %v2345
        %v2347 = vrcp.pop %v1765
        %v2348 = vmul.f32 %v1765, %v2347
        %v2349 = vsub.f32 1.0, %v2348
        %v2350 = vmul.f32 %v2347, %v2349
        %v2351 = vadd.f32 %v2347, %v2350
        %vm2352 = vweird.f32 %v1765
        %vm2353 = vweird.f32 %v2347
        %vm2354 = vmor %vm2352, %vm2353
        %v2355 = vsel %vm2354, %v2347, %v2351
        %v2356 = vand.u32 2147483647, %v1765
        %vm2357 = vcmp.eq.f32.partialorder %v2356, 8.507059e+37
        %v2358 = vand.u32 %v1765, 2147483648
        %v2359 = vor.u32 1.1754944e-38, %v2358
        %v2360 = vsel %vm2357, %v2359, %v2355
        %v2361 = vmul.f32 1.0, %v2360
        %v2362 = vrcp.pop %v1766
        %v2363 = vmul.f32 %v1766, %v2362
        %v2364 = vsub.f32 1.0, %v2363
        %v2365 = vmul.f32 %v2362, %v2364
        %v2366 = vadd.f32 %v2362, %v2365
        %vm2367 = vweird.f32 %v1766
        %vm2368 = vweird.f32 %v2362
        %vm2369 = vmor %vm2367, %vm2368
        %v2370 = vsel %vm2369, %v2362, %v2366
        %v2371 = vand.u32 2147483647, %v1766
        %vm2372 = vcmp.eq.f32.partialorder %v2371, 8.507059e+37
        %v2373 = vand.u32 %v1766, 2147483648
        %v2374 = vor.u32 1.1754944e-38, %v2373
        %v2375 = vsel %vm2372, %v2374, %v2370
        %v2376 = vmul.f32 1.0, %v2375
        %v2377 = vrcp.pop %v1767
        %v2378 = vmul.f32 %v1767, %v2377
        %v2379 = vsub.f32 1.0, %v2378
        %v2380 = vmul.f32 %v2377, %v2379
        %v2381 = vadd.f32 %v2377, %v2380
        %vm2382 = vweird.f32 %v1767
        %vm2383 = vweird.f32 %v2377
        %vm2384 = vmor %vm2382, %vm2383
        %v2385 = vsel %vm2384, %v2377, %v2381
        %v2386 = vand.u32 2147483647, %v1767
        %vm2387 = vcmp.eq.f32.partialorder %v2386, 8.507059e+37
        %v2388 = vand.u32 %v1767, 2147483648
        %v2389 = vor.u32 1.1754944e-38, %v2388
        %v2390 = vsel %vm2387, %v2389, %v2385
        %v2391 = vmul.f32 1.0, %v2390
        %v2392 = vrcp.pop %v1768
        %v2393 = vmul.f32 %v1768, %v2392
        %v2394 = vsub.f32 1.0, %v2393
        %v2395 = vmul.f32 %v2392, %v2394
        %v2396 = vadd.f32 %v2392, %v2395
        %vm2397 = vweird.f32 %v1768
        %vm2398 = vweird.f32 %v2392
        %vm2399 = vmor %vm2397, %vm2398
        %v2400 = vsel %vm2399, %v2392, %v2396
        %v2401 = vand.u32 2147483647, %v1768
        %vm2402 = vcmp.eq.f32.partialorder %v2401, 8.507059e+37
        %v2403 = vand.u32 %v1768, 2147483648
        %v2404 = vor.u32 1.1754944e-38, %v2403
        %v2405 = vsel %vm2402, %v2404, %v2400
        %v2406 = vmul.f32 1.0, %v2405
        %v2407 = vrcp.pop %v1769
        %v2408 = vmul.f32 %v1769, %v2407
        %v2409 = vsub.f32 1.0, %v2408
        %v2410 = vmul.f32 %v2407, %v2409
        %v2411 = vadd.f32 %v2407, %v2410
        %vm2412 = vweird.f32 %v1769
        %vm2413 = vweird.f32 %v2407
        %vm2414 = vmor %vm2412, %vm2413
        %v2415 = vsel %vm2414, %v2407, %v2411
        %v2416 = vand.u32 2147483647, %v1769
        %vm2417 = vcmp.eq.f32.partialorder %v2416, 8.507059e+37
        %v2418 = vand.u32 %v1769, 2147483648
        %v2419 = vor.u32 1.1754944e-38, %v2418
        %v2420 = vsel %vm2417, %v2419, %v2415
        %v2421 = vmul.f32 1.0, %v2420
        %v2422 = vrcp.pop %v1770
        %v2423 = vmul.f32 %v1770, %v2422
        %v2424 = vsub.f32 1.0, %v2423
        %v2425 = vmul.f32 %v2422, %v2424
        %v2426 = vadd.f32 %v2422, %v2425
        %vm2427 = vweird.f32 %v1770
        %vm2428 = vweird.f32 %v2422
        %vm2429 = vmor %vm2427, %vm2428
        %v2430 = vsel %vm2429, %v2422, %v2426
        %v2431 = vand.u32 2147483647, %v1770
        %vm2432 = vcmp.eq.f32.partialorder %v2431, 8.507059e+37
        %v2433 = vand.u32 %v1770, 2147483648
        %v2434 = vor.u32 1.1754944e-38, %v2433
        %v2435 = vsel %vm2432, %v2434, %v2430
        %v2436 = vmul.f32 1.0, %v2435
        %v2437 = vrcp.pop %v1771
        %v2438 = vmul.f32 %v1771, %v2437
        %v2439 = vsub.f32 1.0, %v2438
        %v2440 = vmul.f32 %v2437, %v2439
        %v2441 = vadd.f32 %v2437, %v2440
        %vm2442 = vweird.f32 %v1771
        %vm2443 = vweird.f32 %v2437
        %vm2444 = vmor %vm2442, %vm2443
        %v2445 = vsel %vm2444, %v2437, %v2441
        %v2446 = vand.u32 2147483647, %v1771
        %vm2447 = vcmp.eq.f32.partialorder %v2446, 8.507059e+37
        %v2448 = vand.u32 %v1771, 2147483648
        %v2449 = vor.u32 1.1754944e-38, %v2448
        %v2450 = vsel %vm2447, %v2449, %v2445
        %v2451 = vmul.f32 1.0, %v2450
        %v2452 = vrcp.pop %v1772
        %v2453 = vmul.f32 %v1772, %v2452
        %v2454 = vsub.f32 1.0, %v2453
        %v2455 = vmul.f32 %v2452, %v2454
        %v2456 = vadd.f32 %v2452, %v2455
        %vm2457 = vweird.f32 %v1772
        %vm2458 = vweird.f32 %v2452
        %vm2459 = vmor %vm2457, %vm2458
        %v2460 = vsel %vm2459, %v2452, %v2456
        %v2461 = vand.u32 2147483647, %v1772
        %vm2462 = vcmp.eq.f32.partialorder %v2461, 8.507059e+37
        %v2463 = vand.u32 %v1772, 2147483648
        %v2464 = vor.u32 1.1754944e-38, %v2463
        %v2465 = vsel %vm2462, %v2464, %v2460
        %v2466 = vmul.f32 1.0, %v2465
        %v2467 = vrcp.pop %v1773
        %v2468 = vmul.f32 %v1773, %v2467
        %v2469 = vsub.f32 1.0, %v2468
        %v2470 = vmul.f32 %v2467, %v2469
        %v2471 = vadd.f32 %v2467, %v2470
        %vm2472 = vweird.f32 %v1773
        %vm2473 = vweird.f32 %v2467
        %vm2474 = vmor %vm2472, %vm2473
        %v2475 = vsel %vm2474, %v2467, %v2471
        %v2476 = vand.u32 2147483647, %v1773
        %vm2477 = vcmp.eq.f32.partialorder %v2476, 8.507059e+37
        %v2478 = vand.u32 %v1773, 2147483648
        %v2479 = vor.u32 1.1754944e-38, %v2478
        %v2480 = vsel %vm2477, %v2479, %v2475
        %v2481 = vmul.f32 1.0, %v2480
        %v2482 = vrcp.pop %v1774
        %v2483 = vmul.f32 %v1774, %v2482
        %v2484 = vsub.f32 1.0, %v2483
        %v2485 = vmul.f32 %v2482, %v2484
        %v2486 = vadd.f32 %v2482, %v2485
        %vm2487 = vweird.f32 %v1774
        %vm2488 = vweird.f32 %v2482
        %vm2489 = vmor %vm2487, %vm2488
        %v2490 = vsel %vm2489, %v2482, %v2486
        %v2491 = vand.u32 2147483647, %v1774
        %vm2492 = vcmp.eq.f32.partialorder %v2491, 8.507059e+37
        %v2493 = vand.u32 %v1774, 2147483648
        %v2494 = vor.u32 1.1754944e-38, %v2493
        %v2495 = vsel %vm2492, %v2494, %v2490
        %v2496 = vmul.f32 1.0, %v2495
        %v2497 = vrcp.pop %v1775
        %v2498 = vmul.f32 %v1775, %v2497
        %v2499 = vsub.f32 1.0, %v2498
        %v2500 = vmul.f32 %v2497, %v2499
        %v2501 = vadd.f32 %v2497, %v2500
        %vm2502 = vweird.f32 %v1775
        %vm2503 = vweird.f32 %v2497
        %vm2504 = vmor %vm2502, %vm2503
        %v2505 = vsel %vm2504, %v2497, %v2501
        %v2506 = vand.u32 2147483647, %v1775
        %vm2507 = vcmp.eq.f32.partialorder %v2506, 8.507059e+37
        %v2508 = vand.u32 %v1775, 2147483648
        %v2509 = vor.u32 1.1754944e-38, %v2508
        %v2510 = vsel %vm2507, %v2509, %v2505
        %v2511 = vmul.f32 1.0, %v2510
        %v2512 = vrcp.pop %v1776
        %v2513 = vmul.f32 %v1776, %v2512
        %v2514 = vsub.f32 1.0, %v2513
        %v2515 = vmul.f32 %v2512, %v2514
        %v2516 = vadd.f32 %v2512, %v2515
        %vm2517 = vweird.f32 %v1776
        %vm2518 = vweird.f32 %v2512
        %vm2519 = vmor %vm2517, %vm2518
        %v2520 = vsel %vm2519, %v2512, %v2516
        %v2521 = vand.u32 2147483647, %v1776
        %vm2522 = vcmp.eq.f32.partialorder %v2521, 8.507059e+37
        %v2523 = vand.u32 %v1776, 2147483648
        %v2524 = vor.u32 1.1754944e-38, %v2523
        %v2525 = vsel %vm2522, %v2524, %v2520
        %v2526 = vmul.f32 1.0, %v2525
        %v2527 = vrcp.pop %v1777
        %v2528 = vmul.f32 %v1777, %v2527
        %v2529 = vsub.f32 1.0, %v2528
        %v2530 = vmul.f32 %v2527, %v2529
        %v2531 = vadd.f32 %v2527, %v2530
        %vm2532 = vweird.f32 %v1777
        %vm2533 = vweird.f32 %v2527
        %vm2534 = vmor %vm2532, %vm2533
        %v2535 = vsel %vm2534, %v2527, %v2531
        %v2536 = vand.u32 2147483647, %v1777
        %vm2537 = vcmp.eq.f32.partialorder %v2536, 8.507059e+37
        %v2538 = vand.u32 %v1777, 2147483648
        %v2539 = vor.u32 1.1754944e-38, %v2538
        %v2540 = vsel %vm2537, %v2539, %v2535
        %v2541 = vmul.f32 1.0, %v2540
        %v2542 = vrcp.pop %v1778
        %v2543 = vmul.f32 %v1778, %v2542
        %v2544 = vsub.f32 1.0, %v2543
        %v2545 = vmul.f32 %v2542, %v2544
        %v2546 = vadd.f32 %v2542, %v2545
        %vm2547 = vweird.f32 %v1778
        %vm2548 = vweird.f32 %v2542
        %vm2549 = vmor %vm2547, %vm2548
        %v2550 = vsel %vm2549, %v2542, %v2546
        %v2551 = vand.u32 2147483647, %v1778
        %vm2552 = vcmp.eq.f32.partialorder %v2551, 8.507059e+37
        %v2553 = vand.u32 %v1778, 2147483648
        %v2554 = vor.u32 1.1754944e-38, %v2553
        %v2555 = vsel %vm2552, %v2554, %v2550
        %v2556 = vmul.f32 1.0, %v2555
        %v2557 = vrcp.pop %v1779
        %v2558 = vmul.f32 %v1779, %v2557
        %v2559 = vsub.f32 1.0, %v2558
        %v2560 = vmul.f32 %v2557, %v2559
        %v2561 = vadd.f32 %v2557, %v2560
        %vm2562 = vweird.f32 %v1779
        %vm2563 = vweird.f32 %v2557
        %vm2564 = vmor %vm2562, %vm2563
        %v2565 = vsel %vm2564, %v2557, %v2561
        %v2566 = vand.u32 2147483647, %v1779
        %vm2567 = vcmp.eq.f32.partialorder %v2566, 8.507059e+37
        %v2568 = vand.u32 %v1779, 2147483648
        %v2569 = vor.u32 1.1754944e-38, %v2568
        %v2570 = vsel %vm2567, %v2569, %v2565
        %v2571 = vmul.f32 1.0, %v2570
        %v2572 = vrcp.pop %v1780
        %v2573 = vmul.f32 %v1780, %v2572
        %v2574 = vsub.f32 1.0, %v2573
        %v2575 = vmul.f32 %v2572, %v2574
        %v2576 = vadd.f32 %v2572, %v2575
        %vm2577 = vweird.f32 %v1780
        %vm2578 = vweird.f32 %v2572
        %vm2579 = vmor %vm2577, %vm2578
        %v2580 = vsel %vm2579, %v2572, %v2576
        %v2581 = vand.u32 2147483647, %v1780
        %vm2582 = vcmp.eq.f32.partialorder %v2581, 8.507059e+37
        %v2583 = vand.u32 %v1780, 2147483648
        %v2584 = vor.u32 1.1754944e-38, %v2583
        %v2585 = vsel %vm2582, %v2584, %v2580
        %v2586 = vmul.f32 1.0, %v2585
        %v2587 = vrcp.pop %v1781
        %v2588 = vmul.f32 %v1781, %v2587
        %v2589 = vsub.f32 1.0, %v2588
        %v2590 = vmul.f32 %v2587, %v2589
        %v2591 = vadd.f32 %v2587, %v2590
        %vm2592 = vweird.f32 %v1781
        %vm2593 = vweird.f32 %v2587
        %vm2594 = vmor %vm2592, %vm2593
        %v2595 = vsel %vm2594, %v2587, %v2591
        %v2596 = vand.u32 2147483647, %v1781
        %vm2597 = vcmp.eq.f32.partialorder %v2596, 8.507059e+37
        %v2598 = vand.u32 %v1781, 2147483648
        %v2599 = vor.u32 1.1754944e-38, %v2598
        %v2600 = vsel %vm2597, %v2599, %v2595
        %v2601 = vmul.f32 1.0, %v2600
        %v2602 = vrcp.pop %v1782
        %v2603 = vmul.f32 %v1782, %v2602
        %v2604 = vsub.f32 1.0, %v2603
        %v2605 = vmul.f32 %v2602, %v2604
        %v2606 = vadd.f32 %v2602, %v2605
        %vm2607 = vweird.f32 %v1782
        %vm2608 = vweird.f32 %v2602
        %vm2609 = vmor %vm2607, %vm2608
        %v2610 = vsel %vm2609, %v2602, %v2606
        %v2611 = vand.u32 2147483647, %v1782
        %vm2612 = vcmp.eq.f32.partialorder %v2611, 8.507059e+37
        %v2613 = vand.u32 %v1782, 2147483648
        %v2614 = vor.u32 1.1754944e-38, %v2613
        %v2615 = vsel %vm2612, %v2614, %v2610
        %v2616 = vmul.f32 1.0, %v2615
        %v2617 = vrcp.pop %v1783
        %v2618 = vmul.f32 %v1783, %v2617
        %v2619 = vsub.f32 1.0, %v2618
        %v2620 = vmul.f32 %v2617, %v2619
        %v2621 = vadd.f32 %v2617, %v2620
        %vm2622 = vweird.f32 %v1783
        %vm2623 = vweird.f32 %v2617
        %vm2624 = vmor %vm2622, %vm2623
        %v2625 = vsel %vm2624, %v2617, %v2621
        %v2626 = vand.u32 2147483647, %v1783
        %vm2627 = vcmp.eq.f32.partialorder %v2626, 8.507059e+37
        %v2628 = vand.u32 %v1783, 2147483648
        %v2629 = vor.u32 1.1754944e-38, %v2628
        %v2630 = vsel %vm2627, %v2629, %v2625
        %v2631 = vmul.f32 1.0, %v2630
        %v2632 = vrcp.pop %v1784
        %v2633 = vmul.f32 %v1784, %v2632
        %v2634 = vsub.f32 1.0, %v2633
        %v2635 = vmul.f32 %v2632, %v2634
        %v2636 = vadd.f32 %v2632, %v2635
        %vm2637 = vweird.f32 %v1784
        %vm2638 = vweird.f32 %v2632
        %vm2639 = vmor %vm2637, %vm2638
        %v2640 = vsel %vm2639, %v2632, %v2636
        %v2641 = vand.u32 2147483647, %v1784
        %vm2642 = vcmp.eq.f32.partialorder %v2641, 8.507059e+37
        %v2643 = vand.u32 %v1784, 2147483648
        %v2644 = vor.u32 1.1754944e-38, %v2643
        %v2645 = vsel %vm2642, %v2644, %v2640
        %v2646 = vmul.f32 1.0, %v2645
        %v2647 = vrcp.pop %v1785
        %v2648 = vmul.f32 %v1785, %v2647
        %v2649 = vsub.f32 1.0, %v2648
        %v2650 = vmul.f32 %v2647, %v2649
        %v2651 = vadd.f32 %v2647, %v2650
        %vm2652 = vweird.f32 %v1785
        %vm2653 = vweird.f32 %v2647
        %vm2654 = vmor %vm2652, %vm2653
        %v2655 = vsel %vm2654, %v2647, %v2651
        %v2656 = vand.u32 2147483647, %v1785
        %vm2657 = vcmp.eq.f32.partialorder %v2656, 8.507059e+37
        %v2658 = vand.u32 %v1785, 2147483648
        %v2659 = vor.u32 1.1754944e-38, %v2658
        %v2660 = vsel %vm2657, %v2659, %v2655
        %v2661 = vmul.f32 1.0, %v2660
        %v2662 = vrcp.pop %v1786
        %v2663 = vmul.f32 %v1786, %v2662
        %v2664 = vsub.f32 1.0, %v2663
        %v2665 = vmul.f32 %v2662, %v2664
        %v2666 = vadd.f32 %v2662, %v2665
        %vm2667 = vweird.f32 %v1786
        %vm2668 = vweird.f32 %v2662
        %vm2669 = vmor %vm2667, %vm2668
        %v2670 = vsel %vm2669, %v2662, %v2666
        %v2671 = vand.u32 2147483647, %v1786
        %vm2672 = vcmp.eq.f32.partialorder %v2671, 8.507059e+37
        %v2673 = vand.u32 %v1786, 2147483648
        %v2674 = vor.u32 1.1754944e-38, %v2673
        %v2675 = vsel %vm2672, %v2674, %v2670
        %v2676 = vmul.f32 1.0, %v2675
        %v2677 = vrcp.pop %v1787
        %v2678 = vmul.f32 %v1787, %v2677
        %v2679 = vsub.f32 1.0, %v2678
        %v2680 = vmul.f32 %v2677, %v2679
        %v2681 = vadd.f32 %v2677, %v2680
        %vm2682 = vweird.f32 %v1787
        %vm2683 = vweird.f32 %v2677
        %vm2684 = vmor %vm2682, %vm2683
        %v2685 = vsel %vm2684, %v2677, %v2681
        %v2686 = vand.u32 2147483647, %v1787
        %vm2687 = vcmp.eq.f32.partialorder %v2686, 8.507059e+37
        %v2688 = vand.u32 %v1787, 2147483648
        %v2689 = vor.u32 1.1754944e-38, %v2688
        %v2690 = vsel %vm2687, %v2689, %v2685
        %v2691 = vmul.f32 1.0, %v2690
        %v2692 = vrcp.pop %v1788
        %v2693 = vmul.f32 %v1788, %v2692
        %v2694 = vsub.f32 1.0, %v2693
        %v2695 = vmul.f32 %v2692, %v2694
        %v2696 = vadd.f32 %v2692, %v2695
        %vm2697 = vweird.f32 %v1788
        %vm2698 = vweird.f32 %v2692
        %vm2699 = vmor %vm2697, %vm2698
        %v2700 = vsel %vm2699, %v2692, %v2696
        %v2701 = vand.u32 2147483647, %v1788
        %vm2702 = vcmp.eq.f32.partialorder %v2701, 8.507059e+37
        %v2703 = vand.u32 %v1788, 2147483648
        %v2704 = vor.u32 1.1754944e-38, %v2703
        %v2705 = vsel %vm2702, %v2704, %v2700
        %v2706 = vmul.f32 1.0, %v2705
        %v2707 = vrcp.pop %v1789
        %v2708 = vmul.f32 %v1789, %v2707
        %v2709 = vsub.f32 1.0, %v2708
        %v2710 = vmul.f32 %v2707, %v2709
        %v2711 = vadd.f32 %v2707, %v2710
        %vm2712 = vweird.f32 %v1789
        %vm2713 = vweird.f32 %v2707
        %vm2714 = vmor %vm2712, %vm2713
        %v2715 = vsel %vm2714, %v2707, %v2711
        %v2716 = vand.u32 2147483647, %v1789
        %vm2717 = vcmp.eq.f32.partialorder %v2716, 8.507059e+37
        %v2718 = vand.u32 %v1789, 2147483648
        %v2719 = vor.u32 1.1754944e-38, %v2718
        %v2720 = vsel %vm2717, %v2719, %v2715
        %v2721 = vmul.f32 1.0, %v2720
        %v2722 = vrcp.pop %v1790
        %v2723 = vmul.f32 %v1790, %v2722
        %v2724 = vsub.f32 1.0, %v2723
        %v2725 = vmul.f32 %v2722, %v2724
        %v2726 = vadd.f32 %v2722, %v2725
        %vm2727 = vweird.f32 %v1790
        %vm2728 = vweird.f32 %v2722
        %vm2729 = vmor %vm2727, %vm2728
        %v2730 = vsel %vm2729, %v2722, %v2726
        %v2731 = vand.u32 2147483647, %v1790
        %vm2732 = vcmp.eq.f32.partialorder %v2731, 8.507059e+37
        %v2733 = vand.u32 %v1790, 2147483648
        %v2734 = vor.u32 1.1754944e-38, %v2733
        %v2735 = vsel %vm2732, %v2734, %v2730
        %v2736 = vmul.f32 1.0, %v2735
        %v2737 = vrcp.pop %v1791
        %v2738 = vmul.f32 %v1791, %v2737
        %v2739 = vsub.f32 1.0, %v2738
        %v2740 = vmul.f32 %v2737, %v2739
        %v2741 = vadd.f32 %v2737, %v2740
        %vm2742 = vweird.f32 %v1791
        %vm2743 = vweird.f32 %v2737
        %vm2744 = vmor %vm2742, %vm2743
        %v2745 = vsel %vm2744, %v2737, %v2741
        %v2746 = vand.u32 2147483647, %v1791
        %vm2747 = vcmp.eq.f32.partialorder %v2746, 8.507059e+37
        %v2748 = vand.u32 %v1791, 2147483648
        %v2749 = vor.u32 1.1754944e-38, %v2748
        %v2750 = vsel %vm2747, %v2749, %v2745
        %v2751 = vmul.f32 1.0, %v2750
        %v2752 = vmul.f32 %v1328, %v1806
        %v2753 = vmul.f32 %v1441, %v1821
        %v2754 = vmul.f32 %v1331, %v1836
        %v2755 = vmul.f32 %v1444, %v1851
        %v2756 = vmul.f32 %v1334, %v1866
        %v2757 = vmul.f32 %v1447, %v1881
        %v2758 = vmul.f32 %v1337, %v1896
        %v2759 = vmul.f32 %v1450, %v1911
        %v2760 = vmul.f32 %v1340, %v1926
        %v2761 = vmul.f32 %v1453, %v1941
        %v2762 = vmul.f32 %v1343, %v1956
        %v2763 = vmul.f32 %v1456, %v1971
        %v2764 = vmul.f32 %v1346, %v1986
        %v2765 = vmul.f32 %v1459, %v2001
        %v2766 = vmul.f32 %v1349, %v2016
        %v2767 = vmul.f32 %v1462, %v2031
        %v2768 = vmul.f32 %v1352, %v2046
        %v2769 = vmul.f32 %v1465, %v2061
        %v2770 = vmul.f32 %v1355, %v2076
        %v2771 = vmul.f32 %v1468, %v2091
        %v2772 = vmul.f32 %v1358, %v2106
        %v2773 = vmul.f32 %v1471, %v2121
        %v2774 = vmul.f32 %v1361, %v2136
        %v2775 = vmul.f32 %v1474, %v2151
        %v2776 = vmul.f32 %v1364, %v2166
        %v2777 = vmul.f32 %v1477, %v2181
        %v2778 = vmul.f32 %v1367, %v2196
        %v2779 = vmul.f32 %v1480, %v2211
        %v2780 = vmul.f32 %v1370, %v2226
        %v2781 = vmul.f32 %v1483, %v2241
        %v2782 = vmul.f32 %v1373, %v2256
        %v2783 = vmul.f32 %v1486, %v2271
        %v2784 = vmul.f32 %v1376, %v2286
        %v2785 = vmul.f32 %v1489, %v2301
        %v2786 = vmul.f32 %v1379, %v2316
        %v2787 = vmul.f32 %v1492, %v2331
        %v2788 = vmul.f32 %v1382, %v2346
        %v2789 = vmul.f32 %v1495, %v2361
        %v2790 = vmul.f32 %v1385, %v2376
        %v2791 = vmul.f32 %v1498, %v2391
        %v2792 = vmul.f32 %v1388, %v2406
        %v2793 = vmul.f32 %v1501, %v2421
        %v2794 = vmul.f32 %v1391, %v2436
        %v2795 = vmul.f32 %v1504, %v2451
        %v2796 = vmul.f32 %v1394, %v2466
        %v2797 = vmul.f32 %v1507, %v2481
        %v2798 = vmul.f32 %v1397, %v2496
        %v2799 = vmul.f32 %v1510, %v2511
        %v2800 = vmul.f32 %v1400, %v2526
        %v2801 = vmul.f32 %v1513, %v2541
        %v2802 = vmul.f32 %v1403, %v2556
        %v2803 = vmul.f32 %v1516, %v2571
        %v2804 = vmul.f32 %v1406, %v2586
        %v2805 = vmul.f32 %v1519, %v2601
        %v2806 = vmul.f32 %v1409, %v2616
        %v2807 = vmul.f32 %v1522, %v2631
        %v2808 = vmul.f32 %v1412, %v2646
        %v2809 = vmul.f32 %v1525, %v2661
        %v2810 = vmul.f32 %v1415, %v2676
        %v2811 = vmul.f32 %v1528, %v2691
        %v2812 = vmul.f32 %v1418, %v2706
        %v2813 = vmul.f32 %v1531, %v2721
        %v2814 = vmul.f32 %v1421, %v2736
        %v2815 = vmul.f32 %v1534, %v2751
        %v2816 = vld [vmem:[#allocation3] sm:$0xff]
        %v2817 = vld [vmem:[#allocation3 + $0x8] sm:$0xff]
        %v2818 = vld [vmem:[#allocation3 + $0x10] sm:$0xff]
        %v2819 = vld [vmem:[#allocation3 + $0x18] sm:$0xff]
        %v2820 = vld [vmem:[#allocation3 + $0x20] sm:$0xff]
        %v2821 = vld [vmem:[#allocation3 + $0x28] sm:$0xff]
        %v2822 = vld [vmem:[#allocation3 + $0x30] sm:$0xff]
        %v2823 = vld [vmem:[#allocation3 + $0x38] sm:$0xff]
        %v2824 = vld [vmem:[#allocation3 + $0x40] sm:$0xff]
        %v2825 = vld [vmem:[#allocation3 + $0x48] sm:$0xff]
        %v2826 = vld [vmem:[#allocation3 + $0x50] sm:$0xff]
        %v2827 = vld [vmem:[#allocation3 + $0x58] sm:$0xff]
        %v2828 = vld [vmem:[#allocation3 + $0x60] sm:$0xff]
        %v2829 = vld [vmem:[#allocation3 + $0x68] sm:$0xff]
        %v2830 = vld [vmem:[#allocation3 + $0x70] sm:$0xff]
        %v2831 = vld [vmem:[#allocation3 + $0x78] sm:$0xff]
        %v2832 = vld [vmem:[#allocation3 + $0x80] sm:$0xff]
        %v2833 = vld [vmem:[#allocation3 + $0x88] sm:$0xff]
        %v2834 = vld [vmem:[#allocation3 + $0x90] sm:$0xff]
        %v2835 = vld [vmem:[#allocation3 + $0x98] sm:$0xff]
        %v2836 = vld [vmem:[#allocation3 + $0xa0] sm:$0xff]
        %v2837 = vld [vmem:[#allocation3 + $0xa8] sm:$0xff]
        %v2838 = vld [vmem:[#allocation3 + $0xb0] sm:$0xff]
        %v2839 = vld [vmem:[#allocation3 + $0xb8] sm:$0xff]
        %v2840 = vld [vmem:[#allocation3 + $0xc0] sm:$0xff]
        %v2841 = vld [vmem:[#allocation3 + $0xc8] sm:$0xff]
        %v2842 = vld [vmem:[#allocation3 + $0xd0] sm:$0xff]
        %v2843 = vld [vmem:[#allocation3 + $0xd8] sm:$0xff]
        %v2844 = vld [vmem:[#allocation3 + $0xe0] sm:$0xff]
        %v2845 = vld [vmem:[#allocation3 + $0xe8] sm:$0xff]
        %v2846 = vld [vmem:[#allocation3 + $0xf0] sm:$0xff]
        %v2847 = vld [vmem:[#allocation3 + $0xf8] sm:$0xff]
        %v2848 = vld [vmem:[%s379] sm:$0xff]
        %v2849 = vld [vmem:[%s379 + $0x8] sm:$0xff]
        %v2850 = vld [vmem:[%s379 + $0x10] sm:$0xff]
        %v2851 = vld [vmem:[%s379 + $0x18] sm:$0xff]
        %v2852 = vld [vmem:[%s379 + $0x20] sm:$0xff]
        %v2853 = vld [vmem:[%s379 + $0x28] sm:$0xff]
        %v2854 = vld [vmem:[%s379 + $0x30] sm:$0xff]
        %v2855 = vld [vmem:[%s379 + $0x38] sm:$0xff]
        %v2856 = vld [vmem:[%s379 + $0x40] sm:$0xff]
        %v2857 = vld [vmem:[%s379 + $0x48] sm:$0xff]
        %v2858 = vld [vmem:[%s379 + $0x50] sm:$0xff]
        %v2859 = vld [vmem:[%s379 + $0x58] sm:$0xff]
        %v2860 = vld [vmem:[%s379 + $0x60] sm:$0xff]
        %v2861 = vld [vmem:[%s379 + $0x68] sm:$0xff]
        %v2862 = vld [vmem:[%s379 + $0x70] sm:$0xff]
        %v2863 = vld [vmem:[%s379 + $0x78] sm:$0xff]
        %v2864 = vld [vmem:[%s379 + $0x80] sm:$0xff]
        %v2865 = vld [vmem:[%s379 + $0x88] sm:$0xff]
        %v2866 = vld [vmem:[%s379 + $0x90] sm:$0xff]
        %v2867 = vld [vmem:[%s379 + $0x98] sm:$0xff]
        %v2868 = vld [vmem:[%s379 + $0xa0] sm:$0xff]
        %v2869 = vld [vmem:[%s379 + $0xa8] sm:$0xff]
        %v2870 = vld [vmem:[%s379 + $0xb0] sm:$0xff]
        %v2871 = vld [vmem:[%s379 + $0xb8] sm:$0xff]
        %v2872 = vld [vmem:[%s379 + $0xc0] sm:$0xff]
        %v2873 = vld [vmem:[%s379 + $0xc8] sm:$0xff]
        %v2874 = vld [vmem:[%s379 + $0xd0] sm:$0xff]
        %v2875 = vld [vmem:[%s379 + $0xd8] sm:$0xff]
        %v2876 = vld [vmem:[%s379 + $0xe0] sm:$0xff]
        %v2877 = vld [vmem:[%s379 + $0xe8] sm:$0xff]
        %v2878 = vld [vmem:[%s379 + $0xf0] sm:$0xff]
        %v2879 = vld [vmem:[%s379 + $0xf8] sm:$0xff]
        %2880 = vmatpush.msra.mxu0 %v2863
        %2881 = vmatpush.msra.mxu0 %v2862
        %2882 = vmatpush.msra.mxu0 %v2861
        %2883 = vmatpush.msra.mxu0 %v2860
        %2884 = vmatpush.msra.mxu0 %v2859
        %2885 = vmatpush.msra.mxu0 %v2858
        %2886 = vmatpush.msra.mxu0 %v2857
        %2887 = vmatpush.msra.mxu0 %v2856
        %2888 = vmatpush.msra.mxu0 %v2855
        %2889 = vmatpush.msra.mxu0 %v2854
        %2890 = vmatpush.msra.mxu0 %v2853
        %2891 = vmatpush.msra.mxu0 %v2852
        %2892 = vmatpush.msra.mxu0 %v2851
        %2893 = vmatpush.msra.mxu0 %v2850
        %2894 = vmatpush.msra.mxu0 %v2849
        %2895 = vmatpush.msra.mxu0 %v2848
        %2896 = vmatmul.f32.gmra.mxu0 %v2752
        %v2897 = vpop.f32.mrf.mxu0
        %v2898 = vadd.f32 0.0, %v2897
        %2899 = vmatmul.f32.gmra.mxu0 %v2754
        %v2900 = vpop.f32.mrf.mxu0
        %v2901 = vadd.f32 0.0, %v2900
        %2902 = vmatmul.f32.gmra.mxu0 %v2756
        %v2903 = vpop.f32.mrf.mxu0
        %v2904 = vadd.f32 0.0, %v2903
        %2905 = vmatmul.f32.gmra.mxu0 %v2758
        %v2906 = vpop.f32.mrf.mxu0
        %v2907 = vadd.f32 0.0, %v2906
        %2908 = vmatmul.f32.gmra.mxu0 %v2760
        %v2909 = vpop.f32.mrf.mxu0
        %v2910 = vadd.f32 0.0, %v2909
        %2911 = vmatmul.f32.gmra.mxu0 %v2762
        %v2912 = vpop.f32.mrf.mxu0
        %v2913 = vadd.f32 0.0, %v2912
        %2914 = vmatmul.f32.gmra.mxu0 %v2764
        %v2915 = vpop.f32.mrf.mxu0
        %v2916 = vadd.f32 0.0, %v2915
        %2917 = vmatmul.f32.gmra.mxu0 %v2766
        %v2918 = vpop.f32.mrf.mxu0
        %v2919 = vadd.f32 0.0, %v2918
        %2920 = vmatmul.f32.gmra.mxu0 %v2768
        %v2921 = vpop.f32.mrf.mxu0
        %v2922 = vadd.f32 0.0, %v2921
        %2923 = vmatmul.f32.gmra.mxu0 %v2770
        %v2924 = vpop.f32.mrf.mxu0
        %v2925 = vadd.f32 0.0, %v2924
        %2926 = vmatmul.f32.gmra.mxu0 %v2772
        %v2927 = vpop.f32.mrf.mxu0
        %v2928 = vadd.f32 0.0, %v2927
        %2929 = vmatmul.f32.gmra.mxu0 %v2774
        %v2930 = vpop.f32.mrf.mxu0
        %v2931 = vadd.f32 0.0, %v2930
        %2932 = vmatmul.f32.gmra.mxu0 %v2776
        %v2933 = vpop.f32.mrf.mxu0
        %v2934 = vadd.f32 0.0, %v2933
        %2935 = vmatmul.f32.gmra.mxu0 %v2778
        %v2936 = vpop.f32.mrf.mxu0
        %v2937 = vadd.f32 0.0, %v2936
        %2938 = vmatmul.f32.gmra.mxu0 %v2780
        %v2939 = vpop.f32.mrf.mxu0
        %v2940 = vadd.f32 0.0, %v2939
        %2941 = vmatmul.f32.gmra.mxu0 %v2782
        %v2942 = vpop.f32.mrf.mxu0
        %v2943 = vadd.f32 0.0, %v2942
        %2944 = vmatmul.f32.gmra.mxu0 %v2784
        %v2945 = vpop.f32.mrf.mxu0
        %v2946 = vadd.f32 0.0, %v2945
        %2947 = vmatmul.f32.gmra.mxu0 %v2786
        %v2948 = vpop.f32.mrf.mxu0
        %v2949 = vadd.f32 0.0, %v2948
        %2950 = vmatmul.f32.gmra.mxu0 %v2788
        %v2951 = vpop.f32.mrf.mxu0
        %v2952 = vadd.f32 0.0, %v2951
        %2953 = vmatmul.f32.gmra.mxu0 %v2790
        %v2954 = vpop.f32.mrf.mxu0
        %v2955 = vadd.f32 0.0, %v2954
        %2956 = vmatmul.f32.gmra.mxu0 %v2792
        %v2957 = vpop.f32.mrf.mxu0
        %v2958 = vadd.f32 0.0, %v2957
        %2959 = vmatmul.f32.gmra.mxu0 %v2794
        %v2960 = vpop.f32.mrf.mxu0
        %v2961 = vadd.f32 0.0, %v2960
        %2962 = vmatmul.f32.gmra.mxu0 %v2796
        %v2963 = vpop.f32.mrf.mxu0
        %v2964 = vadd.f32 0.0, %v2963
        %2965 = vmatmul.f32.gmra.mxu0 %v2798
        %v2966 = vpop.f32.mrf.mxu0
        %v2967 = vadd.f32 0.0, %v2966
        %2968 = vmatmul.f32.gmra.mxu0 %v2800
        %v2969 = vpop.f32.mrf.mxu0
        %v2970 = vadd.f32 0.0, %v2969
        %2971 = vmatmul.f32.gmra.mxu0 %v2802
        %v2972 = vpop.f32.mrf.mxu0
        %v2973 = vadd.f32 0.0, %v2972
        %2974 = vmatmul.f32.gmra.mxu0 %v2804
        %v2975 = vpop.f32.mrf.mxu0
        %v2976 = vadd.f32 0.0, %v2975
        %2977 = vmatmul.f32.gmra.mxu0 %v2806
        %v2978 = vpop.f32.mrf.mxu0
        %v2979 = vadd.f32 0.0, %v2978
        %2980 = vmatmul.f32.gmra.mxu0 %v2808
        %v2981 = vpop.f32.mrf.mxu0
        %v2982 = vadd.f32 0.0, %v2981
        %2983 = vmatmul.f32.gmra.mxu0 %v2810
        %v2984 = vpop.f32.mrf.mxu0
        %v2985 = vadd.f32 0.0, %v2984
        %2986 = vmatmul.f32.gmra.mxu0 %v2812
        %v2987 = vpop.f32.mrf.mxu0
        %v2988 = vadd.f32 0.0, %v2987
        %2989 = vmatmul.f32.gmra.mxu0 %v2814
        %v2990 = vpop.f32.mrf.mxu0
        %v2991 = vadd.f32 0.0, %v2990
        %2992 = vdwg.mxu0
        %2993 = vmatpush.msra.mxu0 %v2879
        %2994 = vmatpush.msra.mxu0 %v2878
        %2995 = vmatpush.msra.mxu0 %v2877
        %2996 = vmatpush.msra.mxu0 %v2876
        %2997 = vmatpush.msra.mxu0 %v2875
        %2998 = vmatpush.msra.mxu0 %v2874
        %2999 = vmatpush.msra.mxu0 %v2873
        %3000 = vmatpush.msra.mxu0 %v2872
        %3001 = vmatpush.msra.mxu0 %v2871
        %3002 = vmatpush.msra.mxu0 %v2870
        %3003 = vmatpush.msra.mxu0 %v2869
        %3004 = vmatpush.msra.mxu0 %v2868
        %3005 = vmatpush.msra.mxu0 %v2867
        %3006 = vmatpush.msra.mxu0 %v2866
        %3007 = vmatpush.msra.mxu0 %v2865
        %3008 = vmatpush.msra.mxu0 %v2864
        %3009 = vmatmul.f32.gmra.mxu0 %v2753
        %v3010 = vpop.f32.mrf.mxu0
        %v3011 = vadd.f32 %v2898, %v3010
        %3012 = vmatmul.f32.gmra.mxu0 %v2755
        %v3013 = vpop.f32.mrf.mxu0
        %v3014 = vadd.f32 %v2901, %v3013
        %3015 = vmatmul.f32.gmra.mxu0 %v2757
        %v3016 = vpop.f32.mrf.mxu0
        %v3017 = vadd.f32 %v2904, %v3016
        %3018 = vmatmul.f32.gmra.mxu0 %v2759
        %v3019 = vpop.f32.mrf.mxu0
        %v3020 = vadd.f32 %v2907, %v3019
        %3021 = vmatmul.f32.gmra.mxu0 %v2761
        %v3022 = vpop.f32.mrf.mxu0
        %v3023 = vadd.f32 %v2910, %v3022
        %3024 = vmatmul.f32.gmra.mxu0 %v2763
        %v3025 = vpop.f32.mrf.mxu0
        %v3026 = vadd.f32 %v2913, %v3025
        %3027 = vmatmul.f32.gmra.mxu0 %v2765
        %v3028 = vpop.f32.mrf.mxu0
        %v3029 = vadd.f32 %v2916, %v3028
        %3030 = vmatmul.f32.gmra.mxu0 %v2767
        %v3031 = vpop.f32.mrf.mxu0
        %v3032 = vadd.f32 %v2919, %v3031
        %3033 = vmatmul.f32.gmra.mxu0 %v2769
        %v3034 = vpop.f32.mrf.mxu0
        %v3035 = vadd.f32 %v2922, %v3034
        %3036 = vmatmul.f32.gmra.mxu0 %v2771
        %v3037 = vpop.f32.mrf.mxu0
        %v3038 = vadd.f32 %v2925, %v3037
        %3039 = vmatmul.f32.gmra.mxu0 %v2773
        %v3040 = vpop.f32.mrf.mxu0
        %v3041 = vadd.f32 %v2928, %v3040
        %3042 = vmatmul.f32.gmra.mxu0 %v2775
        %v3043 = vpop.f32.mrf.mxu0
        %v3044 = vadd.f32 %v2931, %v3043
        %3045 = vmatmul.f32.gmra.mxu0 %v2777
        %v3046 = vpop.f32.mrf.mxu0
        %v3047 = vadd.f32 %v2934, %v3046
        %3048 = vmatmul.f32.gmra.mxu0 %v2779
        %v3049 = vpop.f32.mrf.mxu0
        %v3050 = vadd.f32 %v2937, %v3049
        %3051 = vmatmul.f32.gmra.mxu0 %v2781
        %v3052 = vpop.f32.mrf.mxu0
        %v3053 = vadd.f32 %v2940, %v3052
        %3054 = vmatmul.f32.gmra.mxu0 %v2783
        %v3055 = vpop.f32.mrf.mxu0
        %v3056 = vadd.f32 %v2943, %v3055
        %3057 = vmatmul.f32.gmra.mxu0 %v2785
        %v3058 = vpop.f32.mrf.mxu0
        %v3059 = vadd.f32 %v2946, %v3058
        %3060 = vmatmul.f32.gmra.mxu0 %v2787
        %v3061 = vpop.f32.mrf.mxu0
        %v3062 = vadd.f32 %v2949, %v3061
        %3063 = vmatmul.f32.gmra.mxu0 %v2789
        %v3064 = vpop.f32.mrf.mxu0
        %v3065 = vadd.f32 %v2952, %v3064
        %3066 = vmatmul.f32.gmra.mxu0 %v2791
        %v3067 = vpop.f32.mrf.mxu0
        %v3068 = vadd.f32 %v2955, %v3067
        %3069 = vmatmul.f32.gmra.mxu0 %v2793
        %v3070 = vpop.f32.mrf.mxu0
        %v3071 = vadd.f32 %v2958, %v3070
        %3072 = vmatmul.f32.gmra.mxu0 %v2795
        %v3073 = vpop.f32.mrf.mxu0
        %v3074 = vadd.f32 %v2961, %v3073
        %3075 = vmatmul.f32.gmra.mxu0 %v2797
        %v3076 = vpop.f32.mrf.mxu0
        %v3077 = vadd.f32 %v2964, %v3076
        %3078 = vmatmul.f32.gmra.mxu0 %v2799
        %v3079 = vpop.f32.mrf.mxu0
        %v3080 = vadd.f32 %v2967, %v3079
        %3081 = vmatmul.f32.gmra.mxu0 %v2801
        %v3082 = vpop.f32.mrf.mxu0
        %v3083 = vadd.f32 %v2970, %v3082
        %3084 = vmatmul.f32.gmra.mxu0 %v2803
        %v3085 = vpop.f32.mrf.mxu0
        %v3086 = vadd.f32 %v2973, %v3085
        %3087 = vmatmul.f32.gmra.mxu0 %v2805
        %v3088 = vpop.f32.mrf.mxu0
        %v3089 = vadd.f32 %v2976, %v3088
        %3090 = vmatmul.f32.gmra.mxu0 %v2807
        %v3091 = vpop.f32.mrf.mxu0
        %v3092 = vadd.f32 %v2979, %v3091
        %3093 = vmatmul.f32.gmra.mxu0 %v2809
        %v3094 = vpop.f32.mrf.mxu0
        %v3095 = vadd.f32 %v2982, %v3094
        %3096 = vmatmul.f32.gmra.mxu0 %v2811
        %v3097 = vpop.f32.mrf.mxu0
        %v3098 = vadd.f32 %v2985, %v3097
        %3099 = vmatmul.f32.gmra.mxu0 %v2813
        %v3100 = vpop.f32.mrf.mxu0
        %v3101 = vadd.f32 %v2988, %v3100
        %3102 = vmatmul.f32.gmra.mxu0 %v2815
        %v3103 = vpop.f32.mrf.mxu0
        %v3104 = vadd.f32 %v2991, %v3103
        %3105 = vdwg.mxu0
        %v3106 = vadd.f32 %v2816, %v3011
        %v3107 = vadd.f32 %v2817, %v3014
        %v3108 = vadd.f32 %v2818, %v3017
        %v3109 = vadd.f32 %v2819, %v3020
        %v3110 = vadd.f32 %v2820, %v3023
        %v3111 = vadd.f32 %v2821, %v3026
        %v3112 = vadd.f32 %v2822, %v3029
        %v3113 = vadd.f32 %v2823, %v3032
        %v3114 = vadd.f32 %v2824, %v3035
        %v3115 = vadd.f32 %v2825, %v3038
        %v3116 = vadd.f32 %v2826, %v3041
        %v3117 = vadd.f32 %v2827, %v3044
        %v3118 = vadd.f32 %v2828, %v3047
        %v3119 = vadd.f32 %v2829, %v3050
        %v3120 = vadd.f32 %v2830, %v3053
        %v3121 = vadd.f32 %v2831, %v3056
        %v3122 = vadd.f32 %v2832, %v3059
        %v3123 = vadd.f32 %v2833, %v3062
        %v3124 = vadd.f32 %v2834, %v3065
        %v3125 = vadd.f32 %v2835, %v3068
        %v3126 = vadd.f32 %v2836, %v3071
        %v3127 = vadd.f32 %v2837, %v3074
        %v3128 = vadd.f32 %v2838, %v3077
        %v3129 = vadd.f32 %v2839, %v3080
        %v3130 = vadd.f32 %v2840, %v3083
        %v3131 = vadd.f32 %v2841, %v3086
        %v3132 = vadd.f32 %v2842, %v3089
        %v3133 = vadd.f32 %v2843, %v3092
        %v3134 = vadd.f32 %v2844, %v3095
        %v3135 = vadd.f32 %v2845, %v3098
        %v3136 = vadd.f32 %v2846, %v3101
        %v3137 = vadd.f32 %v2847, %v3104
        %3138 = vst [vmem:[#allocation3] sm:$0xff] %v3106
        %3139 = vst [vmem:[#allocation3 + $0x8] sm:$0xff] %v3107
        %3140 = vst [vmem:[#allocation3 + $0x10] sm:$0xff] %v3108
        %3141 = vst [vmem:[#allocation3 + $0x18] sm:$0xff] %v3109
        %3142 = vst [vmem:[#allocation3 + $0x20] sm:$0xff] %v3110
        %3143 = vst [vmem:[#allocation3 + $0x28] sm:$0xff] %v3111
        %3144 = vst [vmem:[#allocation3 + $0x30] sm:$0xff] %v3112
        %3145 = vst [vmem:[#allocation3 + $0x38] sm:$0xff] %v3113
        %3146 = vst [vmem:[#allocation3 + $0x40] sm:$0xff] %v3114
        %3147 = vst [vmem:[#allocation3 + $0x48] sm:$0xff] %v3115
        %3148 = vst [vmem:[#allocation3 + $0x50] sm:$0xff] %v3116
        %3149 = vst [vmem:[#allocation3 + $0x58] sm:$0xff] %v3117
        %3150 = vst [vmem:[#allocation3 + $0x60] sm:$0xff] %v3118
        %3151 = vst [vmem:[#allocation3 + $0x68] sm:$0xff] %v3119
        %3152 = vst [vmem:[#allocation3 + $0x70] sm:$0xff] %v3120
        %3153 = vst [vmem:[#allocation3 + $0x78] sm:$0xff] %v3121
        %3154 = vst [vmem:[#allocation3 + $0x80] sm:$0xff] %v3122
        %3155 = vst [vmem:[#allocation3 + $0x88] sm:$0xff] %v3123
        %3156 = vst [vmem:[#allocation3 + $0x90] sm:$0xff] %v3124
        %3157 = vst [vmem:[#allocation3 + $0x98] sm:$0xff] %v3125
        %3158 = vst [vmem:[#allocation3 + $0xa0] sm:$0xff] %v3126
        %3159 = vst [vmem:[#allocation3 + $0xa8] sm:$0xff] %v3127
        %3160 = vst [vmem:[#allocation3 + $0xb0] sm:$0xff] %v3128
        %3161 = vst [vmem:[#allocation3 + $0xb8] sm:$0xff] %v3129
        %3162 = vst [vmem:[#allocation3 + $0xc0] sm:$0xff] %v3130
        %3163 = vst [vmem:[#allocation3 + $0xc8] sm:$0xff] %v3131
        %3164 = vst [vmem:[#allocation3 + $0xd0] sm:$0xff] %v3132
        %3165 = vst [vmem:[#allocation3 + $0xd8] sm:$0xff] %v3133
        %3166 = vst [vmem:[#allocation3 + $0xe0] sm:$0xff] %v3134
        %3167 = vst [vmem:[#allocation3 + $0xe8] sm:$0xff] %v3135
        %3168 = vst [vmem:[#allocation3 + $0xf0] sm:$0xff] %v3136
        %3169 = vst [vmem:[#allocation3 + $0xf8] sm:$0xff] %v3137
        %p3170 = scmp.eq.s32.totalorder %s26, 1
        // Predicated region
        $region73: #{tpu_custom_call.1} parent=47 // pred_check
          %p3171 = pneg %p3170
        $region74: #{tpu_custom_call.1} parent=47 // pred_check_branch
          %3173 = sbr.rel (%p3171) target = $region76
        $region75: #{tpu_custom_call.1} parent=47 // pred_region
          %v3174 = vld [vmem:[#allocation3] sm:$0xff]
          %v3175 = vld [vmem:[#allocation3 + $0x8] sm:$0xff]
          %v3176 = vld [vmem:[#allocation3 + $0x10] sm:$0xff]
          %v3177 = vld [vmem:[#allocation3 + $0x18] sm:$0xff]
          %v3178 = vld [vmem:[#allocation3 + $0x20] sm:$0xff]
          %v3179 = vld [vmem:[#allocation3 + $0x28] sm:$0xff]
          %v3180 = vld [vmem:[#allocation3 + $0x30] sm:$0xff]
          %v3181 = vld [vmem:[#allocation3 + $0x38] sm:$0xff]
          %v3182 = vld [vmem:[#allocation3 + $0x40] sm:$0xff]
          %v3183 = vld [vmem:[#allocation3 + $0x48] sm:$0xff]
          %v3184 = vld [vmem:[#allocation3 + $0x50] sm:$0xff]
          %v3185 = vld [vmem:[#allocation3 + $0x58] sm:$0xff]
          %v3186 = vld [vmem:[#allocation3 + $0x60] sm:$0xff]
          %v3187 = vld [vmem:[#allocation3 + $0x68] sm:$0xff]
          %v3188 = vld [vmem:[#allocation3 + $0x70] sm:$0xff]
          %v3189 = vld [vmem:[#allocation3 + $0x78] sm:$0xff]
          %v3190 = vld [vmem:[#allocation3 + $0x80] sm:$0xff]
          %v3191 = vld [vmem:[#allocation3 + $0x88] sm:$0xff]
          %v3192 = vld [vmem:[#allocation3 + $0x90] sm:$0xff]
          %v3193 = vld [vmem:[#allocation3 + $0x98] sm:$0xff]
          %v3194 = vld [vmem:[#allocation3 + $0xa0] sm:$0xff]
          %v3195 = vld [vmem:[#allocation3 + $0xa8] sm:$0xff]
          %v3196 = vld [vmem:[#allocation3 + $0xb0] sm:$0xff]
          %v3197 = vld [vmem:[#allocation3 + $0xb8] sm:$0xff]
          %v3198 = vld [vmem:[#allocation3 + $0xc0] sm:$0xff]
          %v3199 = vld [vmem:[#allocation3 + $0xc8] sm:$0xff]
          %v3200 = vld [vmem:[#allocation3 + $0xd0] sm:$0xff]
          %v3201 = vld [vmem:[#allocation3 + $0xd8] sm:$0xff]
          %v3202 = vld [vmem:[#allocation3 + $0xe0] sm:$0xff]
          %v3203 = vld [vmem:[#allocation3 + $0xe8] sm:$0xff]
          %v3204 = vld [vmem:[#allocation3 + $0xf0] sm:$0xff]
          %v3205 = vld [vmem:[#allocation3 + $0xf8] sm:$0xff]
          %v3206 = vld [vmem:[%s6] sm:$0x1]
          %v3208 = vperm.slane %v3206, 0
          %v3210 = vadd.f32 %v3174, %v3208
          %v3211 = vadd.f32 %v3175, %v3208
          %v3212 = vadd.f32 %v3176, %v3208
          %v3213 = vadd.f32 %v3177, %v3208
          %v3214 = vadd.f32 %v3178, %v3208
          %v3215 = vadd.f32 %v3179, %v3208
          %v3216 = vadd.f32 %v3180, %v3208
          %v3217 = vadd.f32 %v3181, %v3208
          %v3218 = vadd.f32 %v3182, %v3208
          %v3219 = vadd.f32 %v3183, %v3208
          %v3220 = vadd.f32 %v3184, %v3208
          %v3221 = vadd.f32 %v3185, %v3208
          %v3222 = vadd.f32 %v3186, %v3208
          %v3223 = vadd.f32 %v3187, %v3208
          %v3224 = vadd.f32 %v3188, %v3208
          %v3225 = vadd.f32 %v3189, %v3208
          %v3226 = vadd.f32 %v3190, %v3208
          %v3227 = vadd.f32 %v3191, %v3208
          %v3228 = vadd.f32 %v3192, %v3208
          %v3229 = vadd.f32 %v3193, %v3208
          %v3230 = vadd.f32 %v3194, %v3208
          %v3231 = vadd.f32 %v3195, %v3208
          %v3232 = vadd.f32 %v3196, %v3208
          %v3233 = vadd.f32 %v3197, %v3208
          %v3234 = vadd.f32 %v3198, %v3208
          %v3235 = vadd.f32 %v3199, %v3208
          %v3236 = vadd.f32 %v3200, %v3208
          %v3237 = vadd.f32 %v3201, %v3208
          %v3238 = vadd.f32 %v3202, %v3208
          %v3239 = vadd.f32 %v3203, %v3208
          %v3240 = vadd.f32 %v3204, %v3208
          %v3241 = vadd.f32 %v3205, %v3208
          %3242 = vst [vmem:[#allocation12] sm:$0xff] %v3210
          %3243 = vst [vmem:[#allocation12 + $0x8] sm:$0xff] %v3211
          %3244 = vst [vmem:[#allocation12 + $0x10] sm:$0xff] %v3212
          %3245 = vst [vmem:[#allocation12 + $0x18] sm:$0xff] %v3213
          %3246 = vst [vmem:[#allocation12 + $0x20] sm:$0xff] %v3214
          %3247 = vst [vmem:[#allocation12 + $0x28] sm:$0xff] %v3215
          %3248 = vst [vmem:[#allocation12 + $0x30] sm:$0xff] %v3216
          %3249 = vst [vmem:[#allocation12 + $0x38] sm:$0xff] %v3217
          %3250 = vst [vmem:[#allocation12 + $0x40] sm:$0xff] %v3218
          %3251 = vst [vmem:[#allocation12 + $0x48] sm:$0xff] %v3219
          %3252 = vst [vmem:[#allocation12 + $0x50] sm:$0xff] %v3220
          %3253 = vst [vmem:[#allocation12 + $0x58] sm:$0xff] %v3221
          %3254 = vst [vmem:[#allocation12 + $0x60] sm:$0xff] %v3222
          %3255 = vst [vmem:[#allocation12 + $0x68] sm:$0xff] %v3223
          %3256 = vst [vmem:[#allocation12 + $0x70] sm:$0xff] %v3224
          %3257 = vst [vmem:[#allocation12 + $0x78] sm:$0xff] %v3225
          %3258 = vst [vmem:[#allocation12 + $0x80] sm:$0xff] %v3226
          %3259 = vst [vmem:[#allocation12 + $0x88] sm:$0xff] %v3227
          %3260 = vst [vmem:[#allocation12 + $0x90] sm:$0xff] %v3228
          %3261 = vst [vmem:[#allocation12 + $0x98] sm:$0xff] %v3229
          %3262 = vst [vmem:[#allocation12 + $0xa0] sm:$0xff] %v3230
          %3263 = vst [vmem:[#allocation12 + $0xa8] sm:$0xff] %v3231
          %3264 = vst [vmem:[#allocation12 + $0xb0] sm:$0xff] %v3232
          %3265 = vst [vmem:[#allocation12 + $0xb8] sm:$0xff] %v3233
          %3266 = vst [vmem:[#allocation12 + $0xc0] sm:$0xff] %v3234
          %3267 = vst [vmem:[#allocation12 + $0xc8] sm:$0xff] %v3235
          %3268 = vst [vmem:[#allocation12 + $0xd0] sm:$0xff] %v3236
          %3269 = vst [vmem:[#allocation12 + $0xd8] sm:$0xff] %v3237
          %3270 = vst [vmem:[#allocation12 + $0xe0] sm:$0xff] %v3238
          %3271 = vst [vmem:[#allocation12 + $0xe8] sm:$0xff] %v3239
          %3272 = vst [vmem:[#allocation12 + $0xf0] sm:$0xff] %v3240
          %3273 = vst [vmem:[#allocation12 + $0xf8] sm:$0xff] %v3241
        $region76: #{tpu_custom_call.1} parent=47 // pred_fallthru
          _
        // Predicated region
        $region77: #{tpu_custom_call.1} parent=47 // pred_check
          %p3274 = pneg %p218
        $region78: #{tpu_custom_call.1} parent=47 // pred_check_branch
          %3276 = sbr.rel (%p3274) target = $region80
        $region79: #{tpu_custom_call.1} parent=47 // pred_region
          %s3277 = smul.u32 32, %s25
          %3279 = vsyncadd [#allocation6], 0
          %s3280 = smul.addr %s3277, 8
          %s3281 = scalar_lea.hbm %s7, %s3280
          %s3282 = sshll.u32 [#allocation12], 4
          %s3283 = int_to_ptr.vmem [resolvable:$true] %s3282
          %s3284 = sshll.u32 %s3281, 4
          %s3285 = int_to_ptr.hbm [resolvable:$true] %s3284
          %3290 = dma.vmem_to_hbm [thread:$0]  %s3283, 4096, %s3285, [#allocation6], 128, 128, 8
        $region80: #{tpu_custom_call.1} parent=47 // pred_fallthru
          _
        // Predicated region
        $region81: #{tpu_custom_call.1} parent=47 // pred_check
          %p3291 = pneg %p218
        $region82: #{tpu_custom_call.1} parent=47 // pred_check_branch
          %3293 = sbr.rel (%p3291) target = $region84
        $region83: #{tpu_custom_call.1} parent=47 // pred_region
          %3295 = dma.done [#allocation6], 4096
        $region84: #{tpu_custom_call.1} parent=47 // pred_fallthru
          _
      $region48: #{tpu_custom_call.1} parent=5 // pred_fallthru
        _
      %p3296 = scmp.le.s32.totalorder 2, %s16
      // Predicated region
      $region85: #{tpu_custom_call.1} parent=5 // pred_check
        %p3297 = pneg %p3296
      $region86: #{tpu_custom_call.1} parent=5 // pred_check_branch
        %3299 = sbr.rel (%p3297) target = $region88
      $region87: #{tpu_custom_call.1} parent=5 // pred_region
        %s3300 = ssub.s32 %s16, 2
      $region88: #{tpu_custom_call.1} parent=5 // pred_fallthru
        _
    $region6: #{tpu_custom_call.1} parent=1 // loop_footer
      %s20 = sadd.s32 1, %s16
    $region7: #{tpu_custom_call.1} parent=1 // loop_footer_branch
      %15 = sbr.rel target = $region3
    $region8: #{tpu_custom_call.1} parent=1 // loop_exit
      _
    %3301 = vsyncpa [#allocation5], 1
    %s3302 = scalar_lea.sflag [#allocation5], 1
    %3303 = vsyncpa %s3302, 1
    %3304 = vsyncpa [#allocation8], 1
    %3305 = vsyncpa [#allocation6], 1
    %s3306 = scalar_lea.sflag [#allocation6], 1
    %3307 = vsyncpa %s3306, 1

</llo_original>
